<compile_context>
chip_gen: v7x
topology: tpu7x:2x2x1
jax: 0.10.0
libtpu: 0.0.40
codegen_flags: <defaults>
</compile_context>

<pallas_src>
import functools
import numpy as np
import jax
import jax.numpy as jnp
from jax import lax
from jax.experimental import pallas as pl
from jax.experimental.pallas import tpu as pltpu


def _bilstm_layer_kernel(Hd, Tc, n_in, unroll, *refs):
    """One bidirectional LSTM layer: fused input projection + recurrence.

    Ref layout (inputs, outputs, scratch):
      lens, xf[0..n_in), xb[0..n_in), Wihf[0..n_in), Wihb[0..n_in),
      Whh_f, Whh_b, b_f, b_b,
      outf, outb, h_fin, c_fin,
      gates_f_scr, gates_b_scr, h_scr, c_scr
    h_scr/c_scr index 0 = forward direction, 1 = backward direction.
    Backward-direction input/output blocks use a reversed time index_map,
    so within a chunk the backward stream lives at in-chunk index Tc-1-i.
    """
    lens_ref = refs[0]
    xf_refs = refs[1:1 + n_in]
    xb_refs = refs[1 + n_in:1 + 2 * n_in]
    wf_refs = refs[1 + 2 * n_in:1 + 3 * n_in]
    wb_refs = refs[1 + 3 * n_in:1 + 4 * n_in]
    base = 1 + 4 * n_in
    whhf_ref, whhb_ref, bf_ref, bb_ref = refs[base:base + 4]
    outf_ref, outb_ref, hfin_ref, cfin_ref = refs[base + 4:base + 8]
    gf_scr, gb_scr, h_scr, c_scr = refs[base + 8:base + 12]

    t_chunk = pl.program_id(1)
    n_t = pl.num_programs(1)

    # ---- state init at the start of each batch shard's time sweep ----
    @pl.when(t_chunk == 0)
    def _():
        h_scr[...] = jnp.zeros_like(h_scr)
        c_scr[...] = jnp.zeros_like(c_scr)

    # ---- phase 1: fused input projections for the whole chunk ------------
    # Independent of the recurrent state -> off the serial critical path.
    wf = [w[...] for w in wf_refs]
    wb = [w[...] for w in wb_refs]
    bf = bf_ref[...]
    bb = bb_ref[...]

    def proj(i, carry):
        gf = bf
        gb = bb
        for k in range(n_in):
            gf = gf + jnp.dot(xf_refs[k][i], wf[k],
                              preferred_element_type=jnp.float32)
            gb = gb + jnp.dot(xb_refs[k][i], wb[k],
                              preferred_element_type=jnp.float32)
        gf_scr[i] = gf
        gb_scr[i] = gb
        return carry

    lax.fori_loop(0, Tc, proj, 0, unroll=min(unroll, Tc))

    # ---- phase 2: the serial recurrence (one h@W_hh matmul per dir/step) --
    whh_f = whhf_ref[...]
    whh_b = whhb_ref[...]
    lens = lens_ref[...]                       # (Bb, 1) int32
    t0 = t_chunk * Tc                          # forward chunk global start

    def cell(gates, c_prev):
        # PyTorch LSTM gate order: i, f, g, o
        i = jax.nn.sigmoid(gates[:, 0 * Hd:1 * Hd])
        f = jax.nn.sigmoid(gates[:, 1 * Hd:2 * Hd])
        g = jnp.tanh(gates[:, 2 * Hd:3 * Hd])
        o = jax.nn.sigmoid(gates[:, 3 * Hd:4 * Hd])
        c_new = f * c_prev + i * g
        h_new = o * jnp.tanh(c_new)
        return h_new, c_new

    def step(i, carry):
        # ---- forward direction: global time t0 + i ----
        mf = (t0 + i) < lens                               # (Bb, 1) bool
        hf, cf = h_scr[0], c_scr[0]
        gf = gf_scr[i] + jnp.dot(hf, whh_f, preferred_element_type=jnp.float32)
        hf_c, cf_c = cell(gf, cf)
        h_scr[0] = jnp.where(mf, hf_c, hf)                 # pack(): gated update
        c_scr[0] = jnp.where(mf, cf_c, cf)
        outf_ref[i] = jnp.where(mf, hf_c, 0.0)             # pad positions -> 0

        # ---- backward direction (reversed-time blocks) ----
        j = Tc - 1 - i
        tb = (n_t - 1 - t_chunk) * Tc + j                  # == T - 1 - (t0 + i)
        mb = tb < lens
        hb, cb = h_scr[1], c_scr[1]
        gb = gb_scr[j] + jnp.dot(hb, whh_b, preferred_element_type=jnp.float32)
        hb_c, cb_c = cell(gb, cb)
        h_scr[1] = jnp.where(mb, hb_c, hb)
        c_scr[1] = jnp.where(mb, cb_c, cb)
        outb_ref[j] = jnp.where(mb, hb_c, 0.0)             # natural time order
        return carry

    lax.fori_loop(0, Tc, step, 0, unroll=min(unroll, Tc))

    # ---- final state of this batch shard (written at the last time chunk) --
    @pl.when(t_chunk == n_t - 1)
    def _():
        hfin_ref[...] = h_scr[...]
        cfin_ref[...] = c_scr[...]


def _bilstm_layer(xs, lengths, wf_halves, wb_halves, whh_f, whh_b, b_f, b_b,
                  Hd, time_chunk, batch_block, vmem_limit_bytes, unroll):
    """One bidirectional LSTM layer as a single pallas_call.

    xs: list of (T, B, D_k) input streams (1 for layer 0, 2 for stacked layers:
        the previous layer's forward / backward halves — no concat needed).
    wf_halves/wb_halves: row-splits of W_ih matching xs, each (D_k, 4*Hd).
    """
    T, B = xs[0].shape[:2]
    n_in = len(xs)
    G = 4 * Hd
    Tc, Bb = time_chunk, batch_block
    assert T % Tc == 0 and B % Bb == 0
    n_b, n_t = B // Bb, T // Tc

    fmap = lambda b, t: (t, b, 0)               # natural-time chunk
    rmap = lambda b, t: (n_t - 1 - t, b, 0)     # reversed-time chunk (backward dir)
    wmap = lambda b, t: (0, 0)                  # grid-invariant weights
    smap = lambda b, t: (0, b, 0)               # per-shard final state
    lmap = lambda b, t: (b, 0)                  # per-shard lengths

    in_specs = [pl.BlockSpec((Bb, 1), lmap)]
    in_specs += [pl.BlockSpec((Tc, Bb, x.shape[-1]), fmap) for x in xs]
    in_specs += [pl.BlockSpec((Tc, Bb, x.shape[-1]), rmap) for x in xs]
    in_specs += [pl.BlockSpec(w.shape, wmap) for w in wf_halves]
    in_specs += [pl.BlockSpec(w.shape, wmap) for w in wb_halves]
    in_specs += [pl.BlockSpec((Hd, G), wmap), pl.BlockSpec((Hd, G), wmap),
                 pl.BlockSpec((1, G), wmap), pl.BlockSpec((1, G), wmap)]

    out_specs = [
        pl.BlockSpec((Tc, Bb, Hd), fmap),    # forward outputs (natural time)
        pl.BlockSpec((Tc, Bb, Hd), rmap),    # backward outputs (natural time)
        pl.BlockSpec((2, Bb, Hd), smap),     # final h (fwd, bwd)
        pl.BlockSpec((2, Bb, Hd), smap),     # final c (fwd, bwd)
    ]
    out_shapes = (
        jax.ShapeDtypeStruct((T, B, Hd), jnp.float32),
        jax.ShapeDtypeStruct((T, B, Hd), jnp.float32),
        jax.ShapeDtypeStruct((2, B, Hd), jnp.float32),
        jax.ShapeDtypeStruct((2, B, Hd), jnp.float32),
    )

    kernel = functools.partial(_bilstm_layer_kernel, Hd, Tc, n_in, unroll)

    return pl.pallas_call(
        kernel,
        out_shape=out_shapes,
        grid_spec=pltpu.PrefetchScalarGridSpec(
            num_scalar_prefetch=0,
            grid=(n_b, n_t),
            in_specs=in_specs,
            out_specs=out_specs,
            scratch_shapes=[
                pltpu.VMEM((Tc, Bb, G), jnp.float32),   # fwd gate pre-activations
                pltpu.VMEM((Tc, Bb, G), jnp.float32),   # bwd gate pre-activations
                pltpu.VMEM((2, Bb, Hd), jnp.float32),   # h carry (fwd, bwd)
                pltpu.VMEM((2, Bb, Hd), jnp.float32),   # c carry (fwd, bwd)
            ],
        ),
        compiler_params=pltpu.CompilerParams(
            dimension_semantics=("parallel", "arbitrary"),
            vmem_limit_bytes=vmem_limit_bytes,
        ),
    )(lengths, *xs, *xs, *wf_halves, *wb_halves, whh_f, whh_b, b_f, b_b)


def rnn_encoder_forward(src, mask, emb_table, params, hidden_size, num_layers,
                        time_chunk=None, batch_block=None, vmem_limit_mb=32,
                        unroll=4):
    """Mirrors RNNEncoder.forward: returns (memory_bank, (h_n, c_n)).

    Tuning notes: on v5e/v6e raise vmem_limit_mb (~64-100) and use a larger
    time_chunk; on v7x keep vmem_limit_mb=32 and set batch_block=B//2 (a
    multiple of 8) so both TensorCores process independent batch shards.
    """
    B, T = src.shape
    Hd = hidden_size // 2                                    # per-direction hidden

    # glue in plain JAX: embedding lookup, time-major layout, lengths
    emb = emb_table[src].astype(jnp.float32)                 # (B, T, E)
    x = jnp.transpose(emb, (1, 0, 2))                        # (T, B, E)
    lengths = jnp.sum(mask, axis=1).astype(jnp.int32)[:, None]   # (B, 1)

    if time_chunk is None:
        tc = min(T, 16)                    # bounded chunk (never default to T)
        while T % tc:
            tc -= 1
        time_chunk = tc
    if batch_block is None:
        batch_block = B

    h_fins, c_fins = [], []
    xs = [x]                               # input streams for the current layer
    for l in range(num_layers):
        p = params[l]
        # Row-split W_ih to match the separate input streams (no concat pass).
        dims = [s.shape[-1] for s in xs]
        offs = [0]
        for d in dims:
            offs.append(offs[-1] + d)
        wf_halves = [p['W_ih_f'][offs[k]:offs[k + 1]] for k in range(len(xs))]
        wb_halves = [p['W_ih_b'][offs[k]:offs[k + 1]] for k in range(len(xs))]

        outf, outb, h_fin, c_fin = _bilstm_layer(
            xs, lengths, wf_halves, wb_halves,
            p['W_hh_f'], p['W_hh_b'], p['b_f'], p['b_b'],
            Hd, time_chunk, batch_block, vmem_limit_mb * 1024 * 1024, unroll)

        xs = [outf, outb]                  # next layer consumes the two halves
        h_fins.append(h_fin)               # (2, B, Hd) [fwd, bwd]
        c_fins.append(c_fin)

    # Required output format: one concat + transpose at the very end only.
    memory_bank = jnp.transpose(jnp.concatenate(xs, axis=-1), (1, 0, 2))  # (B,T,H)
    # nn.LSTM final-state layout: index = layer * 2 + direction
    h_n = jnp.concatenate(h_fins, axis=0)                    # (2*L, B, Hd)
    c_n = jnp.concatenate(c_fins, axis=0)
    return memory_bank, (h_n, c_n)


# ---------------- pure-JAX reference (for correctness check) ----------------
def _reference(src, mask, emb_table, params, hidden_size, num_layers):
    B, T = src.shape
    Hd = hidden_size // 2
    emb = emb_table[src].astype(jnp.float32)                 # (B, T, E)
    m = mask.astype(jnp.float32)                             # (B, T)

    def cell(x_t, h, c, W_ih, W_hh, b):
        gates = x_t @ W_ih + h @ W_hh + b
        i = jax.nn.sigmoid(gates[:, 0 * Hd:1 * Hd])
        f = jax.nn.sigmoid(gates[:, 1 * Hd:2 * Hd])
        g = jnp.tanh(gates[:, 2 * Hd:3 * Hd])
        o = jax.nn.sigmoid(gates[:, 3 * Hd:4 * Hd])
        c_new = f * c + i * g
        return o * jnp.tanh(c_new), c_new

    layer_in = emb
    h_list, c_list = [], []
    for l in range(num_layers):
        p = params[l]
        h = jnp.zeros((B, Hd), jnp.float32)
        c = jnp.zeros((B, Hd), jnp.float32)
        outs_f = []
        for t in range(T):
            hn, cn = cell(layer_in[:, t], h, c, p['W_ih_f'], p['W_hh_f'], p['b_f'])
            mt = m[:, t:t + 1]
            h = mt * hn + (1.0 - mt) * h
            c = mt * cn + (1.0 - mt) * c
            outs_f.append(h * mt)
        hb = jnp.zeros((B, Hd), jnp.float32)
        cb = jnp.zeros((B, Hd), jnp.float32)
        outs_b = [None] * T
        for t in range(T - 1, -1, -1):
            hn, cn = cell(layer_in[:, t], hb, cb, p['W_ih_b'], p['W_hh_b'], p['b_b'])
            mt = m[:, t:t + 1]
            hb = mt * hn + (1.0 - mt) * hb
            cb = mt * cn + (1.0 - mt) * cb
            outs_b[t] = hb * mt
        layer_in = jnp.concatenate(
            [jnp.stack(outs_f, axis=1), jnp.stack(outs_b, axis=1)], axis=-1)
        h_list += [h, hb]
        c_list += [c, cb]
    return layer_in, jnp.stack(h_list, 0), jnp.stack(c_list, 0)


if __name__ == "__main__":
    # Small deterministic configuration consistent with the module:
    # LSTM, bidirectional, num_layers=2, hidden_size=32 (16 per direction).
    B, T, V = 2, 8, 50
    hidden_size, E, num_layers = 32, 32, 2
    Hd = hidden_size // 2

    key = jax.random.PRNGKey(0)
    keys = jax.random.split(key, 4 + 6 * num_layers)
    scale = 0.1

    emb_table = scale * jax.random.normal(keys[0], (V, E), jnp.float32)
    src = jax.random.randint(keys[1], (B, T), 0, V)
    lengths = jnp.array([T, T - 3], dtype=jnp.int32)         # per-batch valid lengths
    mask = (jnp.arange(T)[None, :] < lengths[:, None]).astype(jnp.float32)

    # Parameters (pre-transposed for x @ W layout; biases combined b_ih + b_hh):
    #   layer 0 input dim = E, layer 1 input dim = 2*Hd (fwd + bwd halves)
    params = []
    kidx = 2
    in_dim = E
    for l in range(num_layers):
        params.append({
            'W_ih_f': scale * jax.random.normal(keys[kidx + 0], (in_dim, 4 * Hd), jnp.float32),
            'W_hh_f': scale * jax.random.normal(keys[kidx + 1], (Hd, 4 * Hd), jnp.float32),
            'b_f':    scale * jax.random.normal(keys[kidx + 2], (1, 4 * Hd), jnp.float32),
            'W_ih_b': scale * jax.random.normal(keys[kidx + 3], (in_dim, 4 * Hd), jnp.float32),
            'W_hh_b': scale * jax.random.normal(keys[kidx + 4], (Hd, 4 * Hd), jnp.float32),
            'b_b':    scale * jax.random.normal(keys[kidx + 5], (1, 4 * Hd), jnp.float32),
        })
        kidx += 6
        in_dim = 2 * Hd

    # time_chunk=4 (< T) exercises the chunked sweep, the reversed-time
    # backward index_maps and the cross-chunk state carry.
    memory_bank, (h_n, c_n) = rnn_encoder_forward(
        src, mask, emb_table, params, hidden_size, num_layers,
        time_chunk=4, unroll=4)
    jax.block_until_ready(memory_bank)

    # correctness check against a pure-JAX reference of the same math
    ref_mb, ref_h, ref_c = _reference(src, mask, emb_table, params, hidden_size, num_layers)
    np.testing.assert_allclose(np.asarray(memory_bank), np.asarray(ref_mb), atol=2e-3, rtol=2e-3)
    np.testing.assert_allclose(np.asarray(h_n), np.asarray(ref_h), atol=2e-3, rtol=2e-3)
    np.testing.assert_allclose(np.asarray(c_n), np.asarray(ref_c), atol=2e-3, rtol=2e-3)

    print("KERNEL_OK")
</pallas_src>

<mosaic_0001>
module attributes {stable_mosaic.version = 11 : i64} {
  func.func @_bilstm_layer_kernel(%arg0: i32, %arg1: i32, %arg2: memref<2x1xi32, #tpu.memory_space<vmem>>, %arg3: memref<4x2x32xf32, #tpu.memory_space<vmem>>, %arg4: memref<4x2x32xf32, #tpu.memory_space<vmem>>, %arg5: memref<32x64xf32, #tpu.memory_space<vmem>>, %arg6: memref<32x64xf32, #tpu.memory_space<vmem>>, %arg7: memref<16x64xf32, #tpu.memory_space<vmem>>, %arg8: memref<16x64xf32, #tpu.memory_space<vmem>>, %arg9: memref<1x64xf32, #tpu.memory_space<vmem>>, %arg10: memref<1x64xf32, #tpu.memory_space<vmem>>, %arg11: memref<4x2x16xf32, #tpu.memory_space<vmem>>, %arg12: memref<4x2x16xf32, #tpu.memory_space<vmem>>, %arg13: memref<2x2x16xf32, #tpu.memory_space<vmem>>, %arg14: memref<2x2x16xf32, #tpu.memory_space<vmem>>, %arg15: memref<4x2x64xf32, #tpu.memory_space<vmem>>, %arg16: memref<4x2x64xf32, #tpu.memory_space<vmem>>, %arg17: memref<2x2x16xf32, #tpu.memory_space<vmem>>, %arg18: memref<2x2x16xf32, #tpu.memory_space<vmem>>) attributes {dimension_semantics = [#tpu.dimension_semantics<parallel>, #tpu.dimension_semantics<arbitrary>], iteration_bounds = array<i64: 1, 2>, scalar_prefetch = 0 : i64, scratch_operands = 4 : i64, tpu.core_type = #tpu.core_type<tc>, window_params = [{transform_indices = @transform_0, window_bounds = array<i64: 2, 1>}, {transform_indices = @transform_1, window_bounds = array<i64: 4, 2, 32>}, {transform_indices = @transform_2, window_bounds = array<i64: 4, 2, 32>}, {pipeline_mode = #tpu.pipeline_mode<synchronous>, transform_indices = @transform_3, window_bounds = array<i64: 32, 64>}, {pipeline_mode = #tpu.pipeline_mode<synchronous>, transform_indices = @transform_4, window_bounds = array<i64: 32, 64>}, {pipeline_mode = #tpu.pipeline_mode<synchronous>, transform_indices = @transform_5, window_bounds = array<i64: 16, 64>}, {pipeline_mode = #tpu.pipeline_mode<synchronous>, transform_indices = @transform_6, window_bounds = array<i64: 16, 64>}, {pipeline_mode = #tpu.pipeline_mode<synchronous>, transform_indices = @transform_7, window_bounds = array<i64: 1, 64>}, {pipeline_mode = #tpu.pipeline_mode<synchronous>, transform_indices = @transform_8, window_bounds = array<i64: 1, 64>}, {transform_indices = @transform_9, window_bounds = array<i64: 4, 2, 16>}, {transform_indices = @transform_10, window_bounds = array<i64: 4, 2, 16>}, {transform_indices = @transform_11, window_bounds = array<i64: 2, 2, 16>}, {transform_indices = @transform_12, window_bounds = array<i64: 2, 2, 16>}]} {
    %c0_i32 = arith.constant 0 : i32
    %0 = arith.cmpi eq, %arg1, %c0_i32 : i32
    %1 = arith.extui %0 : i1 to i32
    %c0_i32_0 = arith.constant 0 : i32
    %2 = arith.cmpi ne, %1, %c0_i32_0 : i32
    scf.if %2 {
      %cst_241 = arith.constant 0.000000e+00 : f32
      %562 = vector.broadcast %cst_241 : f32 to vector<2x2x16xf32>
      %c0_242 = arith.constant 0 : index
      %c0_243 = arith.constant 0 : index
      %c0_244 = arith.constant 0 : index
      %563 = vector.load %arg17[%c0_242, %c0_243, %c0_244] : memref<2x2x16xf32, #tpu.memory_space<vmem>>, vector<2x2x16xf32>
      tpu.vector_store %arg17[%c0_242, %c0_243, %c0_244], %562 {strides = array<i32>} : memref<2x2x16xf32, #tpu.memory_space<vmem>>, vector<2x2x16xf32>,
      %cst_245 = arith.constant 0.000000e+00 : f32
      %564 = vector.broadcast %cst_245 : f32 to vector<2x2x16xf32>
      %c0_246 = arith.constant 0 : index
      %c0_247 = arith.constant 0 : index
      %c0_248 = arith.constant 0 : index
      %565 = vector.load %arg18[%c0_246, %c0_247, %c0_248] : memref<2x2x16xf32, #tpu.memory_space<vmem>>, vector<2x2x16xf32>
      tpu.vector_store %arg18[%c0_246, %c0_247, %c0_248], %564 {strides = array<i32>} : memref<2x2x16xf32, #tpu.memory_space<vmem>>, vector<2x2x16xf32>,
    } else {
    }
    %c0 = arith.constant 0 : index
    %c0_1 = arith.constant 0 : index
    %3 = vector.load %arg5[%c0, %c0_1] : memref<32x64xf32, #tpu.memory_space<vmem>>, vector<32x64xf32>
    %c0_2 = arith.constant 0 : index
    %c0_3 = arith.constant 0 : index
    %4 = vector.load %arg6[%c0_2, %c0_3] : memref<32x64xf32, #tpu.memory_space<vmem>>, vector<32x64xf32>
    %c0_4 = arith.constant 0 : index
    %c0_5 = arith.constant 0 : index
    %5 = vector.load %arg9[%c0_4, %c0_5] : memref<1x64xf32, #tpu.memory_space<vmem>>, vector<1x64xf32>
    %c0_6 = arith.constant 0 : index
    %c0_7 = arith.constant 0 : index
    %6 = vector.load %arg10[%c0_6, %c0_7] : memref<1x64xf32, #tpu.memory_space<vmem>>, vector<1x64xf32>
    %c0_i32_8 = arith.constant 0 : i32
    %7 = arith.index_cast %c0_i32_8 : i32 to index
    %c0_9 = arith.constant 0 : index
    %c0_10 = arith.constant 0 : index
    %8 = vector.load %arg3[%7, %c0_9, %c0_10] : memref<4x2x32xf32, #tpu.memory_space<vmem>>, vector<1x2x32xf32>
    %9 = vector.shape_cast %8 : vector<1x2x32xf32> to vector<2x32xf32>
    %cst = arith.constant dense<0.000000e+00> : vector<2x64xf32>
    %10 = tpu.matmul %9, %3, %cst {dimension_numbers = #tpu.dot_dimension_numbers<[1], [0], [0], [1], [0, 0, 1, 1], [], []>} : vector<2x32xf32>, vector<32x64xf32>, vector<2x64xf32> -> vector<2x64xf32>
    %11 = vector.broadcast %5 : vector<1x64xf32> to vector<2x64xf32>
    %12 = arith.addf %11, %10 : vector<2x64xf32>
    %13 = arith.index_cast %c0_i32_8 : i32 to index
    %c0_11 = arith.constant 0 : index
    %c0_12 = arith.constant 0 : index
    %14 = vector.load %arg4[%13, %c0_11, %c0_12] : memref<4x2x32xf32, #tpu.memory_space<vmem>>, vector<1x2x32xf32>
    %15 = vector.shape_cast %14 : vector<1x2x32xf32> to vector<2x32xf32>
    %cst_13 = arith.constant dense<0.000000e+00> : vector<2x64xf32>
    %16 = tpu.matmul %15, %4, %cst_13 {dimension_numbers = #tpu.dot_dimension_numbers<[1], [0], [0], [1], [0, 0, 1, 1], [], []>} : vector<2x32xf32>, vector<32x64xf32>, vector<2x64xf32> -> vector<2x64xf32>
    %17 = vector.broadcast %6 : vector<1x64xf32> to vector<2x64xf32>
    %18 = arith.addf %17, %16 : vector<2x64xf32>
    %19 = arith.index_cast %c0_i32_8 : i32 to index
    %c0_14 = arith.constant 0 : index
    %c0_15 = arith.constant 0 : index
    %20 = vector.load %arg15[%19, %c0_14, %c0_15] : memref<4x2x64xf32, #tpu.memory_space<vmem>>, vector<1x2x64xf32>
    %21 = vector.shape_cast %20 : vector<1x2x64xf32> to vector<2x64xf32>
    %22 = vector.shape_cast %12 : vector<2x64xf32> to vector<1x2x64xf32>
    tpu.vector_store %arg15[%19, %c0_14, %c0_15], %22 {strides = array<i32>} : memref<4x2x64xf32, #tpu.memory_space<vmem>>, vector<1x2x64xf32>,
    %23 = arith.index_cast %c0_i32_8 : i32 to index
    %c0_16 = arith.constant 0 : index
    %c0_17 = arith.constant 0 : index
    %24 = vector.load %arg16[%23, %c0_16, %c0_17] : memref<4x2x64xf32, #tpu.memory_space<vmem>>, vector<1x2x64xf32>
    %25 = vector.shape_cast %24 : vector<1x2x64xf32> to vector<2x64xf32>
    %26 = vector.shape_cast %18 : vector<2x64xf32> to vector<1x2x64xf32>
    tpu.vector_store %arg16[%23, %c0_16, %c0_17], %26 {strides = array<i32>} : memref<4x2x64xf32, #tpu.memory_space<vmem>>, vector<1x2x64xf32>,
    %c1_i32 = arith.constant 1 : i32
    %27 = arith.index_cast %c1_i32 : i32 to index
    %c0_18 = arith.constant 0 : index
    %c0_19 = arith.constant 0 : index
    %28 = vector.load %arg3[%27, %c0_18, %c0_19] : memref<4x2x32xf32, #tpu.memory_space<vmem>>, vector<1x2x32xf32>
    %29 = vector.shape_cast %28 : vector<1x2x32xf32> to vector<2x32xf32>
    %cst_20 = arith.constant dense<0.000000e+00> : vector<2x64xf32>
    %30 = tpu.matmul %29, %3, %cst_20 {dimension_numbers = #tpu.dot_dimension_numbers<[1], [0], [0], [1], [0, 0, 1, 1], [], []>} : vector<2x32xf32>, vector<32x64xf32>, vector<2x64xf32> -> vector<2x64xf32>
    %31 = vector.broadcast %5 : vector<1x64xf32> to vector<2x64xf32>
    %32 = arith.addf %31, %30 : vector<2x64xf32>
    %33 = arith.index_cast %c1_i32 : i32 to index
    %c0_21 = arith.constant 0 : index
    %c0_22 = arith.constant 0 : index
    %34 = vector.load %arg4[%33, %c0_21, %c0_22] : memref<4x2x32xf32, #tpu.memory_space<vmem>>, vector<1x2x32xf32>
    %35 = vector.shape_cast %34 : vector<1x2x32xf32> to vector<2x32xf32>
    %cst_23 = arith.constant dense<0.000000e+00> : vector<2x64xf32>
    %36 = tpu.matmul %35, %4, %cst_23 {dimension_numbers = #tpu.dot_dimension_numbers<[1], [0], [0], [1], [0, 0, 1, 1], [], []>} : vector<2x32xf32>, vector<32x64xf32>, vector<2x64xf32> -> vector<2x64xf32>
    %37 = vector.broadcast %6 : vector<1x64xf32> to vector<2x64xf32>
    %38 = arith.addf %37, %36 : vector<2x64xf32>
    %39 = arith.index_cast %c1_i32 : i32 to index
    %c0_24 = arith.constant 0 : index
    %c0_25 = arith.constant 0 : index
    %40 = vector.load %arg15[%39, %c0_24, %c0_25] : memref<4x2x64xf32, #tpu.memory_space<vmem>>, vector<1x2x64xf32>
    %41 = vector.shape_cast %40 : vector<1x2x64xf32> to vector<2x64xf32>
    %42 = vector.shape_cast %32 : vector<2x64xf32> to vector<1x2x64xf32>
    tpu.vector_store %arg15[%39, %c0_24, %c0_25], %42 {strides = array<i32>} : memref<4x2x64xf32, #tpu.memory_space<vmem>>, vector<1x2x64xf32>,
    %43 = arith.index_cast %c1_i32 : i32 to index
    %c0_26 = arith.constant 0 : index
    %c0_27 = arith.constant 0 : index
    %44 = vector.load %arg16[%43, %c0_26, %c0_27] : memref<4x2x64xf32, #tpu.memory_space<vmem>>, vector<1x2x64xf32>
    %45 = vector.shape_cast %44 : vector<1x2x64xf32> to vector<2x64xf32>
    %46 = vector.shape_cast %38 : vector<2x64xf32> to vector<1x2x64xf32>
    tpu.vector_store %arg16[%43, %c0_26, %c0_27], %46 {strides = array<i32>} : memref<4x2x64xf32, #tpu.memory_space<vmem>>, vector<1x2x64xf32>,
    %c2_i32 = arith.constant 2 : i32
    %47 = arith.index_cast %c2_i32 : i32 to index
    %c0_28 = arith.constant 0 : index
    %c0_29 = arith.constant 0 : index
    %48 = vector.load %arg3[%47, %c0_28, %c0_29] : memref<4x2x32xf32, #tpu.memory_space<vmem>>, vector<1x2x32xf32>
    %49 = vector.shape_cast %48 : vector<1x2x32xf32> to vector<2x32xf32>
    %cst_30 = arith.constant dense<0.000000e+00> : vector<2x64xf32>
    %50 = tpu.matmul %49, %3, %cst_30 {dimension_numbers = #tpu.dot_dimension_numbers<[1], [0], [0], [1], [0, 0, 1, 1], [], []>} : vector<2x32xf32>, vector<32x64xf32>, vector<2x64xf32> -> vector<2x64xf32>
    %51 = vector.broadcast %5 : vector<1x64xf32> to vector<2x64xf32>
    %52 = arith.addf %51, %50 : vector<2x64xf32>
    %53 = arith.index_cast %c2_i32 : i32 to index
    %c0_31 = arith.constant 0 : index
    %c0_32 = arith.constant 0 : index
    %54 = vector.load %arg4[%53, %c0_31, %c0_32] : memref<4x2x32xf32, #tpu.memory_space<vmem>>, vector<1x2x32xf32>
    %55 = vector.shape_cast %54 : vector<1x2x32xf32> to vector<2x32xf32>
    %cst_33 = arith.constant dense<0.000000e+00> : vector<2x64xf32>
    %56 = tpu.matmul %55, %4, %cst_33 {dimension_numbers = #tpu.dot_dimension_numbers<[1], [0], [0], [1], [0, 0, 1, 1], [], []>} : vector<2x32xf32>, vector<32x64xf32>, vector<2x64xf32> -> vector<2x64xf32>
    %57 = vector.broadcast %6 : vector<1x64xf32> to vector<2x64xf32>
    %58 = arith.addf %57, %56 : vector<2x64xf32>
    %59 = arith.index_cast %c2_i32 : i32 to index
    %c0_34 = arith.constant 0 : index
    %c0_35 = arith.constant 0 : index
    %60 = vector.load %arg15[%59, %c0_34, %c0_35] : memref<4x2x64xf32, #tpu.memory_space<vmem>>, vector<1x2x64xf32>
    %61 = vector.shape_cast %60 : vector<1x2x64xf32> to vector<2x64xf32>
    %62 = vector.shape_cast %52 : vector<2x64xf32> to vector<1x2x64xf32>
    tpu.vector_store %arg15[%59, %c0_34, %c0_35], %62 {strides = array<i32>} : memref<4x2x64xf32, #tpu.memory_space<vmem>>, vector<1x2x64xf32>,
    %63 = arith.index_cast %c2_i32 : i32 to index
    %c0_36 = arith.constant 0 : index
    %c0_37 = arith.constant 0 : index
    %64 = vector.load %arg16[%63, %c0_36, %c0_37] : memref<4x2x64xf32, #tpu.memory_space<vmem>>, vector<1x2x64xf32>
    %65 = vector.shape_cast %64 : vector<1x2x64xf32> to vector<2x64xf32>
    %66 = vector.shape_cast %58 : vector<2x64xf32> to vector<1x2x64xf32>
    tpu.vector_store %arg16[%63, %c0_36, %c0_37], %66 {strides = array<i32>} : memref<4x2x64xf32, #tpu.memory_space<vmem>>, vector<1x2x64xf32>,
    %c3_i32 = arith.constant 3 : i32
    %67 = arith.index_cast %c3_i32 : i32 to index
    %c0_38 = arith.constant 0 : index
    %c0_39 = arith.constant 0 : index
    %68 = vector.load %arg3[%67, %c0_38, %c0_39] : memref<4x2x32xf32, #tpu.memory_space<vmem>>, vector<1x2x32xf32>
    %69 = vector.shape_cast %68 : vector<1x2x32xf32> to vector<2x32xf32>
    %cst_40 = arith.constant dense<0.000000e+00> : vector<2x64xf32>
    %70 = tpu.matmul %69, %3, %cst_40 {dimension_numbers = #tpu.dot_dimension_numbers<[1], [0], [0], [1], [0, 0, 1, 1], [], []>} : vector<2x32xf32>, vector<32x64xf32>, vector<2x64xf32> -> vector<2x64xf32>
    %71 = vector.broadcast %5 : vector<1x64xf32> to vector<2x64xf32>
    %72 = arith.addf %71, %70 : vector<2x64xf32>
    %73 = arith.index_cast %c3_i32 : i32 to index
    %c0_41 = arith.constant 0 : index
    %c0_42 = arith.constant 0 : index
    %74 = vector.load %arg4[%73, %c0_41, %c0_42] : memref<4x2x32xf32, #tpu.memory_space<vmem>>, vector<1x2x32xf32>
    %75 = vector.shape_cast %74 : vector<1x2x32xf32> to vector<2x32xf32>
    %cst_43 = arith.constant dense<0.000000e+00> : vector<2x64xf32>
    %76 = tpu.matmul %75, %4, %cst_43 {dimension_numbers = #tpu.dot_dimension_numbers<[1], [0], [0], [1], [0, 0, 1, 1], [], []>} : vector<2x32xf32>, vector<32x64xf32>, vector<2x64xf32> -> vector<2x64xf32>
    %77 = vector.broadcast %6 : vector<1x64xf32> to vector<2x64xf32>
    %78 = arith.addf %77, %76 : vector<2x64xf32>
    %79 = arith.index_cast %c3_i32 : i32 to index
    %c0_44 = arith.constant 0 : index
    %c0_45 = arith.constant 0 : index
    %80 = vector.load %arg15[%79, %c0_44, %c0_45] : memref<4x2x64xf32, #tpu.memory_space<vmem>>, vector<1x2x64xf32>
    %81 = vector.shape_cast %80 : vector<1x2x64xf32> to vector<2x64xf32>
    %82 = vector.shape_cast %72 : vector<2x64xf32> to vector<1x2x64xf32>
    tpu.vector_store %arg15[%79, %c0_44, %c0_45], %82 {strides = array<i32>} : memref<4x2x64xf32, #tpu.memory_space<vmem>>, vector<1x2x64xf32>,
    %83 = arith.index_cast %c3_i32 : i32 to index
    %c0_46 = arith.constant 0 : index
    %c0_47 = arith.constant 0 : index
    %84 = vector.load %arg16[%83, %c0_46, %c0_47] : memref<4x2x64xf32, #tpu.memory_space<vmem>>, vector<1x2x64xf32>
    %85 = vector.shape_cast %84 : vector<1x2x64xf32> to vector<2x64xf32>
    %86 = vector.shape_cast %78 : vector<2x64xf32> to vector<1x2x64xf32>
    tpu.vector_store %arg16[%83, %c0_46, %c0_47], %86 {strides = array<i32>} : memref<4x2x64xf32, #tpu.memory_space<vmem>>, vector<1x2x64xf32>,
    %c4_i32 = arith.constant 4 : i32
    %c0_48 = arith.constant 0 : index
    %c0_49 = arith.constant 0 : index
    %87 = vector.load %arg7[%c0_48, %c0_49] : memref<16x64xf32, #tpu.memory_space<vmem>>, vector<16x64xf32>
    %c0_50 = arith.constant 0 : index
    %c0_51 = arith.constant 0 : index
    %88 = vector.load %arg8[%c0_50, %c0_51] : memref<16x64xf32, #tpu.memory_space<vmem>>, vector<16x64xf32>
    %c0_52 = arith.constant 0 : index
    %c0_53 = arith.constant 0 : index
    %89 = vector.load %arg2[%c0_52, %c0_53] : memref<2x1xi32, #tpu.memory_space<vmem>>, vector<2x1xi32>
    %c4_i32_54 = arith.constant 4 : i32
    %90 = arith.muli %arg1, %c4_i32_54 : i32
    %c0_i32_55 = arith.constant 0 : i32
    %91 = arith.addi %90, %c0_i32_55 : i32
    %92 = vector.broadcast %91 : i32 to vector<2x1xi32>
    %93 = arith.cmpi slt, %92, %89 : vector<2x1xi32>
    %c0_56 = arith.constant 0 : index
    %c0_57 = arith.constant 0 : index
    %c0_58 = arith.constant 0 : index
    %94 = vector.load %arg17[%c0_56, %c0_57, %c0_58] : memref<2x2x16xf32, #tpu.memory_space<vmem>>, vector<1x2x16xf32>
    %95 = vector.shape_cast %94 : vector<1x2x16xf32> to vector<2x16xf32>
    %c0_59 = arith.constant 0 : index
    %c0_60 = arith.constant 0 : index
    %c0_61 = arith.constant 0 : index
    %96 = vector.load %arg18[%c0_59, %c0_60, %c0_61] : memref<2x2x16xf32, #tpu.memory_space<vmem>>, vector<1x2x16xf32>
    %97 = vector.shape_cast %96 : vector<1x2x16xf32> to vector<2x16xf32>
    %98 = arith.index_cast %c0_i32_55 : i32 to index
    %c0_62 = arith.constant 0 : index
    %c0_63 = arith.constant 0 : index
    %99 = vector.load %arg15[%98, %c0_62, %c0_63] : memref<4x2x64xf32, #tpu.memory_space<vmem>>, vector<1x2x64xf32>
    %100 = vector.shape_cast %99 : vector<1x2x64xf32> to vector<2x64xf32>
    %cst_64 = arith.constant dense<0.000000e+00> : vector<2x64xf32>
    %101 = tpu.matmul %95, %87, %cst_64 {dimension_numbers = #tpu.dot_dimension_numbers<[1], [0], [0], [1], [0, 0, 1, 1], [], []>} : vector<2x16xf32>, vector<16x64xf32>, vector<2x64xf32> -> vector<2x64xf32>
    %102 = arith.addf %100, %101 : vector<2x64xf32>
    %103 = vector.extract_strided_slice %102 {offsets = [0, 0], sizes = [2, 16], strides = [1, 1]} : vector<2x64xf32> to vector<2x16xf32>
    %104 = arith.negf %103 : vector<2x16xf32>
    %105 = math.exp %104 : vector<2x16xf32>
    %cst_65 = arith.constant 1.000000e+00 : f32
    %106 = vector.broadcast %cst_65 : f32 to vector<2x16xf32>
    %107 = arith.addf %106, %105 : vector<2x16xf32>
    %108 = arith.divf %106, %107 : vector<2x16xf32>
    %109 = vector.extract_strided_slice %102 {offsets = [0, 16], sizes = [2, 16], strides = [1, 1]} : vector<2x64xf32> to vector<2x16xf32>
    %110 = arith.negf %109 : vector<2x16xf32>
    %111 = math.exp %110 : vector<2x16xf32>
    %cst_66 = arith.constant 1.000000e+00 : f32
    %112 = vector.broadcast %cst_66 : f32 to vector<2x16xf32>
    %113 = arith.addf %112, %111 : vector<2x16xf32>
    %114 = arith.divf %112, %113 : vector<2x16xf32>
    %115 = vector.extract_strided_slice %102 {offsets = [0, 32], sizes = [2, 16], strides = [1, 1]} : vector<2x64xf32> to vector<2x16xf32>
    %116 = math.tanh %115 : vector<2x16xf32>
    %117 = vector.extract_strided_slice %102 {offsets = [0, 48], sizes = [2, 16], strides = [1, 1]} : vector<2x64xf32> to vector<2x16xf32>
    %118 = arith.negf %117 : vector<2x16xf32>
    %119 = math.exp %118 : vector<2x16xf32>
    %cst_67 = arith.constant 1.000000e+00 : f32
    %120 = vector.broadcast %cst_67 : f32 to vector<2x16xf32>
    %121 = arith.addf %120, %119 : vector<2x16xf32>
    %122 = arith.divf %120, %121 : vector<2x16xf32>
    %123 = arith.mulf %114, %97 : vector<2x16xf32>
    %124 = arith.mulf %108, %116 : vector<2x16xf32>
    %125 = arith.addf %123, %124 : vector<2x16xf32>
    %126 = math.tanh %125 : vector<2x16xf32>
    %127 = arith.mulf %122, %126 : vector<2x16xf32>
    %128 = vector.shape_cast %93 : vector<2x1xi1> to vector<2x1xi1>
    %129 = vector.broadcast %128 : vector<2x1xi1> to vector<2x16xi1>
    %130 = arith.select %129, %127, %95 : vector<2x16xi1>, vector<2x16xf32>
    %c0_68 = arith.constant 0 : index
    %c0_69 = arith.constant 0 : index
    %c0_70 = arith.constant 0 : index
    %131 = vector.load %arg17[%c0_68, %c0_69, %c0_70] : memref<2x2x16xf32, #tpu.memory_space<vmem>>, vector<1x2x16xf32>
    %132 = vector.shape_cast %131 : vector<1x2x16xf32> to vector<2x16xf32>
    %133 = vector.shape_cast %130 : vector<2x16xf32> to vector<1x2x16xf32>
    tpu.vector_store %arg17[%c0_68, %c0_69, %c0_70], %133 {strides = array<i32>} : memref<2x2x16xf32, #tpu.memory_space<vmem>>, vector<1x2x16xf32>,
    %134 = vector.shape_cast %93 : vector<2x1xi1> to vector<2x1xi1>
    %135 = vector.broadcast %134 : vector<2x1xi1> to vector<2x16xi1>
    %136 = arith.select %135, %125, %97 : vector<2x16xi1>, vector<2x16xf32>
    %c0_71 = arith.constant 0 : index
    %c0_72 = arith.constant 0 : index
    %c0_73 = arith.constant 0 : index
    %137 = vector.load %arg18[%c0_71, %c0_72, %c0_73] : memref<2x2x16xf32, #tpu.memory_space<vmem>>, vector<1x2x16xf32>
    %138 = vector.shape_cast %137 : vector<1x2x16xf32> to vector<2x16xf32>
    %139 = vector.shape_cast %136 : vector<2x16xf32> to vector<1x2x16xf32>
    tpu.vector_store %arg18[%c0_71, %c0_72, %c0_73], %139 {strides = array<i32>} : memref<2x2x16xf32, #tpu.memory_space<vmem>>, vector<1x2x16xf32>,
    %cst_74 = arith.constant 0.000000e+00 : f32
    %140 = vector.shape_cast %93 : vector<2x1xi1> to vector<2x1xi1>
    %141 = vector.broadcast %140 : vector<2x1xi1> to vector<2x16xi1>
    %142 = vector.broadcast %cst_74 : f32 to vector<2x16xf32>
    %143 = arith.select %141, %127, %142 : vector<2x16xi1>, vector<2x16xf32>
    %144 = arith.index_cast %c0_i32_55 : i32 to index
    %c0_75 = arith.constant 0 : index
    %c0_76 = arith.constant 0 : index
    %145 = vector.load %arg11[%144, %c0_75, %c0_76] : memref<4x2x16xf32, #tpu.memory_space<vmem>>, vector<1x2x16xf32>
    %146 = vector.shape_cast %145 : vector<1x2x16xf32> to vector<2x16xf32>
    %147 = vector.shape_cast %143 : vector<2x16xf32> to vector<1x2x16xf32>
    tpu.vector_store %arg11[%144, %c0_75, %c0_76], %147 {strides = array<i32>} : memref<4x2x16xf32, #tpu.memory_space<vmem>>, vector<1x2x16xf32>,
    %c3_i32_77 = arith.constant 3 : i32
    %148 = arith.subi %c3_i32_77, %c0_i32_55 : i32
    %c1_i32_78 = arith.constant 1 : i32
    %149 = arith.subi %c1_i32_78, %arg1 : i32
    %c4_i32_79 = arith.constant 4 : i32
    %150 = arith.muli %149, %c4_i32_79 : i32
    %151 = arith.addi %150, %148 : i32
    %152 = vector.broadcast %151 : i32 to vector<2x1xi32>
    %153 = arith.cmpi slt, %152, %89 : vector<2x1xi32>
    %c1 = arith.constant 1 : index
    %c0_80 = arith.constant 0 : index
    %c0_81 = arith.constant 0 : index
    %154 = vector.load %arg17[%c1, %c0_80, %c0_81] : memref<2x2x16xf32, #tpu.memory_space<vmem>>, vector<1x2x16xf32>
    %155 = vector.shape_cast %154 : vector<1x2x16xf32> to vector<2x16xf32>
    %c1_82 = arith.constant 1 : index
    %c0_83 = arith.constant 0 : index
    %c0_84 = arith.constant 0 : index
    %156 = vector.load %arg18[%c1_82, %c0_83, %c0_84] : memref<2x2x16xf32, #tpu.memory_space<vmem>>, vector<1x2x16xf32>
    %157 = vector.shape_cast %156 : vector<1x2x16xf32> to vector<2x16xf32>
    %158 = arith.index_cast %148 : i32 to index
    %c0_85 = arith.constant 0 : index
    %c0_86 = arith.constant 0 : index
    %159 = vector.load %arg16[%158, %c0_85, %c0_86] : memref<4x2x64xf32, #tpu.memory_space<vmem>>, vector<1x2x64xf32>
    %160 = vector.shape_cast %159 : vector<1x2x64xf32> to vector<2x64xf32>
    %cst_87 = arith.constant dense<0.000000e+00> : vector<2x64xf32>
    %161 = tpu.matmul %155, %88, %cst_87 {dimension_numbers = #tpu.dot_dimension_numbers<[1], [0], [0], [1], [0, 0, 1, 1], [], []>} : vector<2x16xf32>, vector<16x64xf32>, vector<2x64xf32> -> vector<2x64xf32>
    %162 = arith.addf %160, %161 : vector<2x64xf32>
    %163 = vector.extract_strided_slice %162 {offsets = [0, 0], sizes = [2, 16], strides = [1, 1]} : vector<2x64xf32> to vector<2x16xf32>
    %164 = arith.negf %163 : vector<2x16xf32>
    %165 = math.exp %164 : vector<2x16xf32>
    %cst_88 = arith.constant 1.000000e+00 : f32
    %166 = vector.broadcast %cst_88 : f32 to vector<2x16xf32>
    %167 = arith.addf %166, %165 : vector<2x16xf32>
    %168 = arith.divf %166, %167 : vector<2x16xf32>
    %169 = vector.extract_strided_slice %162 {offsets = [0, 16], sizes = [2, 16], strides = [1, 1]} : vector<2x64xf32> to vector<2x16xf32>
    %170 = arith.negf %169 : vector<2x16xf32>
    %171 = math.exp %170 : vector<2x16xf32>
    %cst_89 = arith.constant 1.000000e+00 : f32
    %172 = vector.broadcast %cst_89 : f32 to vector<2x16xf32>
    %173 = arith.addf %172, %171 : vector<2x16xf32>
    %174 = arith.divf %172, %173 : vector<2x16xf32>
    %175 = vector.extract_strided_slice %162 {offsets = [0, 32], sizes = [2, 16], strides = [1, 1]} : vector<2x64xf32> to vector<2x16xf32>
    %176 = math.tanh %175 : vector<2x16xf32>
    %177 = vector.extract_strided_slice %162 {offsets = [0, 48], sizes = [2, 16], strides = [1, 1]} : vector<2x64xf32> to vector<2x16xf32>
    %178 = arith.negf %177 : vector<2x16xf32>
    %179 = math.exp %178 : vector<2x16xf32>
    %cst_90 = arith.constant 1.000000e+00 : f32
    %180 = vector.broadcast %cst_90 : f32 to vector<2x16xf32>
    %181 = arith.addf %180, %179 : vector<2x16xf32>
    %182 = arith.divf %180, %181 : vector<2x16xf32>
    %183 = arith.mulf %174, %157 : vector<2x16xf32>
    %184 = arith.mulf %168, %176 : vector<2x16xf32>
    %185 = arith.addf %183, %184 : vector<2x16xf32>
    %186 = math.tanh %185 : vector<2x16xf32>
    %187 = arith.mulf %182, %186 : vector<2x16xf32>
    %188 = vector.shape_cast %153 : vector<2x1xi1> to vector<2x1xi1>
    %189 = vector.broadcast %188 : vector<2x1xi1> to vector<2x16xi1>
    %190 = arith.select %189, %187, %155 : vector<2x16xi1>, vector<2x16xf32>
    %c1_91 = arith.constant 1 : index
    %c0_92 = arith.constant 0 : index
    %c0_93 = arith.constant 0 : index
    %191 = vector.load %arg17[%c1_91, %c0_92, %c0_93] : memref<2x2x16xf32, #tpu.memory_space<vmem>>, vector<1x2x16xf32>
    %192 = vector.shape_cast %191 : vector<1x2x16xf32> to vector<2x16xf32>
    %193 = vector.shape_cast %190 : vector<2x16xf32> to vector<1x2x16xf32>
    tpu.vector_store %arg17[%c1_91, %c0_92, %c0_93], %193 {strides = array<i32>} : memref<2x2x16xf32, #tpu.memory_space<vmem>>, vector<1x2x16xf32>,
    %194 = vector.shape_cast %153 : vector<2x1xi1> to vector<2x1xi1>
    %195 = vector.broadcast %194 : vector<2x1xi1> to vector<2x16xi1>
    %196 = arith.select %195, %185, %157 : vector<2x16xi1>, vector<2x16xf32>
    %c1_94 = arith.constant 1 : index
    %c0_95 = arith.constant 0 : index
    %c0_96 = arith.constant 0 : index
    %197 = vector.load %arg18[%c1_94, %c0_95, %c0_96] : memref<2x2x16xf32, #tpu.memory_space<vmem>>, vector<1x2x16xf32>
    %198 = vector.shape_cast %197 : vector<1x2x16xf32> to vector<2x16xf32>
    %199 = vector.shape_cast %196 : vector<2x16xf32> to vector<1x2x16xf32>
    tpu.vector_store %arg18[%c1_94, %c0_95, %c0_96], %199 {strides = array<i32>} : memref<2x2x16xf32, #tpu.memory_space<vmem>>, vector<1x2x16xf32>,
    %cst_97 = arith.constant 0.000000e+00 : f32
    %200 = vector.shape_cast %153 : vector<2x1xi1> to vector<2x1xi1>
    %201 = vector.broadcast %200 : vector<2x1xi1> to vector<2x16xi1>
    %202 = vector.broadcast %cst_97 : f32 to vector<2x16xf32>
    %203 = arith.select %201, %187, %202 : vector<2x16xi1>, vector<2x16xf32>
    %204 = arith.index_cast %148 : i32 to index
    %c0_98 = arith.constant 0 : index
    %c0_99 = arith.constant 0 : index
    %205 = vector.load %arg12[%204, %c0_98, %c0_99] : memref<4x2x16xf32, #tpu.memory_space<vmem>>, vector<1x2x16xf32>
    %206 = vector.shape_cast %205 : vector<1x2x16xf32> to vector<2x16xf32>
    %207 = vector.shape_cast %203 : vector<2x16xf32> to vector<1x2x16xf32>
    tpu.vector_store %arg12[%204, %c0_98, %c0_99], %207 {strides = array<i32>} : memref<4x2x16xf32, #tpu.memory_space<vmem>>, vector<1x2x16xf32>,
    %c1_i32_100 = arith.constant 1 : i32
    %208 = arith.addi %90, %c1_i32_100 : i32
    %209 = vector.broadcast %208 : i32 to vector<2x1xi32>
    %210 = arith.cmpi slt, %209, %89 : vector<2x1xi32>
    %c0_101 = arith.constant 0 : index
    %c0_102 = arith.constant 0 : index
    %c0_103 = arith.constant 0 : index
    %211 = vector.load %arg17[%c0_101, %c0_102, %c0_103] : memref<2x2x16xf32, #tpu.memory_space<vmem>>, vector<1x2x16xf32>
    %212 = vector.shape_cast %211 : vector<1x2x16xf32> to vector<2x16xf32>
    %c0_104 = arith.constant 0 : index
    %c0_105 = arith.constant 0 : index
    %c0_106 = arith.constant 0 : index
    %213 = vector.load %arg18[%c0_104, %c0_105, %c0_106] : memref<2x2x16xf32, #tpu.memory_space<vmem>>, vector<1x2x16xf32>
    %214 = vector.shape_cast %213 : vector<1x2x16xf32> to vector<2x16xf32>
    %215 = arith.index_cast %c1_i32_100 : i32 to index
    %c0_107 = arith.constant 0 : index
    %c0_108 = arith.constant 0 : index
    %216 = vector.load %arg15[%215, %c0_107, %c0_108] : memref<4x2x64xf32, #tpu.memory_space<vmem>>, vector<1x2x64xf32>
    %217 = vector.shape_cast %216 : vector<1x2x64xf32> to vector<2x64xf32>
    %cst_109 = arith.constant dense<0.000000e+00> : vector<2x64xf32>
    %218 = tpu.matmul %212, %87, %cst_109 {dimension_numbers = #tpu.dot_dimension_numbers<[1], [0], [0], [1], [0, 0, 1, 1], [], []>} : vector<2x16xf32>, vector<16x64xf32>, vector<2x64xf32> -> vector<2x64xf32>
    %219 = arith.addf %217, %218 : vector<2x64xf32>
    %220 = vector.extract_strided_slice %219 {offsets = [0, 0], sizes = [2, 16], strides = [1, 1]} : vector<2x64xf32> to vector<2x16xf32>
    %221 = arith.negf %220 : vector<2x16xf32>
    %222 = math.exp %221 : vector<2x16xf32>
    %cst_110 = arith.constant 1.000000e+00 : f32
    %223 = vector.broadcast %cst_110 : f32 to vector<2x16xf32>
    %224 = arith.addf %223, %222 : vector<2x16xf32>
    %225 = arith.divf %223, %224 : vector<2x16xf32>
    %226 = vector.extract_strided_slice %219 {offsets = [0, 16], sizes = [2, 16], strides = [1, 1]} : vector<2x64xf32> to vector<2x16xf32>
    %227 = arith.negf %226 : vector<2x16xf32>
    %228 = math.exp %227 : vector<2x16xf32>
    %cst_111 = arith.constant 1.000000e+00 : f32
    %229 = vector.broadcast %cst_111 : f32 to vector<2x16xf32>
    %230 = arith.addf %229, %228 : vector<2x16xf32>
    %231 = arith.divf %229, %230 : vector<2x16xf32>
    %232 = vector.extract_strided_slice %219 {offsets = [0, 32], sizes = [2, 16], strides = [1, 1]} : vector<2x64xf32> to vector<2x16xf32>
    %233 = math.tanh %232 : vector<2x16xf32>
    %234 = vector.extract_strided_slice %219 {offsets = [0, 48], sizes = [2, 16], strides = [1, 1]} : vector<2x64xf32> to vector<2x16xf32>
    %235 = arith.negf %234 : vector<2x16xf32>
    %236 = math.exp %235 : vector<2x16xf32>
    %cst_112 = arith.constant 1.000000e+00 : f32
    %237 = vector.broadcast %cst_112 : f32 to vector<2x16xf32>
    %238 = arith.addf %237, %236 : vector<2x16xf32>
    %239 = arith.divf %237, %238 : vector<2x16xf32>
    %240 = arith.mulf %231, %214 : vector<2x16xf32>
    %241 = arith.mulf %225, %233 : vector<2x16xf32>
    %242 = arith.addf %240, %241 : vector<2x16xf32>
    %243 = math.tanh %242 : vector<2x16xf32>
    %244 = arith.mulf %239, %243 : vector<2x16xf32>
    %245 = vector.shape_cast %210 : vector<2x1xi1> to vector<2x1xi1>
    %246 = vector.broadcast %245 : vector<2x1xi1> to vector<2x16xi1>
    %247 = arith.select %246, %244, %212 : vector<2x16xi1>, vector<2x16xf32>
    %c0_113 = arith.constant 0 : index
    %c0_114 = arith.constant 0 : index
    %c0_115 = arith.constant 0 : index
    %248 = vector.load %arg17[%c0_113, %c0_114, %c0_115] : memref<2x2x16xf32, #tpu.memory_space<vmem>>, vector<1x2x16xf32>
    %249 = vector.shape_cast %248 : vector<1x2x16xf32> to vector<2x16xf32>
    %250 = vector.shape_cast %247 : vector<2x16xf32> to vector<1x2x16xf32>
    tpu.vector_store %arg17[%c0_113, %c0_114, %c0_115], %250 {strides = array<i32>} : memref<2x2x16xf32, #tpu.memory_space<vmem>>, vector<1x2x16xf32>,
    %251 = vector.shape_cast %210 : vector<2x1xi1> to vector<2x1xi1>
    %252 = vector.broadcast %251 : vector<2x1xi1> to vector<2x16xi1>
    %253 = arith.select %252, %242, %214 : vector<2x16xi1>, vector<2x16xf32>
    %c0_116 = arith.constant 0 : index
    %c0_117 = arith.constant 0 : index
    %c0_118 = arith.constant 0 : index
    %254 = vector.load %arg18[%c0_116, %c0_117, %c0_118] : memref<2x2x16xf32, #tpu.memory_space<vmem>>, vector<1x2x16xf32>
    %255 = vector.shape_cast %254 : vector<1x2x16xf32> to vector<2x16xf32>
    %256 = vector.shape_cast %253 : vector<2x16xf32> to vector<1x2x16xf32>
    tpu.vector_store %arg18[%c0_116, %c0_117, %c0_118], %256 {strides = array<i32>} : memref<2x2x16xf32, #tpu.memory_space<vmem>>, vector<1x2x16xf32>,
    %cst_119 = arith.constant 0.000000e+00 : f32
    %257 = vector.shape_cast %210 : vector<2x1xi1> to vector<2x1xi1>
    %258 = vector.broadcast %257 : vector<2x1xi1> to vector<2x16xi1>
    %259 = vector.broadcast %cst_119 : f32 to vector<2x16xf32>
    %260 = arith.select %258, %244, %259 : vector<2x16xi1>, vector<2x16xf32>
    %261 = arith.index_cast %c1_i32_100 : i32 to index
    %c0_120 = arith.constant 0 : index
    %c0_121 = arith.constant 0 : index
    %262 = vector.load %arg11[%261, %c0_120, %c0_121] : memref<4x2x16xf32, #tpu.memory_space<vmem>>, vector<1x2x16xf32>
    %263 = vector.shape_cast %262 : vector<1x2x16xf32> to vector<2x16xf32>
    %264 = vector.shape_cast %260 : vector<2x16xf32> to vector<1x2x16xf32>
    tpu.vector_store %arg11[%261, %c0_120, %c0_121], %264 {strides = array<i32>} : memref<4x2x16xf32, #tpu.memory_space<vmem>>, vector<1x2x16xf32>,
    %c3_i32_122 = arith.constant 3 : i32
    %265 = arith.subi %c3_i32_122, %c1_i32_100 : i32
    %c1_i32_123 = arith.constant 1 : i32
    %266 = arith.subi %c1_i32_123, %arg1 : i32
    %c4_i32_124 = arith.constant 4 : i32
    %267 = arith.muli %266, %c4_i32_124 : i32
    %268 = arith.addi %267, %265 : i32
    %269 = vector.broadcast %268 : i32 to vector<2x1xi32>
    %270 = arith.cmpi slt, %269, %89 : vector<2x1xi32>
    %c1_125 = arith.constant 1 : index
    %c0_126 = arith.constant 0 : index
    %c0_127 = arith.constant 0 : index
    %271 = vector.load %arg17[%c1_125, %c0_126, %c0_127] : memref<2x2x16xf32, #tpu.memory_space<vmem>>, vector<1x2x16xf32>
    %272 = vector.shape_cast %271 : vector<1x2x16xf32> to vector<2x16xf32>
    %c1_128 = arith.constant 1 : index
    %c0_129 = arith.constant 0 : index
    %c0_130 = arith.constant 0 : index
    %273 = vector.load %arg18[%c1_128, %c0_129, %c0_130] : memref<2x2x16xf32, #tpu.memory_space<vmem>>, vector<1x2x16xf32>
    %274 = vector.shape_cast %273 : vector<1x2x16xf32> to vector<2x16xf32>
    %275 = arith.index_cast %265 : i32 to index
    %c0_131 = arith.constant 0 : index
    %c0_132 = arith.constant 0 : index
    %276 = vector.load %arg16[%275, %c0_131, %c0_132] : memref<4x2x64xf32, #tpu.memory_space<vmem>>, vector<1x2x64xf32>
    %277 = vector.shape_cast %276 : vector<1x2x64xf32> to vector<2x64xf32>
    %cst_133 = arith.constant dense<0.000000e+00> : vector<2x64xf32>
    %278 = tpu.matmul %272, %88, %cst_133 {dimension_numbers = #tpu.dot_dimension_numbers<[1], [0], [0], [1], [0, 0, 1, 1], [], []>} : vector<2x16xf32>, vector<16x64xf32>, vector<2x64xf32> -> vector<2x64xf32>
    %279 = arith.addf %277, %278 : vector<2x64xf32>
    %280 = vector.extract_strided_slice %279 {offsets = [0, 0], sizes = [2, 16], strides = [1, 1]} : vector<2x64xf32> to vector<2x16xf32>
    %281 = arith.negf %280 : vector<2x16xf32>
    %282 = math.exp %281 : vector<2x16xf32>
    %cst_134 = arith.constant 1.000000e+00 : f32
    %283 = vector.broadcast %cst_134 : f32 to vector<2x16xf32>
    %284 = arith.addf %283, %282 : vector<2x16xf32>
    %285 = arith.divf %283, %284 : vector<2x16xf32>
    %286 = vector.extract_strided_slice %279 {offsets = [0, 16], sizes = [2, 16], strides = [1, 1]} : vector<2x64xf32> to vector<2x16xf32>
    %287 = arith.negf %286 : vector<2x16xf32>
    %288 = math.exp %287 : vector<2x16xf32>
    %cst_135 = arith.constant 1.000000e+00 : f32
    %289 = vector.broadcast %cst_135 : f32 to vector<2x16xf32>
    %290 = arith.addf %289, %288 : vector<2x16xf32>
    %291 = arith.divf %289, %290 : vector<2x16xf32>
    %292 = vector.extract_strided_slice %279 {offsets = [0, 32], sizes = [2, 16], strides = [1, 1]} : vector<2x64xf32> to vector<2x16xf32>
    %293 = math.tanh %292 : vector<2x16xf32>
    %294 = vector.extract_strided_slice %279 {offsets = [0, 48], sizes = [2, 16], strides = [1, 1]} : vector<2x64xf32> to vector<2x16xf32>
    %295 = arith.negf %294 : vector<2x16xf32>
    %296 = math.exp %295 : vector<2x16xf32>
    %cst_136 = arith.constant 1.000000e+00 : f32
    %297 = vector.broadcast %cst_136 : f32 to vector<2x16xf32>
    %298 = arith.addf %297, %296 : vector<2x16xf32>
    %299 = arith.divf %297, %298 : vector<2x16xf32>
    %300 = arith.mulf %291, %274 : vector<2x16xf32>
    %301 = arith.mulf %285, %293 : vector<2x16xf32>
    %302 = arith.addf %300, %301 : vector<2x16xf32>
    %303 = math.tanh %302 : vector<2x16xf32>
    %304 = arith.mulf %299, %303 : vector<2x16xf32>
    %305 = vector.shape_cast %270 : vector<2x1xi1> to vector<2x1xi1>
    %306 = vector.broadcast %305 : vector<2x1xi1> to vector<2x16xi1>
    %307 = arith.select %306, %304, %272 : vector<2x16xi1>, vector<2x16xf32>
    %c1_137 = arith.constant 1 : index
    %c0_138 = arith.constant 0 : index
    %c0_139 = arith.constant 0 : index
    %308 = vector.load %arg17[%c1_137, %c0_138, %c0_139] : memref<2x2x16xf32, #tpu.memory_space<vmem>>, vector<1x2x16xf32>
    %309 = vector.shape_cast %308 : vector<1x2x16xf32> to vector<2x16xf32>
    %310 = vector.shape_cast %307 : vector<2x16xf32> to vector<1x2x16xf32>
    tpu.vector_store %arg17[%c1_137, %c0_138, %c0_139], %310 {strides = array<i32>} : memref<2x2x16xf32, #tpu.memory_space<vmem>>, vector<1x2x16xf32>,
    %311 = vector.shape_cast %270 : vector<2x1xi1> to vector<2x1xi1>
    %312 = vector.broadcast %311 : vector<2x1xi1> to vector<2x16xi1>
    %313 = arith.select %312, %302, %274 : vector<2x16xi1>, vector<2x16xf32>
    %c1_140 = arith.constant 1 : index
    %c0_141 = arith.constant 0 : index
    %c0_142 = arith.constant 0 : index
    %314 = vector.load %arg18[%c1_140, %c0_141, %c0_142] : memref<2x2x16xf32, #tpu.memory_space<vmem>>, vector<1x2x16xf32>
    %315 = vector.shape_cast %314 : vector<1x2x16xf32> to vector<2x16xf32>
    %316 = vector.shape_cast %313 : vector<2x16xf32> to vector<1x2x16xf32>
    tpu.vector_store %arg18[%c1_140, %c0_141, %c0_142], %316 {strides = array<i32>} : memref<2x2x16xf32, #tpu.memory_space<vmem>>, vector<1x2x16xf32>,
    %cst_143 = arith.constant 0.000000e+00 : f32
    %317 = vector.shape_cast %270 : vector<2x1xi1> to vector<2x1xi1>
    %318 = vector.broadcast %317 : vector<2x1xi1> to vector<2x16xi1>
    %319 = vector.broadcast %cst_143 : f32 to vector<2x16xf32>
    %320 = arith.select %318, %304, %319 : vector<2x16xi1>, vector<2x16xf32>
    %321 = arith.index_cast %265 : i32 to index
    %c0_144 = arith.constant 0 : index
    %c0_145 = arith.constant 0 : index
    %322 = vector.load %arg12[%321, %c0_144, %c0_145] : memref<4x2x16xf32, #tpu.memory_space<vmem>>, vector<1x2x16xf32>
    %323 = vector.shape_cast %322 : vector<1x2x16xf32> to vector<2x16xf32>
    %324 = vector.shape_cast %320 : vector<2x16xf32> to vector<1x2x16xf32>
    tpu.vector_store %arg12[%321, %c0_144, %c0_145], %324 {strides = array<i32>} : memref<4x2x16xf32, #tpu.memory_space<vmem>>, vector<1x2x16xf32>,
    %c2_i32_146 = arith.constant 2 : i32
    %325 = arith.addi %90, %c2_i32_146 : i32
    %326 = vector.broadcast %325 : i32 to vector<2x1xi32>
    %327 = arith.cmpi slt, %326, %89 : vector<2x1xi32>
    %c0_147 = arith.constant 0 : index
    %c0_148 = arith.constant 0 : index
    %c0_149 = arith.constant 0 : index
    %328 = vector.load %arg17[%c0_147, %c0_148, %c0_149] : memref<2x2x16xf32, #tpu.memory_space<vmem>>, vector<1x2x16xf32>
    %329 = vector.shape_cast %328 : vector<1x2x16xf32> to vector<2x16xf32>
    %c0_150 = arith.constant 0 : index
    %c0_151 = arith.constant 0 : index
    %c0_152 = arith.constant 0 : index
    %330 = vector.load %arg18[%c0_150, %c0_151, %c0_152] : memref<2x2x16xf32, #tpu.memory_space<vmem>>, vector<1x2x16xf32>
    %331 = vector.shape_cast %330 : vector<1x2x16xf32> to vector<2x16xf32>
    %332 = arith.index_cast %c2_i32_146 : i32 to index
    %c0_153 = arith.constant 0 : index
    %c0_154 = arith.constant 0 : index
    %333 = vector.load %arg15[%332, %c0_153, %c0_154] : memref<4x2x64xf32, #tpu.memory_space<vmem>>, vector<1x2x64xf32>
    %334 = vector.shape_cast %333 : vector<1x2x64xf32> to vector<2x64xf32>
    %cst_155 = arith.constant dense<0.000000e+00> : vector<2x64xf32>
    %335 = tpu.matmul %329, %87, %cst_155 {dimension_numbers = #tpu.dot_dimension_numbers<[1], [0], [0], [1], [0, 0, 1, 1], [], []>} : vector<2x16xf32>, vector<16x64xf32>, vector<2x64xf32> -> vector<2x64xf32>
    %336 = arith.addf %334, %335 : vector<2x64xf32>
    %337 = vector.extract_strided_slice %336 {offsets = [0, 0], sizes = [2, 16], strides = [1, 1]} : vector<2x64xf32> to vector<2x16xf32>
    %338 = arith.negf %337 : vector<2x16xf32>
    %339 = math.exp %338 : vector<2x16xf32>
    %cst_156 = arith.constant 1.000000e+00 : f32
    %340 = vector.broadcast %cst_156 : f32 to vector<2x16xf32>
    %341 = arith.addf %340, %339 : vector<2x16xf32>
    %342 = arith.divf %340, %341 : vector<2x16xf32>
    %343 = vector.extract_strided_slice %336 {offsets = [0, 16], sizes = [2, 16], strides = [1, 1]} : vector<2x64xf32> to vector<2x16xf32>
    %344 = arith.negf %343 : vector<2x16xf32>
    %345 = math.exp %344 : vector<2x16xf32>
    %cst_157 = arith.constant 1.000000e+00 : f32
    %346 = vector.broadcast %cst_157 : f32 to vector<2x16xf32>
    %347 = arith.addf %346, %345 : vector<2x16xf32>
    %348 = arith.divf %346, %347 : vector<2x16xf32>
    %349 = vector.extract_strided_slice %336 {offsets = [0, 32], sizes = [2, 16], strides = [1, 1]} : vector<2x64xf32> to vector<2x16xf32>
    %350 = math.tanh %349 : vector<2x16xf32>
    %351 = vector.extract_strided_slice %336 {offsets = [0, 48], sizes = [2, 16], strides = [1, 1]} : vector<2x64xf32> to vector<2x16xf32>
    %352 = arith.negf %351 : vector<2x16xf32>
    %353 = math.exp %352 : vector<2x16xf32>
    %cst_158 = arith.constant 1.000000e+00 : f32
    %354 = vector.broadcast %cst_158 : f32 to vector<2x16xf32>
    %355 = arith.addf %354, %353 : vector<2x16xf32>
    %356 = arith.divf %354, %355 : vector<2x16xf32>
    %357 = arith.mulf %348, %331 : vector<2x16xf32>
    %358 = arith.mulf %342, %350 : vector<2x16xf32>
    %359 = arith.addf %357, %358 : vector<2x16xf32>
    %360 = math.tanh %359 : vector<2x16xf32>
    %361 = arith.mulf %356, %360 : vector<2x16xf32>
    %362 = vector.shape_cast %327 : vector<2x1xi1> to vector<2x1xi1>
    %363 = vector.broadcast %362 : vector<2x1xi1> to vector<2x16xi1>
    %364 = arith.select %363, %361, %329 : vector<2x16xi1>, vector<2x16xf32>
    %c0_159 = arith.constant 0 : index
    %c0_160 = arith.constant 0 : index
    %c0_161 = arith.constant 0 : index
    %365 = vector.load %arg17[%c0_159, %c0_160, %c0_161] : memref<2x2x16xf32, #tpu.memory_space<vmem>>, vector<1x2x16xf32>
    %366 = vector.shape_cast %365 : vector<1x2x16xf32> to vector<2x16xf32>
    %367 = vector.shape_cast %364 : vector<2x16xf32> to vector<1x2x16xf32>
    tpu.vector_store %arg17[%c0_159, %c0_160, %c0_161], %367 {strides = array<i32>} : memref<2x2x16xf32, #tpu.memory_space<vmem>>, vector<1x2x16xf32>,
    %368 = vector.shape_cast %327 : vector<2x1xi1> to vector<2x1xi1>
    %369 = vector.broadcast %368 : vector<2x1xi1> to vector<2x16xi1>
    %370 = arith.select %369, %359, %331 : vector<2x16xi1>, vector<2x16xf32>
    %c0_162 = arith.constant 0 : index
    %c0_163 = arith.constant 0 : index
    %c0_164 = arith.constant 0 : index
    %371 = vector.load %arg18[%c0_162, %c0_163, %c0_164] : memref<2x2x16xf32, #tpu.memory_space<vmem>>, vector<1x2x16xf32>
    %372 = vector.shape_cast %371 : vector<1x2x16xf32> to vector<2x16xf32>
    %373 = vector.shape_cast %370 : vector<2x16xf32> to vector<1x2x16xf32>
    tpu.vector_store %arg18[%c0_162, %c0_163, %c0_164], %373 {strides = array<i32>} : memref<2x2x16xf32, #tpu.memory_space<vmem>>, vector<1x2x16xf32>,
    %cst_165 = arith.constant 0.000000e+00 : f32
    %374 = vector.shape_cast %327 : vector<2x1xi1> to vector<2x1xi1>
    %375 = vector.broadcast %374 : vector<2x1xi1> to vector<2x16xi1>
    %376 = vector.broadcast %cst_165 : f32 to vector<2x16xf32>
    %377 = arith.select %375, %361, %376 : vector<2x16xi1>, vector<2x16xf32>
    %378 = arith.index_cast %c2_i32_146 : i32 to index
    %c0_166 = arith.constant 0 : index
    %c0_167 = arith.constant 0 : index
    %379 = vector.load %arg11[%378, %c0_166, %c0_167] : memref<4x2x16xf32, #tpu.memory_space<vmem>>, vector<1x2x16xf32>
    %380 = vector.shape_cast %379 : vector<1x2x16xf32> to vector<2x16xf32>
    %381 = vector.shape_cast %377 : vector<2x16xf32> to vector<1x2x16xf32>
    tpu.vector_store %arg11[%378, %c0_166, %c0_167], %381 {strides = array<i32>} : memref<4x2x16xf32, #tpu.memory_space<vmem>>, vector<1x2x16xf32>,
    %c3_i32_168 = arith.constant 3 : i32
    %382 = arith.subi %c3_i32_168, %c2_i32_146 : i32
    %c1_i32_169 = arith.constant 1 : i32
    %383 = arith.subi %c1_i32_169, %arg1 : i32
    %c4_i32_170 = arith.constant 4 : i32
    %384 = arith.muli %383, %c4_i32_170 : i32
    %385 = arith.addi %384, %382 : i32
    %386 = vector.broadcast %385 : i32 to vector<2x1xi32>
    %387 = arith.cmpi slt, %386, %89 : vector<2x1xi32>
    %c1_171 = arith.constant 1 : index
    %c0_172 = arith.constant 0 : index
    %c0_173 = arith.constant 0 : index
    %388 = vector.load %arg17[%c1_171, %c0_172, %c0_173] : memref<2x2x16xf32, #tpu.memory_space<vmem>>, vector<1x2x16xf32>
    %389 = vector.shape_cast %388 : vector<1x2x16xf32> to vector<2x16xf32>
    %c1_174 = arith.constant 1 : index
    %c0_175 = arith.constant 0 : index
    %c0_176 = arith.constant 0 : index
    %390 = vector.load %arg18[%c1_174, %c0_175, %c0_176] : memref<2x2x16xf32, #tpu.memory_space<vmem>>, vector<1x2x16xf32>
    %391 = vector.shape_cast %390 : vector<1x2x16xf32> to vector<2x16xf32>
    %392 = arith.index_cast %382 : i32 to index
    %c0_177 = arith.constant 0 : index
    %c0_178 = arith.constant 0 : index
    %393 = vector.load %arg16[%392, %c0_177, %c0_178] : memref<4x2x64xf32, #tpu.memory_space<vmem>>, vector<1x2x64xf32>
    %394 = vector.shape_cast %393 : vector<1x2x64xf32> to vector<2x64xf32>
    %cst_179 = arith.constant dense<0.000000e+00> : vector<2x64xf32>
    %395 = tpu.matmul %389, %88, %cst_179 {dimension_numbers = #tpu.dot_dimension_numbers<[1], [0], [0], [1], [0, 0, 1, 1], [], []>} : vector<2x16xf32>, vector<16x64xf32>, vector<2x64xf32> -> vector<2x64xf32>
    %396 = arith.addf %394, %395 : vector<2x64xf32>
    %397 = vector.extract_strided_slice %396 {offsets = [0, 0], sizes = [2, 16], strides = [1, 1]} : vector<2x64xf32> to vector<2x16xf32>
    %398 = arith.negf %397 : vector<2x16xf32>
    %399 = math.exp %398 : vector<2x16xf32>
    %cst_180 = arith.constant 1.000000e+00 : f32
    %400 = vector.broadcast %cst_180 : f32 to vector<2x16xf32>
    %401 = arith.addf %400, %399 : vector<2x16xf32>
    %402 = arith.divf %400, %401 : vector<2x16xf32>
    %403 = vector.extract_strided_slice %396 {offsets = [0, 16], sizes = [2, 16], strides = [1, 1]} : vector<2x64xf32> to vector<2x16xf32>
    %404 = arith.negf %403 : vector<2x16xf32>
    %405 = math.exp %404 : vector<2x16xf32>
    %cst_181 = arith.constant 1.000000e+00 : f32
    %406 = vector.broadcast %cst_181 : f32 to vector<2x16xf32>
    %407 = arith.addf %406, %405 : vector<2x16xf32>
    %408 = arith.divf %406, %407 : vector<2x16xf32>
    %409 = vector.extract_strided_slice %396 {offsets = [0, 32], sizes = [2, 16], strides = [1, 1]} : vector<2x64xf32> to vector<2x16xf32>
    %410 = math.tanh %409 : vector<2x16xf32>
    %411 = vector.extract_strided_slice %396 {offsets = [0, 48], sizes = [2, 16], strides = [1, 1]} : vector<2x64xf32> to vector<2x16xf32>
    %412 = arith.negf %411 : vector<2x16xf32>
    %413 = math.exp %412 : vector<2x16xf32>
    %cst_182 = arith.constant 1.000000e+00 : f32
    %414 = vector.broadcast %cst_182 : f32 to vector<2x16xf32>
    %415 = arith.addf %414, %413 : vector<2x16xf32>
    %416 = arith.divf %414, %415 : vector<2x16xf32>
    %417 = arith.mulf %408, %391 : vector<2x16xf32>
    %418 = arith.mulf %402, %410 : vector<2x16xf32>
    %419 = arith.addf %417, %418 : vector<2x16xf32>
    %420 = math.tanh %419 : vector<2x16xf32>
    %421 = arith.mulf %416, %420 : vector<2x16xf32>
    %422 = vector.shape_cast %387 : vector<2x1xi1> to vector<2x1xi1>
    %423 = vector.broadcast %422 : vector<2x1xi1> to vector<2x16xi1>
    %424 = arith.select %423, %421, %389 : vector<2x16xi1>, vector<2x16xf32>
    %c1_183 = arith.constant 1 : index
    %c0_184 = arith.constant 0 : index
    %c0_185 = arith.constant 0 : index
    %425 = vector.load %arg17[%c1_183, %c0_184, %c0_185] : memref<2x2x16xf32, #tpu.memory_space<vmem>>, vector<1x2x16xf32>
    %426 = vector.shape_cast %425 : vector<1x2x16xf32> to vector<2x16xf32>
    %427 = vector.shape_cast %424 : vector<2x16xf32> to vector<1x2x16xf32>
    tpu.vector_store %arg17[%c1_183, %c0_184, %c0_185], %427 {strides = array<i32>} : memref<2x2x16xf32, #tpu.memory_space<vmem>>, vector<1x2x16xf32>,
    %428 = vector.shape_cast %387 : vector<2x1xi1> to vector<2x1xi1>
    %429 = vector.broadcast %428 : vector<2x1xi1> to vector<2x16xi1>
    %430 = arith.select %429, %419, %391 : vector<2x16xi1>, vector<2x16xf32>
    %c1_186 = arith.constant 1 : index
    %c0_187 = arith.constant 0 : index
    %c0_188 = arith.constant 0 : index
    %431 = vector.load %arg18[%c1_186, %c0_187, %c0_188] : memref<2x2x16xf32, #tpu.memory_space<vmem>>, vector<1x2x16xf32>
    %432 = vector.shape_cast %431 : vector<1x2x16xf32> to vector<2x16xf32>
    %433 = vector.shape_cast %430 : vector<2x16xf32> to vector<1x2x16xf32>
    tpu.vector_store %arg18[%c1_186, %c0_187, %c0_188], %433 {strides = array<i32>} : memref<2x2x16xf32, #tpu.memory_space<vmem>>, vector<1x2x16xf32>,
    %cst_189 = arith.constant 0.000000e+00 : f32
    %434 = vector.shape_cast %387 : vector<2x1xi1> to vector<2x1xi1>
    %435 = vector.broadcast %434 : vector<2x1xi1> to vector<2x16xi1>
    %436 = vector.broadcast %cst_189 : f32 to vector<2x16xf32>
    %437 = arith.select %435, %421, %436 : vector<2x16xi1>, vector<2x16xf32>
    %438 = arith.index_cast %382 : i32 to index
    %c0_190 = arith.constant 0 : index
    %c0_191 = arith.constant 0 : index
    %439 = vector.load %arg12[%438, %c0_190, %c0_191] : memref<4x2x16xf32, #tpu.memory_space<vmem>>, vector<1x2x16xf32>
    %440 = vector.shape_cast %439 : vector<1x2x16xf32> to vector<2x16xf32>
    %441 = vector.shape_cast %437 : vector<2x16xf32> to vector<1x2x16xf32>
    tpu.vector_store %arg12[%438, %c0_190, %c0_191], %441 {strides = array<i32>} : memref<4x2x16xf32, #tpu.memory_space<vmem>>, vector<1x2x16xf32>,
    %c3_i32_192 = arith.constant 3 : i32
    %442 = arith.addi %90, %c3_i32_192 : i32
    %443 = vector.broadcast %442 : i32 to vector<2x1xi32>
    %444 = arith.cmpi slt, %443, %89 : vector<2x1xi32>
    %c0_193 = arith.constant 0 : index
    %c0_194 = arith.constant 0 : index
    %c0_195 = arith.constant 0 : index
    %445 = vector.load %arg17[%c0_193, %c0_194, %c0_195] : memref<2x2x16xf32, #tpu.memory_space<vmem>>, vector<1x2x16xf32>
    %446 = vector.shape_cast %445 : vector<1x2x16xf32> to vector<2x16xf32>
    %c0_196 = arith.constant 0 : index
    %c0_197 = arith.constant 0 : index
    %c0_198 = arith.constant 0 : index
    %447 = vector.load %arg18[%c0_196, %c0_197, %c0_198] : memref<2x2x16xf32, #tpu.memory_space<vmem>>, vector<1x2x16xf32>
    %448 = vector.shape_cast %447 : vector<1x2x16xf32> to vector<2x16xf32>
    %449 = arith.index_cast %c3_i32_192 : i32 to index
    %c0_199 = arith.constant 0 : index
    %c0_200 = arith.constant 0 : index
    %450 = vector.load %arg15[%449, %c0_199, %c0_200] : memref<4x2x64xf32, #tpu.memory_space<vmem>>, vector<1x2x64xf32>
    %451 = vector.shape_cast %450 : vector<1x2x64xf32> to vector<2x64xf32>
    %cst_201 = arith.constant dense<0.000000e+00> : vector<2x64xf32>
    %452 = tpu.matmul %446, %87, %cst_201 {dimension_numbers = #tpu.dot_dimension_numbers<[1], [0], [0], [1], [0, 0, 1, 1], [], []>} : vector<2x16xf32>, vector<16x64xf32>, vector<2x64xf32> -> vector<2x64xf32>
    %453 = arith.addf %451, %452 : vector<2x64xf32>
    %454 = vector.extract_strided_slice %453 {offsets = [0, 0], sizes = [2, 16], strides = [1, 1]} : vector<2x64xf32> to vector<2x16xf32>
    %455 = arith.negf %454 : vector<2x16xf32>
    %456 = math.exp %455 : vector<2x16xf32>
    %cst_202 = arith.constant 1.000000e+00 : f32
    %457 = vector.broadcast %cst_202 : f32 to vector<2x16xf32>
    %458 = arith.addf %457, %456 : vector<2x16xf32>
    %459 = arith.divf %457, %458 : vector<2x16xf32>
    %460 = vector.extract_strided_slice %453 {offsets = [0, 16], sizes = [2, 16], strides = [1, 1]} : vector<2x64xf32> to vector<2x16xf32>
    %461 = arith.negf %460 : vector<2x16xf32>
    %462 = math.exp %461 : vector<2x16xf32>
    %cst_203 = arith.constant 1.000000e+00 : f32
    %463 = vector.broadcast %cst_203 : f32 to vector<2x16xf32>
    %464 = arith.addf %463, %462 : vector<2x16xf32>
    %465 = arith.divf %463, %464 : vector<2x16xf32>
    %466 = vector.extract_strided_slice %453 {offsets = [0, 32], sizes = [2, 16], strides = [1, 1]} : vector<2x64xf32> to vector<2x16xf32>
    %467 = math.tanh %466 : vector<2x16xf32>
    %468 = vector.extract_strided_slice %453 {offsets = [0, 48], sizes = [2, 16], strides = [1, 1]} : vector<2x64xf32> to vector<2x16xf32>
    %469 = arith.negf %468 : vector<2x16xf32>
    %470 = math.exp %469 : vector<2x16xf32>
    %cst_204 = arith.constant 1.000000e+00 : f32
    %471 = vector.broadcast %cst_204 : f32 to vector<2x16xf32>
    %472 = arith.addf %471, %470 : vector<2x16xf32>
    %473 = arith.divf %471, %472 : vector<2x16xf32>
    %474 = arith.mulf %465, %448 : vector<2x16xf32>
    %475 = arith.mulf %459, %467 : vector<2x16xf32>
    %476 = arith.addf %474, %475 : vector<2x16xf32>
    %477 = math.tanh %476 : vector<2x16xf32>
    %478 = arith.mulf %473, %477 : vector<2x16xf32>
    %479 = vector.shape_cast %444 : vector<2x1xi1> to vector<2x1xi1>
    %480 = vector.broadcast %479 : vector<2x1xi1> to vector<2x16xi1>
    %481 = arith.select %480, %478, %446 : vector<2x16xi1>, vector<2x16xf32>
    %c0_205 = arith.constant 0 : index
    %c0_206 = arith.constant 0 : index
    %c0_207 = arith.constant 0 : index
    %482 = vector.load %arg17[%c0_205, %c0_206, %c0_207] : memref<2x2x16xf32, #tpu.memory_space<vmem>>, vector<1x2x16xf32>
    %483 = vector.shape_cast %482 : vector<1x2x16xf32> to vector<2x16xf32>
    %484 = vector.shape_cast %481 : vector<2x16xf32> to vector<1x2x16xf32>
    tpu.vector_store %arg17[%c0_205, %c0_206, %c0_207], %484 {strides = array<i32>} : memref<2x2x16xf32, #tpu.memory_space<vmem>>, vector<1x2x16xf32>,
    %485 = vector.shape_cast %444 : vector<2x1xi1> to vector<2x1xi1>
    %486 = vector.broadcast %485 : vector<2x1xi1> to vector<2x16xi1>
    %487 = arith.select %486, %476, %448 : vector<2x16xi1>, vector<2x16xf32>
    %c0_208 = arith.constant 0 : index
    %c0_209 = arith.constant 0 : index
    %c0_210 = arith.constant 0 : index
    %488 = vector.load %arg18[%c0_208, %c0_209, %c0_210] : memref<2x2x16xf32, #tpu.memory_space<vmem>>, vector<1x2x16xf32>
    %489 = vector.shape_cast %488 : vector<1x2x16xf32> to vector<2x16xf32>
    %490 = vector.shape_cast %487 : vector<2x16xf32> to vector<1x2x16xf32>
    tpu.vector_store %arg18[%c0_208, %c0_209, %c0_210], %490 {strides = array<i32>} : memref<2x2x16xf32, #tpu.memory_space<vmem>>, vector<1x2x16xf32>,
    %cst_211 = arith.constant 0.000000e+00 : f32
    %491 = vector.shape_cast %444 : vector<2x1xi1> to vector<2x1xi1>
    %492 = vector.broadcast %491 : vector<2x1xi1> to vector<2x16xi1>
    %493 = vector.broadcast %cst_211 : f32 to vector<2x16xf32>
    %494 = arith.select %492, %478, %493 : vector<2x16xi1>, vector<2x16xf32>
    %495 = arith.index_cast %c3_i32_192 : i32 to index
    %c0_212 = arith.constant 0 : index
    %c0_213 = arith.constant 0 : index
    %496 = vector.load %arg11[%495, %c0_212, %c0_213] : memref<4x2x16xf32, #tpu.memory_space<vmem>>, vector<1x2x16xf32>
    %497 = vector.shape_cast %496 : vector<1x2x16xf32> to vector<2x16xf32>
    %498 = vector.shape_cast %494 : vector<2x16xf32> to vector<1x2x16xf32>
    tpu.vector_store %arg11[%495, %c0_212, %c0_213], %498 {strides = array<i32>} : memref<4x2x16xf32, #tpu.memory_space<vmem>>, vector<1x2x16xf32>,
    %c3_i32_214 = arith.constant 3 : i32
    %499 = arith.subi %c3_i32_214, %c3_i32_192 : i32
    %c1_i32_215 = arith.constant 1 : i32
    %500 = arith.subi %c1_i32_215, %arg1 : i32
    %c4_i32_216 = arith.constant 4 : i32
    %501 = arith.muli %500, %c4_i32_216 : i32
    %502 = arith.addi %501, %499 : i32
    %503 = vector.broadcast %502 : i32 to vector<2x1xi32>
    %504 = arith.cmpi slt, %503, %89 : vector<2x1xi32>
    %c1_217 = arith.constant 1 : index
    %c0_218 = arith.constant 0 : index
    %c0_219 = arith.constant 0 : index
    %505 = vector.load %arg17[%c1_217, %c0_218, %c0_219] : memref<2x2x16xf32, #tpu.memory_space<vmem>>, vector<1x2x16xf32>
    %506 = vector.shape_cast %505 : vector<1x2x16xf32> to vector<2x16xf32>
    %c1_220 = arith.constant 1 : index
    %c0_221 = arith.constant 0 : index
    %c0_222 = arith.constant 0 : index
    %507 = vector.load %arg18[%c1_220, %c0_221, %c0_222] : memref<2x2x16xf32, #tpu.memory_space<vmem>>, vector<1x2x16xf32>
    %508 = vector.shape_cast %507 : vector<1x2x16xf32> to vector<2x16xf32>
    %509 = arith.index_cast %499 : i32 to index
    %c0_223 = arith.constant 0 : index
    %c0_224 = arith.constant 0 : index
    %510 = vector.load %arg16[%509, %c0_223, %c0_224] : memref<4x2x64xf32, #tpu.memory_space<vmem>>, vector<1x2x64xf32>
    %511 = vector.shape_cast %510 : vector<1x2x64xf32> to vector<2x64xf32>
    %cst_225 = arith.constant dense<0.000000e+00> : vector<2x64xf32>
    %512 = tpu.matmul %506, %88, %cst_225 {dimension_numbers = #tpu.dot_dimension_numbers<[1], [0], [0], [1], [0, 0, 1, 1], [], []>} : vector<2x16xf32>, vector<16x64xf32>, vector<2x64xf32> -> vector<2x64xf32>
    %513 = arith.addf %511, %512 : vector<2x64xf32>
    %514 = vector.extract_strided_slice %513 {offsets = [0, 0], sizes = [2, 16], strides = [1, 1]} : vector<2x64xf32> to vector<2x16xf32>
    %515 = arith.negf %514 : vector<2x16xf32>
    %516 = math.exp %515 : vector<2x16xf32>
    %cst_226 = arith.constant 1.000000e+00 : f32
    %517 = vector.broadcast %cst_226 : f32 to vector<2x16xf32>
    %518 = arith.addf %517, %516 : vector<2x16xf32>
    %519 = arith.divf %517, %518 : vector<2x16xf32>
    %520 = vector.extract_strided_slice %513 {offsets = [0, 16], sizes = [2, 16], strides = [1, 1]} : vector<2x64xf32> to vector<2x16xf32>
    %521 = arith.negf %520 : vector<2x16xf32>
    %522 = math.exp %521 : vector<2x16xf32>
    %cst_227 = arith.constant 1.000000e+00 : f32
    %523 = vector.broadcast %cst_227 : f32 to vector<2x16xf32>
    %524 = arith.addf %523, %522 : vector<2x16xf32>
    %525 = arith.divf %523, %524 : vector<2x16xf32>
    %526 = vector.extract_strided_slice %513 {offsets = [0, 32], sizes = [2, 16], strides = [1, 1]} : vector<2x64xf32> to vector<2x16xf32>
    %527 = math.tanh %526 : vector<2x16xf32>
    %528 = vector.extract_strided_slice %513 {offsets = [0, 48], sizes = [2, 16], strides = [1, 1]} : vector<2x64xf32> to vector<2x16xf32>
    %529 = arith.negf %528 : vector<2x16xf32>
    %530 = math.exp %529 : vector<2x16xf32>
    %cst_228 = arith.constant 1.000000e+00 : f32
    %531 = vector.broadcast %cst_228 : f32 to vector<2x16xf32>
    %532 = arith.addf %531, %530 : vector<2x16xf32>
    %533 = arith.divf %531, %532 : vector<2x16xf32>
    %534 = arith.mulf %525, %508 : vector<2x16xf32>
    %535 = arith.mulf %519, %527 : vector<2x16xf32>
    %536 = arith.addf %534, %535 : vector<2x16xf32>
    %537 = math.tanh %536 : vector<2x16xf32>
    %538 = arith.mulf %533, %537 : vector<2x16xf32>
    %539 = vector.shape_cast %504 : vector<2x1xi1> to vector<2x1xi1>
    %540 = vector.broadcast %539 : vector<2x1xi1> to vector<2x16xi1>
    %541 = arith.select %540, %538, %506 : vector<2x16xi1>, vector<2x16xf32>
    %c1_229 = arith.constant 1 : index
    %c0_230 = arith.constant 0 : index
    %c0_231 = arith.constant 0 : index
    %542 = vector.load %arg17[%c1_229, %c0_230, %c0_231] : memref<2x2x16xf32, #tpu.memory_space<vmem>>, vector<1x2x16xf32>
    %543 = vector.shape_cast %542 : vector<1x2x16xf32> to vector<2x16xf32>
    %544 = vector.shape_cast %541 : vector<2x16xf32> to vector<1x2x16xf32>
    tpu.vector_store %arg17[%c1_229, %c0_230, %c0_231], %544 {strides = array<i32>} : memref<2x2x16xf32, #tpu.memory_space<vmem>>, vector<1x2x16xf32>,
    %545 = vector.shape_cast %504 : vector<2x1xi1> to vector<2x1xi1>
    %546 = vector.broadcast %545 : vector<2x1xi1> to vector<2x16xi1>
    %547 = arith.select %546, %536, %508 : vector<2x16xi1>, vector<2x16xf32>
    %c1_232 = arith.constant 1 : index
    %c0_233 = arith.constant 0 : index
    %c0_234 = arith.constant 0 : index
    %548 = vector.load %arg18[%c1_232, %c0_233, %c0_234] : memref<2x2x16xf32, #tpu.memory_space<vmem>>, vector<1x2x16xf32>
    %549 = vector.shape_cast %548 : vector<1x2x16xf32> to vector<2x16xf32>
    %550 = vector.shape_cast %547 : vector<2x16xf32> to vector<1x2x16xf32>
    tpu.vector_store %arg18[%c1_232, %c0_233, %c0_234], %550 {strides = array<i32>} : memref<2x2x16xf32, #tpu.memory_space<vmem>>, vector<1x2x16xf32>,
    %cst_235 = arith.constant 0.000000e+00 : f32
    %551 = vector.shape_cast %504 : vector<2x1xi1> to vector<2x1xi1>
    %552 = vector.broadcast %551 : vector<2x1xi1> to vector<2x16xi1>
    %553 = vector.broadcast %cst_235 : f32 to vector<2x16xf32>
    %554 = arith.select %552, %538, %553 : vector<2x16xi1>, vector<2x16xf32>
    %555 = arith.index_cast %499 : i32 to index
    %c0_236 = arith.constant 0 : index
    %c0_237 = arith.constant 0 : index
    %556 = vector.load %arg12[%555, %c0_236, %c0_237] : memref<4x2x16xf32, #tpu.memory_space<vmem>>, vector<1x2x16xf32>
    %557 = vector.shape_cast %556 : vector<1x2x16xf32> to vector<2x16xf32>
    %558 = vector.shape_cast %554 : vector<2x16xf32> to vector<1x2x16xf32>
    tpu.vector_store %arg12[%555, %c0_236, %c0_237], %558 {strides = array<i32>} : memref<4x2x16xf32, #tpu.memory_space<vmem>>, vector<1x2x16xf32>,
    %c4_i32_238 = arith.constant 4 : i32
    %c1_i32_239 = arith.constant 1 : i32
    %559 = arith.cmpi eq, %arg1, %c1_i32_239 : i32
    %560 = arith.extui %559 : i1 to i32
    %c0_i32_240 = arith.constant 0 : i32
    %561 = arith.cmpi ne, %560, %c0_i32_240 : i32
    scf.if %561 {
      %c0_241 = arith.constant 0 : index
      %c0_242 = arith.constant 0 : index
      %c0_243 = arith.constant 0 : index
      %562 = vector.load %arg17[%c0_241, %c0_242, %c0_243] : memref<2x2x16xf32, #tpu.memory_space<vmem>>, vector<2x2x16xf32>
      %c0_244 = arith.constant 0 : index
      %c0_245 = arith.constant 0 : index
      %c0_246 = arith.constant 0 : index
      %563 = vector.load %arg13[%c0_244, %c0_245, %c0_246] : memref<2x2x16xf32, #tpu.memory_space<vmem>>, vector<2x2x16xf32>
      tpu.vector_store %arg13[%c0_244, %c0_245, %c0_246], %562 {strides = array<i32>} : memref<2x2x16xf32, #tpu.memory_space<vmem>>, vector<2x2x16xf32>,
      %c0_247 = arith.constant 0 : index
      %c0_248 = arith.constant 0 : index
      %c0_249 = arith.constant 0 : index
      %564 = vector.load %arg18[%c0_247, %c0_248, %c0_249] : memref<2x2x16xf32, #tpu.memory_space<vmem>>, vector<2x2x16xf32>
      %c0_250 = arith.constant 0 : index
      %c0_251 = arith.constant 0 : index
      %c0_252 = arith.constant 0 : index
      %565 = vector.load %arg14[%c0_250, %c0_251, %c0_252] : memref<2x2x16xf32, #tpu.memory_space<vmem>>, vector<2x2x16xf32>
      tpu.vector_store %arg14[%c0_250, %c0_251, %c0_252], %564 {strides = array<i32>} : memref<2x2x16xf32, #tpu.memory_space<vmem>>, vector<2x2x16xf32>,
    } else {
    }
    return
  }
  func.func @transform_0(%arg0: i32, %arg1: i32) -> (i32, i32) {
    %c0_i32 = arith.constant 0 : i32
    %c0_i32_0 = arith.constant 0 : i32
    return %arg0, %c0_i32 : i32, i32
  }
  func.func @transform_1(%arg0: i32, %arg1: i32) -> (i32, i32, i32) {
    %c0_i32 = arith.constant 0 : i32
    %c0_i32_0 = arith.constant 0 : i32
    return %arg1, %arg0, %c0_i32 : i32, i32, i32
  }
  func.func @transform_2(%arg0: i32, %arg1: i32) -> (i32, i32, i32) {
    %c1_i32 = arith.constant 1 : i32
    %0 = arith.subi %c1_i32, %arg1 : i32
    %c0_i32 = arith.constant 0 : i32
    %c0_i32_0 = arith.constant 0 : i32
    return %0, %arg0, %c0_i32 : i32, i32, i32
  }
  func.func @transform_3(%arg0: i32, %arg1: i32) -> (i32, i32) {
    %c0_i32 = arith.constant 0 : i32
    %c0_i32_0 = arith.constant 0 : i32
    %c0_i32_1 = arith.constant 0 : i32
    return %c0_i32, %c0_i32_0 : i32, i32
  }
  func.func @transform_4(%arg0: i32, %arg1: i32) -> (i32, i32) {
    %c0_i32 = arith.constant 0 : i32
    %c0_i32_0 = arith.constant 0 : i32
    %c0_i32_1 = arith.constant 0 : i32
    return %c0_i32, %c0_i32_0 : i32, i32
  }
  func.func @transform_5(%arg0: i32, %arg1: i32) -> (i32, i32) {
    %c0_i32 = arith.constant 0 : i32
    %c0_i32_0 = arith.constant 0 : i32
    %c0_i32_1 = arith.constant 0 : i32
    return %c0_i32, %c0_i32_0 : i32, i32
  }
  func.func @transform_6(%arg0: i32, %arg1: i32) -> (i32, i32) {
    %c0_i32 = arith.constant 0 : i32
    %c0_i32_0 = arith.constant 0 : i32
    %c0_i32_1 = arith.constant 0 : i32
    return %c0_i32, %c0_i32_0 : i32, i32
  }
  func.func @transform_7(%arg0: i32, %arg1: i32) -> (i32, i32) {
    %c0_i32 = arith.constant 0 : i32
    %c0_i32_0 = arith.constant 0 : i32
    %c0_i32_1 = arith.constant 0 : i32
    return %c0_i32, %c0_i32_0 : i32, i32
  }
  func.func @transform_8(%arg0: i32, %arg1: i32) -> (i32, i32) {
    %c0_i32 = arith.constant 0 : i32
    %c0_i32_0 = arith.constant 0 : i32
    %c0_i32_1 = arith.constant 0 : i32
    return %c0_i32, %c0_i32_0 : i32, i32
  }
  func.func @transform_9(%arg0: i32, %arg1: i32) -> (i32, i32, i32) {
    %c0_i32 = arith.constant 0 : i32
    %c0_i32_0 = arith.constant 0 : i32
    return %arg1, %arg0, %c0_i32 : i32, i32, i32
  }
  func.func @transform_10(%arg0: i32, %arg1: i32) -> (i32, i32, i32) {
    %c1_i32 = arith.constant 1 : i32
    %0 = arith.subi %c1_i32, %arg1 : i32
    %c0_i32 = arith.constant 0 : i32
    %c0_i32_0 = arith.constant 0 : i32
    return %0, %arg0, %c0_i32 : i32, i32, i32
  }
  func.func @transform_11(%arg0: i32, %arg1: i32) -> (i32, i32, i32) {
    %c0_i32 = arith.constant 0 : i32
    %c0_i32_0 = arith.constant 0 : i32
    %c0_i32_1 = arith.constant 0 : i32
    return %c0_i32, %arg0, %c0_i32_0 : i32, i32, i32
  }
  func.func @transform_12(%arg0: i32, %arg1: i32) -> (i32, i32, i32) {
    %c0_i32 = arith.constant 0 : i32
    %c0_i32_0 = arith.constant 0 : i32
    %c0_i32_1 = arith.constant 0 : i32
    return %c0_i32, %arg0, %c0_i32_0 : i32, i32, i32
  }
}

</mosaic_0001>

<llo_original>
// kernel: tpu_custom_call.1
$region0: #{tpu_custom_call.1}
  #allocation0 [shape = 'u32[]', space=smem, size = 0x4, offset = 0x4, fixed_abs, tag = 'smem constant byte address 0x4 - core index']
  #allocation1 [shape = 'u32[144,128]{1,0:T(1,128)}', space=vmem, size = 0x12000, scoped, tag = 'internal scratch']
  #allocation2 [shape = 'f32[4,2,64]{2,1,0:T(2,128)}', space=vmem, size = 0x1000, scoped, tag = 'scratch operand']
  #allocation3 [shape = 'f32[4,2,64]{2,1,0:T(2,128)}', space=vmem, size = 0x1000, scoped, tag = 'scratch operand']
  #allocation4 [shape = 'f32[2,2,16]{2,1,0:T(2,128)}', space=vmem, size = 0x800, scoped, tag = 'scratch operand']
  #allocation5 [shape = 'f32[2,2,16]{2,1,0:T(2,128)}', space=vmem, size = 0x800, scoped, tag = 'scratch operand']
  %s0 = inlined_call_operand.vmem [shape: s32[2,1], index: 0, kind: input, shape index: {}]
  %s1 = inlined_call_operand.hbm [shape: f32[8,2,32], index: 1, kind: input, shape index: {}]
  %s2 = inlined_call_operand.hbm [shape: f32[8,2,32], index: 2, kind: input, shape index: {}]
  %s3 = inlined_call_operand.hbm [shape: f32[32,64], index: 3, kind: input, shape index: {}]
  %s4 = inlined_call_operand.hbm [shape: f32[32,64], index: 4, kind: input, shape index: {}]
  %s5 = inlined_call_operand.vmem [shape: f32[16,64], index: 5, kind: input, shape index: {}]
  %s6 = inlined_call_operand.hbm [shape: f32[16,64], index: 6, kind: input, shape index: {}]
  %s7 = inlined_call_operand.vmem [shape: f32[1,64], index: 7, kind: input, shape index: {}]
  %s8 = inlined_call_operand.vmem [shape: f32[1,64], index: 8, kind: input, shape index: {}]
  %s9 = inlined_call_operand.hbm [shape: f32[8,2,16], index: 9, kind: output, shape index: {0}]
  %s10 = inlined_call_operand.hbm [shape: f32[8,2,16], index: 10, kind: output, shape index: {1}]
  %s11 = inlined_call_operand.hbm [shape: f32[2,2,16], index: 11, kind: output, shape index: {2}]
  %s12 = inlined_call_operand.hbm [shape: f32[2,2,16], index: 12, kind: output, shape index: {3}]
  %13 = xla_tuple %s9, %s10, %s11, %s12
  %s14 = sld [smem:[#allocation0]]
  $region121: #{tpu_custom_call.1} parent=0
    _
  %s16 = ssub.s32 1, %s14
  %s17 = scalar_select 0, %s16, %s14
  $region1: #{tpu_custom_call.1} parent=0
    #allocation6 [shape = 'u8[8192]{0}', space=vmem, size = 0x2000, scoped, tag = 'input window, operand 1']
    #allocation7 [shape = 's32[2]{0}', space=sflag, size = 0x8, scoped, tag = 'scoped memory for tpu_custom_call.1']
    #allocation8 [shape = 's32[2]{0}', space=sflag, size = 0x8, scoped, tag = 'scoped memory for tpu_custom_call.1']
    #allocation9 [shape = 'u8[8192]{0}', space=vmem, size = 0x2000, scoped, tag = 'input window, operand 2']
    #allocation10 [shape = 's32[2]{0}', space=sflag, size = 0x8, scoped, tag = 'scoped memory for tpu_custom_call.1']
    #allocation11 [shape = 'u8[16384]{0}', space=vmem, size = 0x4000, scoped, tag = 'input window, operand 3, single buffered']
    #allocation12 [shape = 'u8[16384]{0}', space=vmem, size = 0x4000, scoped, tag = 'input window, operand 4, single buffered']
    #allocation13 [shape = 's32[1]{0}', space=sflag, size = 0x4, scoped, tag = 'scoped memory for tpu_custom_call.1']
    #allocation14 [shape = 'u8[8192]{0}', space=vmem, size = 0x2000, scoped, tag = 'input window, operand 6, single buffered']
    #allocation15 [shape = 'u8[8192]{0}', space=vmem, size = 0x2000, scoped, tag = 'output window, operand 0']
    #allocation16 [shape = 'u8[8192]{0}', space=vmem, size = 0x2000, scoped, tag = 'output window, operand 1']
    #allocation17 [shape = 's32[2]{0}', space=sflag, size = 0x8, scoped, tag = 'scoped memory for tpu_custom_call.1']
    #allocation18 [shape = 'u8[2048]{0}', space=vmem, size = 0x800, scoped, tag = 'output window, operand 2, single buffered']
    #allocation19 [shape = 'u8[2048]{0}', space=vmem, size = 0x800, scoped, tag = 'output window, operand 3, single buffered']
    #allocation20 [shape = 's32[1]{0}', space=sflag, size = 0x4, scoped, tag = 'scoped memory for tpu_custom_call.1']
    %18 = vsyncpa [#allocation7], 0
    %s19 = scalar_lea.sflag [#allocation7], 1
    %20 = vsyncpa %s19, 0
    %21 = vsyncpa [#allocation10], 0
    %s22 = scalar_lea.sflag [#allocation10], 1
    %23 = vsyncpa %s22, 0
    %24 = vsyncpa [#allocation13], 0
    %25 = vsyncpa [#allocation8], 0
    %s26 = scalar_lea.sflag [#allocation8], 1
    %27 = vsyncpa %s26, 0
    %28 = vsyncpa [#allocation17], 0
    %s29 = scalar_lea.sflag [#allocation17], 1
    %30 = vsyncpa %s29, 0
    %31 = vsyncpa [#allocation20], 0
    loop: start=0, step=1, limit=4
    $region2: #{tpu_custom_call.1} parent=1 // loop_pre_header
      _
    $region3: #{tpu_custom_call.1} parent=1 // loop_header
      %s33 = sphi 0, %s37
      %p34 = scmp.ge.s32.totalorder %s33, 4
      %s40 = sphi 0, %s52
      %s41 = sphi 0, %s48
      %s42 = sphi 0, %s40
      %s43 = sphi 0, %s41
      %s44 = sphi 0, %s42
      %s45 = sphi 0, %s43
      %s55 = sphi 0, %s57
      %s58 = sphi 0, %s55
      %s59 = sphi 0, %s58
      %s75 = sphi 0, %s59
      %s83 = sphi 0, %s85
      %s86 = sphi 0, %s83
      %s87 = sphi 0, %s86
      %s103 = sphi 0, %s87
      %s113 = sphi 0, %s115
      %s116 = sphi 0, %s113
      %s117 = sphi 0, %s116
      %s133 = sphi 0, %s117
      %s137 = sphi 0, %s137
      %s139 = sphi 0, %s137
      %s140 = sphi 0, %s139
      %s154 = sphi 0, %s140
      %s158 = sphi 0, %s158
      %s160 = sphi 0, %s158
      %s161 = sphi 0, %s160
      %s175 = sphi 0, %s161
      %s179 = sphi 0, %s179
      %s181 = sphi 0, %s179
      %s182 = sphi 0, %s181
      %s196 = sphi 0, %s182
      %s200 = sphi 0, %s200
      %s202 = sphi 0, %s200
      %s203 = sphi 0, %s202
      %s217 = sphi 0, %s203
      %s221 = sphi 0, %s221
      %s223 = sphi 0, %s221
      %s224 = sphi 0, %s223
      %s238 = sphi 0, %s224
      %s242 = sphi 0, %s242
      %s244 = sphi 0, %s242
      %s245 = sphi 0, %s244
      %s259 = sphi 0, %s245
      %s267 = sphi 0, %s269
      %s270 = sphi 0, %s267
      %s271 = sphi 0, %s270
      %s287 = sphi 0, %s271
      %s297 = sphi 0, %s299
      %s300 = sphi 0, %s297
      %s301 = sphi 0, %s300
      %s317 = sphi 0, %s301
      %s323 = sphi 0, %s325
      %s326 = sphi 0, %s323
      %s327 = sphi 0, %s326
      %s343 = sphi 0, %s327
      %s349 = sphi 0, %s351
      %s352 = sphi 0, %s349
      %s353 = sphi 0, %s352
      %s369 = sphi 0, %s353
    $region4: #{tpu_custom_call.1} parent=1 // loop_header_branch
      %36 = sbr.rel (%p34) target = $region8
    $region5: #{tpu_custom_call.1} parent=1 // loop_body
      %s38 = ssub.s32 %s33, 1
      %s39 = ssub.s32 %s33, 2
      %s46 = sadd.s32 1, %s41
      %p47 = scmp.ge.s32.totalorder %s46, 2
      %s48 = scalar_select %p47, 0, %s46
      %s49 = sadd.s32 1, %s40
      %s50 = scalar_select %p47, %s49, %s40
      %p51 = scmp.ge.s32.totalorder %s50, 1
      %s52 = scalar_select %p51, 0, %s50
      %s53 = ssub.s32 %s40, %s52
      %p54 = scmp.eq.s32.totalorder %s53, 0
      %s56 = sadd.s32 %s55, 1
      %s57 = scalar_select %p54, %s55, %s56
      %p60 = pneg %p54
      %p61 = scmp.eq.s32.totalorder %s33, 1
      %p62 = por %p60, %p61
      %p63 = scmp.ne.s32.totalorder %s55, %s58
      %p64 = scmp.eq.s32.totalorder %s33, 0
      %p65 = por %p63, %p64
      %p66 = scmp.ne.s32.totalorder %s55, %s58
      %p67 = scmp.eq.s32.totalorder %s38, 1
      %p68 = por %p66, %p67
      %p69 = scmp.ne.s32.totalorder %s58, %s59
      %p70 = scmp.eq.s32.totalorder %s38, 0
      %p71 = por %p69, %p70
      %p72 = scmp.ne.s32.totalorder %s58, %s59
      %p73 = scmp.eq.s32.totalorder %s39, 1
      %p74 = por %p72, %p73
      %p76 = scmp.ne.s32.totalorder %s59, %s75
      %p77 = scmp.eq.s32.totalorder %s39, 0
      %p78 = por %p76, %p77
      %s79 = ssub.s32 %s41, %s48
      %s80 = ssub.s32 %s40, %s52
      %s81 = sor.u32 %s79, %s80
      %p82 = scmp.eq.s32.totalorder %s81, 0
      %s84 = sadd.s32 %s83, 1
      %s85 = scalar_select %p82, %s83, %s84
      %p88 = pneg %p82
      %p89 = scmp.eq.s32.totalorder %s33, 1
      %p90 = por %p88, %p89
      %p91 = scmp.ne.s32.totalorder %s83, %s86
      %p92 = scmp.eq.s32.totalorder %s33, 0
      %p93 = por %p91, %p92
      %p94 = scmp.ne.s32.totalorder %s83, %s86
      %p95 = scmp.eq.s32.totalorder %s38, 1
      %p96 = por %p94, %p95
      %p97 = scmp.ne.s32.totalorder %s86, %s87
      %p98 = scmp.eq.s32.totalorder %s38, 0
      %p99 = por %p97, %p98
      %p100 = scmp.ne.s32.totalorder %s86, %s87
      %p101 = scmp.eq.s32.totalorder %s39, 1
      %p102 = por %p100, %p101
      %p104 = scmp.ne.s32.totalorder %s87, %s103
      %p105 = scmp.eq.s32.totalorder %s39, 0
      %p106 = por %p104, %p105
      %s107 = ssub.s32 1, %s41
      %s108 = ssub.s32 1, %s48
      %s109 = ssub.s32 %s107, %s108
      %s110 = ssub.s32 %s40, %s52
      %s111 = sor.u32 %s109, %s110
      %p112 = scmp.eq.s32.totalorder %s111, 0
      %s114 = sadd.s32 %s113, 1
      %s115 = scalar_select %p112, %s113, %s114
      %p118 = pneg %p112
      %p119 = scmp.eq.s32.totalorder %s33, 1
      %p120 = por %p118, %p119
      %p121 = scmp.ne.s32.totalorder %s113, %s116
      %p122 = scmp.eq.s32.totalorder %s33, 0
      %p123 = por %p121, %p122
      %p124 = scmp.ne.s32.totalorder %s113, %s116
      %p125 = scmp.eq.s32.totalorder %s38, 1
      %p126 = por %p124, %p125
      %p127 = scmp.ne.s32.totalorder %s116, %s117
      %p128 = scmp.eq.s32.totalorder %s38, 0
      %p129 = por %p127, %p128
      %p130 = scmp.ne.s32.totalorder %s116, %s117
      %p131 = scmp.eq.s32.totalorder %s39, 1
      %p132 = por %p130, %p131
      %p134 = scmp.ne.s32.totalorder %s117, %s133
      %p135 = scmp.eq.s32.totalorder %s39, 0
      %p136 = por %p134, %p135
      %s138 = sadd.s32 %s137, 1
      %p141 = scmp.eq.s32.totalorder %s33, 1
      %p142 = scmp.ne.s32.totalorder %s137, %s139
      %p143 = scmp.eq.s32.totalorder %s33, 0
      %p144 = por %p142, %p143
      %p145 = scmp.ne.s32.totalorder %s137, %s139
      %p146 = scmp.eq.s32.totalorder %s38, 1
      %p147 = por %p145, %p146
      %p148 = scmp.ne.s32.totalorder %s139, %s140
      %p149 = scmp.eq.s32.totalorder %s38, 0
      %p150 = por %p148, %p149
      %p151 = scmp.ne.s32.totalorder %s139, %s140
      %p152 = scmp.eq.s32.totalorder %s39, 1
      %p153 = por %p151, %p152
      %p155 = scmp.ne.s32.totalorder %s140, %s154
      %p156 = scmp.eq.s32.totalorder %s39, 0
      %p157 = por %p155, %p156
      %s159 = sadd.s32 %s158, 1
      %p162 = scmp.eq.s32.totalorder %s33, 1
      %p163 = scmp.ne.s32.totalorder %s158, %s160
      %p164 = scmp.eq.s32.totalorder %s33, 0
      %p165 = por %p163, %p164
      %p166 = scmp.ne.s32.totalorder %s158, %s160
      %p167 = scmp.eq.s32.totalorder %s38, 1
      %p168 = por %p166, %p167
      %p169 = scmp.ne.s32.totalorder %s160, %s161
      %p170 = scmp.eq.s32.totalorder %s38, 0
      %p171 = por %p169, %p170
      %p172 = scmp.ne.s32.totalorder %s160, %s161
      %p173 = scmp.eq.s32.totalorder %s39, 1
      %p174 = por %p172, %p173
      %p176 = scmp.ne.s32.totalorder %s161, %s175
      %p177 = scmp.eq.s32.totalorder %s39, 0
      %p178 = por %p176, %p177
      %s180 = sadd.s32 %s179, 1
      %p183 = scmp.eq.s32.totalorder %s33, 1
      %p184 = scmp.ne.s32.totalorder %s179, %s181
      %p185 = scmp.eq.s32.totalorder %s33, 0
      %p186 = por %p184, %p185
      %p187 = scmp.ne.s32.totalorder %s179, %s181
      %p188 = scmp.eq.s32.totalorder %s38, 1
      %p189 = por %p187, %p188
      %p190 = scmp.ne.s32.totalorder %s181, %s182
      %p191 = scmp.eq.s32.totalorder %s38, 0
      %p192 = por %p190, %p191
      %p193 = scmp.ne.s32.totalorder %s181, %s182
      %p194 = scmp.eq.s32.totalorder %s39, 1
      %p195 = por %p193, %p194
      %p197 = scmp.ne.s32.totalorder %s182, %s196
      %p198 = scmp.eq.s32.totalorder %s39, 0
      %p199 = por %p197, %p198
      %s201 = sadd.s32 %s200, 1
      %p204 = scmp.eq.s32.totalorder %s33, 1
      %p205 = scmp.ne.s32.totalorder %s200, %s202
      %p206 = scmp.eq.s32.totalorder %s33, 0
      %p207 = por %p205, %p206
      %p208 = scmp.ne.s32.totalorder %s200, %s202
      %p209 = scmp.eq.s32.totalorder %s38, 1
      %p210 = por %p208, %p209
      %p211 = scmp.ne.s32.totalorder %s202, %s203
      %p212 = scmp.eq.s32.totalorder %s38, 0
      %p213 = por %p211, %p212
      %p214 = scmp.ne.s32.totalorder %s202, %s203
      %p215 = scmp.eq.s32.totalorder %s39, 1
      %p216 = por %p214, %p215
      %p218 = scmp.ne.s32.totalorder %s203, %s217
      %p219 = scmp.eq.s32.totalorder %s39, 0
      %p220 = por %p218, %p219
      %s222 = sadd.s32 %s221, 1
      %p225 = scmp.eq.s32.totalorder %s33, 1
      %p226 = scmp.ne.s32.totalorder %s221, %s223
      %p227 = scmp.eq.s32.totalorder %s33, 0
      %p228 = por %p226, %p227
      %p229 = scmp.ne.s32.totalorder %s221, %s223
      %p230 = scmp.eq.s32.totalorder %s38, 1
      %p231 = por %p229, %p230
      %p232 = scmp.ne.s32.totalorder %s223, %s224
      %p233 = scmp.eq.s32.totalorder %s38, 0
      %p234 = por %p232, %p233
      %p235 = scmp.ne.s32.totalorder %s223, %s224
      %p236 = scmp.eq.s32.totalorder %s39, 1
      %p237 = por %p235, %p236
      %p239 = scmp.ne.s32.totalorder %s224, %s238
      %p240 = scmp.eq.s32.totalorder %s39, 0
      %p241 = por %p239, %p240
      %s243 = sadd.s32 %s242, 1
      %p246 = scmp.eq.s32.totalorder %s33, 1
      %p247 = scmp.ne.s32.totalorder %s242, %s244
      %p248 = scmp.eq.s32.totalorder %s33, 0
      %p249 = por %p247, %p248
      %p250 = scmp.ne.s32.totalorder %s242, %s244
      %p251 = scmp.eq.s32.totalorder %s38, 1
      %p252 = por %p250, %p251
      %p253 = scmp.ne.s32.totalorder %s244, %s245
      %p254 = scmp.eq.s32.totalorder %s38, 0
      %p255 = por %p253, %p254
      %p256 = scmp.ne.s32.totalorder %s244, %s245
      %p257 = scmp.eq.s32.totalorder %s39, 1
      %p258 = por %p256, %p257
      %p260 = scmp.ne.s32.totalorder %s245, %s259
      %p261 = scmp.eq.s32.totalorder %s39, 0
      %p262 = por %p260, %p261
      %s263 = ssub.s32 %s41, %s48
      %s264 = ssub.s32 %s40, %s52
      %s265 = sor.u32 %s263, %s264
      %p266 = scmp.eq.s32.totalorder %s265, 0
      %s268 = sadd.s32 %s267, 1
      %s269 = scalar_select %p266, %s267, %s268
      %p272 = pneg %p266
      %p273 = scmp.eq.s32.totalorder %s33, 1
      %p274 = por %p272, %p273
      %p275 = scmp.ne.s32.totalorder %s267, %s270
      %p276 = scmp.eq.s32.totalorder %s33, 0
      %p277 = por %p275, %p276
      %p278 = scmp.ne.s32.totalorder %s267, %s270
      %p279 = scmp.eq.s32.totalorder %s38, 1
      %p280 = por %p278, %p279
      %p281 = scmp.ne.s32.totalorder %s270, %s271
      %p282 = scmp.eq.s32.totalorder %s38, 0
      %p283 = por %p281, %p282
      %p284 = scmp.ne.s32.totalorder %s270, %s271
      %p285 = scmp.eq.s32.totalorder %s39, 1
      %p286 = por %p284, %p285
      %p288 = scmp.ne.s32.totalorder %s271, %s287
      %p289 = scmp.eq.s32.totalorder %s39, 0
      %p290 = por %p288, %p289
      %s291 = ssub.s32 1, %s41
      %s292 = ssub.s32 1, %s48
      %s293 = ssub.s32 %s291, %s292
      %s294 = ssub.s32 %s40, %s52
      %s295 = sor.u32 %s293, %s294
      %p296 = scmp.eq.s32.totalorder %s295, 0
      %s298 = sadd.s32 %s297, 1
      %s299 = scalar_select %p296, %s297, %s298
      %p302 = pneg %p296
      %p303 = scmp.eq.s32.totalorder %s33, 1
      %p304 = por %p302, %p303
      %p305 = scmp.ne.s32.totalorder %s297, %s300
      %p306 = scmp.eq.s32.totalorder %s33, 0
      %p307 = por %p305, %p306
      %p308 = scmp.ne.s32.totalorder %s297, %s300
      %p309 = scmp.eq.s32.totalorder %s38, 1
      %p310 = por %p308, %p309
      %p311 = scmp.ne.s32.totalorder %s300, %s301
      %p312 = scmp.eq.s32.totalorder %s38, 0
      %p313 = por %p311, %p312
      %p314 = scmp.ne.s32.totalorder %s300, %s301
      %p315 = scmp.eq.s32.totalorder %s39, 1
      %p316 = por %p314, %p315
      %p318 = scmp.ne.s32.totalorder %s301, %s317
      %p319 = scmp.eq.s32.totalorder %s39, 0
      %p320 = por %p318, %p319
      %s321 = ssub.s32 %s40, %s52
      %p322 = scmp.eq.s32.totalorder %s321, 0
      %s324 = sadd.s32 %s323, 1
      %s325 = scalar_select %p322, %s323, %s324
      %p328 = pneg %p322
      %p329 = scmp.eq.s32.totalorder %s33, 1
      %p330 = por %p328, %p329
      %p331 = scmp.ne.s32.totalorder %s323, %s326
      %p332 = scmp.eq.s32.totalorder %s33, 0
      %p333 = por %p331, %p332
      %p334 = scmp.ne.s32.totalorder %s323, %s326
      %p335 = scmp.eq.s32.totalorder %s38, 1
      %p336 = por %p334, %p335
      %p337 = scmp.ne.s32.totalorder %s326, %s327
      %p338 = scmp.eq.s32.totalorder %s38, 0
      %p339 = por %p337, %p338
      %p340 = scmp.ne.s32.totalorder %s326, %s327
      %p341 = scmp.eq.s32.totalorder %s39, 1
      %p342 = por %p340, %p341
      %p344 = scmp.ne.s32.totalorder %s327, %s343
      %p345 = scmp.eq.s32.totalorder %s39, 0
      %p346 = por %p344, %p345
      %s347 = ssub.s32 %s40, %s52
      %p348 = scmp.eq.s32.totalorder %s347, 0
      %s350 = sadd.s32 %s349, 1
      %s351 = scalar_select %p348, %s349, %s350
      %p354 = pneg %p348
      %p355 = scmp.eq.s32.totalorder %s33, 1
      %p356 = por %p354, %p355
      %p357 = scmp.ne.s32.totalorder %s349, %s352
      %p358 = scmp.eq.s32.totalorder %s33, 0
      %p359 = por %p357, %p358
      %p360 = scmp.ne.s32.totalorder %s349, %s352
      %p361 = scmp.eq.s32.totalorder %s38, 1
      %p362 = por %p360, %p361
      %p363 = scmp.ne.s32.totalorder %s352, %s353
      %p364 = scmp.eq.s32.totalorder %s38, 0
      %p365 = por %p363, %p364
      %p366 = scmp.ne.s32.totalorder %s352, %s353
      %p367 = scmp.eq.s32.totalorder %s39, 1
      %p368 = por %p366, %p367
      %p370 = scmp.ne.s32.totalorder %s353, %s369
      %p371 = scmp.eq.s32.totalorder %s39, 0
      %p372 = por %p370, %p371
      %p373 = scmp.le.s32.totalorder 1, %s33
      %p374 = scmp.lt.s32.totalorder %s33, 3
      %p375 = pnand %p373, %p374
      %p376 = pneg %p375
      // Predicated region
      $region9: #{tpu_custom_call.1} parent=5 // pred_check
        _
      $region10: #{tpu_custom_call.1} parent=5 // pred_check_branch
        %378 = sbr.rel (%p375) target = $region12
      $region11: #{tpu_custom_call.1} parent=5 // pred_region
        %s379 = ssub.s32 %s33, 1
        // Predicated region
        $region13: #{tpu_custom_call.1} parent=11 // pred_check
          %p380 = pneg %p71
        $region14: #{tpu_custom_call.1} parent=11 // pred_check_branch
          %382 = sbr.rel (%p380) target = $region16
        $region15: #{tpu_custom_call.1} parent=11 // pred_region
          %p383 = scmp.lt.s32.totalorder %s42, 0
          %s384 = scalar_select %p383, %s42, 0
          %s385 = smul.addr %s384, 2
          %s386 = scalar_lea.vmem %s0, %s385
        $region16: #{tpu_custom_call.1} parent=11 // pred_fallthru
          _
        // Predicated region
        $region17: #{tpu_custom_call.1} parent=11 // pred_check
          %p387 = pneg %p150
        $region18: #{tpu_custom_call.1} parent=11 // pred_check_branch
          %389 = sbr.rel (%p387) target = $region20
        $region19: #{tpu_custom_call.1} parent=11 // pred_region
          %s391 = ssub.s32 512, 512
          %392 = vsyncadd [#allocation10], %s391
          %s393 = sshll.u32 [#allocation11], 4
          %s394 = int_to_ptr.vmem [resolvable:$true] %s393
          %399 = dma.hbm_to_vmem [thread:$0]  %s3, 512, %s394, [#allocation10], 128, 128, 8
        $region20: #{tpu_custom_call.1} parent=11 // pred_fallthru
          _
        // Predicated region
        $region21: #{tpu_custom_call.1} parent=11 // pred_check
          %p400 = pneg %p171
        $region22: #{tpu_custom_call.1} parent=11 // pred_check_branch
          %402 = sbr.rel (%p400) target = $region24
        $region23: #{tpu_custom_call.1} parent=11 // pred_region
          %s404 = ssub.s32 512, 512
          %405 = vsyncadd [#allocation13], %s404
          %s406 = sshll.u32 [#allocation12], 4
          %s407 = int_to_ptr.vmem [resolvable:$true] %s406
          %412 = dma.hbm_to_vmem [thread:$0]  %s4, 512, %s407, [#allocation13], 128, 128, 8
        $region24: #{tpu_custom_call.1} parent=11 // pred_fallthru
          _
        // Predicated region
        $region25: #{tpu_custom_call.1} parent=11 // pred_check
          %p413 = pneg %p192
        $region26: #{tpu_custom_call.1} parent=11 // pred_check_branch
          %415 = sbr.rel (%p413) target = $region28
        $region27: #{tpu_custom_call.1} parent=11 // pred_region
          _
        $region28: #{tpu_custom_call.1} parent=11 // pred_fallthru
          _
        // Predicated region
        $region29: #{tpu_custom_call.1} parent=11 // pred_check
          %p416 = pneg %p213
        $region30: #{tpu_custom_call.1} parent=11 // pred_check_branch
          %418 = sbr.rel (%p416) target = $region32
        $region31: #{tpu_custom_call.1} parent=11 // pred_region
          %s420 = ssub.s32 256, 256
          %421 = vsyncadd [#allocation13], %s420
          %s422 = sshll.u32 [#allocation14], 4
          %s423 = int_to_ptr.vmem [resolvable:$true] %s422
          %428 = dma.hbm_to_vmem [thread:$0]  %s6, 256, %s423, [#allocation13], 128, 128, 8
        $region32: #{tpu_custom_call.1} parent=11 // pred_fallthru
          _
        // Predicated region
        $region33: #{tpu_custom_call.1} parent=11 // pred_check
          %p429 = pneg %p234
        $region34: #{tpu_custom_call.1} parent=11 // pred_check_branch
          %431 = sbr.rel (%p429) target = $region36
        $region35: #{tpu_custom_call.1} parent=11 // pred_region
          _
        $region36: #{tpu_custom_call.1} parent=11 // pred_fallthru
          _
        // Predicated region
        $region37: #{tpu_custom_call.1} parent=11 // pred_check
          %p432 = pneg %p255
        $region38: #{tpu_custom_call.1} parent=11 // pred_check_branch
          %434 = sbr.rel (%p432) target = $region40
        $region39: #{tpu_custom_call.1} parent=11 // pred_region
          _
        $region40: #{tpu_custom_call.1} parent=11 // pred_fallthru
          _
      $region12: #{tpu_custom_call.1} parent=5 // pred_fallthru
        _
      %p435 = scmp.lt.s32.totalorder %s33, 2
      // Predicated region
      $region41: #{tpu_custom_call.1} parent=5 // pred_check
        %p436 = pneg %p435
      $region42: #{tpu_custom_call.1} parent=5 // pred_check_branch
        %438 = sbr.rel (%p436) target = $region44
      $region43: #{tpu_custom_call.1} parent=5 // pred_region
        // Predicated region
        $region45: #{tpu_custom_call.1} parent=43 // pred_check
          %p439 = pneg %p93
        $region46: #{tpu_custom_call.1} parent=43 // pred_check_branch
          %441 = sbr.rel (%p439) target = $region48
        $region47: #{tpu_custom_call.1} parent=43 // pred_region
          %s442 = sand.u32 %s83, 1
          %s443 = scalar_lea.sflag [#allocation7], %s442
          %s444 = sand.u32 %s83, 1
          %s445 = smul.addr %s444, 8
          %s446 = scalar_lea.vmem [#allocation6], %s445
          %s447 = smul.u32 4, %s41
          %s449 = ssub.s32 128, 128
          %450 = vsyncadd %s443, %s449
          %s451 = sadd.s32 %s40, %s447
          %s452 = smul.addr %s451, 32
          %s453 = scalar_lea.hbm %s1, %s452
          %s454 = sshll.u32 %s446, 4
          %s455 = int_to_ptr.vmem [resolvable:$true] %s454
          %460 = dma.hbm_to_vmem [thread:$0]  %s453, 128, %s455, %s443, 32, 32, 2
        $region48: #{tpu_custom_call.1} parent=43 // pred_fallthru
          _
        // Predicated region
        $region49: #{tpu_custom_call.1} parent=43 // pred_check
          %p461 = pneg %p123
        $region50: #{tpu_custom_call.1} parent=43 // pred_check_branch
          %463 = sbr.rel (%p461) target = $region52
        $region51: #{tpu_custom_call.1} parent=43 // pred_region
          %s464 = sand.u32 %s33, 1
          %s465 = scalar_lea.sflag [#allocation10], %s464
          %s466 = sand.u32 %s113, 1
          %s467 = smul.addr %s466, 8
          %s468 = scalar_lea.vmem [#allocation9], %s467
          %s469 = ssub.s32 1, %s41
          %s470 = smul.u32 4, %s469
          %s472 = ssub.s32 128, 128
          %473 = vsyncadd %s465, %s472
          %s474 = sadd.s32 %s40, %s470
          %s475 = smul.addr %s474, 32
          %s476 = scalar_lea.hbm %s2, %s475
          %s477 = sshll.u32 %s468, 4
          %s478 = int_to_ptr.vmem [resolvable:$true] %s477
          %483 = dma.hbm_to_vmem [thread:$0]  %s476, 128, %s478, %s465, 32, 32, 2
        $region52: #{tpu_custom_call.1} parent=43 // pred_fallthru
          _
      $region44: #{tpu_custom_call.1} parent=5 // pred_fallthru
        _
      %p484 = scmp.le.s32.totalorder 1, %s33
      %p485 = scmp.lt.s32.totalorder %s33, 3
      %p486 = pnand %p484, %p485
      %p487 = pneg %p486
      // Predicated region
      $region53: #{tpu_custom_call.1} parent=5 // pred_check
        _
      $region54: #{tpu_custom_call.1} parent=5 // pred_check_branch
        %489 = sbr.rel (%p486) target = $region56
      $region55: #{tpu_custom_call.1} parent=5 // pred_region
        %s490 = ssub.s32 %s33, 1
        %s491 = sand.u32 %s86, 1
        %s492 = scalar_lea.sflag [#allocation7], %s491
        %s493 = sand.u32 %s86, 1
        %s494 = smul.addr %s493, 8
        %s495 = scalar_lea.vmem [#allocation6], %s494
        // Predicated region
        $region57: #{tpu_custom_call.1} parent=55 // pred_check
          %p496 = pneg %p99
        $region58: #{tpu_custom_call.1} parent=55 // pred_check_branch
          %498 = sbr.rel (%p496) target = $region60
        $region59: #{tpu_custom_call.1} parent=55 // pred_region
          %499 = dma.done %s492, 128
        $region60: #{tpu_custom_call.1} parent=55 // pred_fallthru
          _
        %s500 = sand.u32 %s38, 1
        %s501 = scalar_lea.sflag [#allocation10], %s500
        %s502 = sand.u32 %s116, 1
        %s503 = smul.addr %s502, 8
        %s504 = scalar_lea.vmem [#allocation9], %s503
        // Predicated region
        $region61: #{tpu_custom_call.1} parent=55 // pred_check
          %p505 = pneg %p129
        $region62: #{tpu_custom_call.1} parent=55 // pred_check_branch
          %507 = sbr.rel (%p505) target = $region64
        $region63: #{tpu_custom_call.1} parent=55 // pred_region
          %508 = dma.done %s501, 128
        $region64: #{tpu_custom_call.1} parent=55 // pred_fallthru
          _
        // Predicated region
        $region65: #{tpu_custom_call.1} parent=55 // pred_check
          %p509 = pneg %p150
        $region66: #{tpu_custom_call.1} parent=55 // pred_check_branch
          %511 = sbr.rel (%p509) target = $region68
        $region67: #{tpu_custom_call.1} parent=55 // pred_region
          %512 = dma.done [#allocation10], 512
        $region68: #{tpu_custom_call.1} parent=55 // pred_fallthru
          _
        // Predicated region
        $region69: #{tpu_custom_call.1} parent=55 // pred_check
          %p513 = pneg %p171
        $region70: #{tpu_custom_call.1} parent=55 // pred_check_branch
          %515 = sbr.rel (%p513) target = $region72
        $region71: #{tpu_custom_call.1} parent=55 // pred_region
          %516 = dma.done [#allocation13], 512
        $region72: #{tpu_custom_call.1} parent=55 // pred_fallthru
          _
        // Predicated region
        $region73: #{tpu_custom_call.1} parent=55 // pred_check
          %p517 = pneg %p213
        $region74: #{tpu_custom_call.1} parent=55 // pred_check_branch
          %519 = sbr.rel (%p517) target = $region76
        $region75: #{tpu_custom_call.1} parent=55 // pred_region
          %520 = dma.done [#allocation13], 256
        $region76: #{tpu_custom_call.1} parent=55 // pred_fallthru
          _
        %p521 = scmp.lt.s32.totalorder %s42, 0
        %s522 = scalar_select %p521, %s42, 0
        %s523 = smul.addr %s522, 2
        %s524 = scalar_lea.vmem %s0, %s523
        %p525 = pneg %p71
        %p526 = pneg %p68
        %s527 = sand.u32 %s86, 1
        %s528 = scalar_lea.sflag [#allocation7], %s527
        %s529 = sand.u32 %s86, 1
        %s530 = smul.addr %s529, 8
        %s531 = scalar_lea.vmem [#allocation6], %s530
        %p532 = pneg %p99
        %p533 = pneg %p96
        %s534 = sand.u32 %s38, 1
        %s535 = scalar_lea.sflag [#allocation10], %s534
        %s536 = sand.u32 %s116, 1
        %s537 = smul.addr %s536, 8
        %s538 = scalar_lea.vmem [#allocation9], %s537
        %p539 = pneg %p129
        %p540 = pneg %p126
        %p541 = pneg %p150
        %p542 = pneg %p147
        %p543 = pneg %p171
        %p544 = pneg %p168
        %p545 = pneg %p192
        %p546 = pneg %p189
        %p547 = pneg %p213
        %p548 = pneg %p210
        %p549 = pneg %p234
        %p550 = pneg %p231
        %p551 = pneg %p255
        %p552 = pneg %p252
        %p553 = pneg %p283
        %p554 = pneg %p280
        %s555 = sand.u32 %s270, 1
        %s556 = scalar_lea.sflag [#allocation8], %s555
        %s557 = sand.u32 %s270, 1
        %s558 = smul.addr %s557, 8
        %s559 = scalar_lea.vmem [#allocation15], %s558
        %p560 = pneg %p313
        %p561 = pneg %p310
        %s562 = sand.u32 %s38, 1
        %s563 = scalar_lea.sflag [#allocation17], %s562
        %s564 = sand.u32 %s300, 1
        %s565 = smul.addr %s564, 8
        %s566 = scalar_lea.vmem [#allocation16], %s565
        %p567 = pneg %p339
        %p568 = pneg %p336
        %p569 = pneg %p365
        %p570 = pneg %p362
        %p571 = scmp.lt.s32.totalorder %s42, 0
        %s572 = scalar_select %p571, %s42, 0
        %s573 = smul.addr %s572, 2
        %s574 = scalar_lea.vmem %s0, %s573
        %s575 = smul.u32 4, %s43
        %s576 = ssub.s32 1, %s43
        %s577 = smul.u32 4, %s576
        %s578 = smul.u32 4, %s43
        %s579 = ssub.s32 1, %s43
        %s580 = smul.u32 4, %s579
        %p581 = scmp.eq.s32.totalorder %s43, 0
        // Predicated region
        $region77: #{tpu_custom_call.1} parent=55 // pred_check
          %p582 = pneg %p581
        $region78: #{tpu_custom_call.1} parent=55 // pred_check_branch
          %584 = sbr.rel (%p582) target = $region80
        $region79: #{tpu_custom_call.1} parent=55 // pred_region
          %vm585 = vcmask 123904
          %586 = vst.msk [vmem:[#allocation4] sm:$0x3] %vm585, 0.0
          %587 = vst.msk [vmem:[#allocation4 + $0x2] sm:$0x3] %vm585, 0.0
          %588 = vst.msk [vmem:[#allocation5] sm:$0x3] %vm585, 0.0
          %589 = vst.msk [vmem:[#allocation5 + $0x2] sm:$0x3] %vm585, 0.0
        $region80: #{tpu_custom_call.1} parent=55 // pred_fallthru
          _
        %v590 = vld [vmem:[#allocation11] sm:$0xff]
        %v591 = vld [vmem:[#allocation11 + $0x8] sm:$0xff]
        %v592 = vld [vmem:[#allocation11 + $0x10] sm:$0xff]
        %v593 = vld [vmem:[#allocation11 + $0x18] sm:$0xff]
        %v594 = vld [vmem:[#allocation12] sm:$0xff]
        %v595 = vld [vmem:[#allocation12 + $0x8] sm:$0xff]
        %v596 = vld [vmem:[#allocation12 + $0x10] sm:$0xff]
        %v597 = vld [vmem:[#allocation12 + $0x18] sm:$0xff]
        %v598 = vld [vmem:[%s7] sm:$0x1]
        %v599 = vld [vmem:[%s8] sm:$0x1]
        %v600 = vld [vmem:[%s495] sm:$0x3]
        %vm601 = vcmask 261120
        %v603 = vsel %vm601, %v600, 0
        %605 = vmatprep.subr.mxu0 0.0
        %606 = vmatpush1.msra.mxu0 %v590
        %607 = vmatprep.subr.mxu0 0.0
        %608 = vmatpush1.msra.mxu0 %v591
        %609 = vmatprep.subr.mxu0 0.0
        %610 = vmatpush1.msra.mxu0 %v592
        %611 = vmatprep.subr.mxu0 0.0
        %612 = vmatpush1.msra.mxu0 %v593
        %613 = vmatprep.subr.mxu0 0.0
        %614 = vmatpush1.msra.mxu0 0.0
        %615 = vmatprep.subr.mxu0 0.0
        %616 = vmatpush1.msra.mxu0 0.0
        %617 = vmatprep.subr.mxu0 0.0
        %618 = vmatpush1.msra.mxu0 0.0
        %619 = vmatprep.subr.mxu0 0.0
        %620 = vmatpush1.msra.mxu0 0.0
        %621 = vmatprep.subr.mxu0 0.0
        %622 = vmatpush1.msra.mxu0 0.0
        %623 = vmatprep.subr.mxu0 0.0
        %624 = vmatpush1.msra.mxu0 0.0
        %625 = vmatprep.subr.mxu0 0.0
        %626 = vmatpush1.msra.mxu0 0.0
        %627 = vmatprep.subr.mxu0 0.0
        %628 = vmatpush1.msra.mxu0 0.0
        %629 = vmatprep.subr.mxu0 0.0
        %630 = vmatpush1.msra.mxu0 0.0
        %631 = vmatprep.subr.mxu0 0.0
        %632 = vmatpush1.msra.mxu0 0.0
        %633 = vmatprep.subr.mxu0 0.0
        %634 = vmatpush1.msra.mxu0 0.0
        %635 = vmatprep.subr.mxu0 0.0
        %636 = vmatpush1.msra.mxu0 0.0
        %637 = vmatprep.subr.mxu0 0.0
        %638 = vmatpush1.msra.mxu0 0.0
        %639 = vmatprep.subr.mxu0 0.0
        %640 = vmatpush1.msra.mxu0 0.0
        %641 = vmatprep.subr.mxu0 0.0
        %642 = vmatpush1.msra.mxu0 0.0
        %643 = vmatprep.subr.mxu0 0.0
        %644 = vmatpush1.msra.mxu0 0.0
        %645 = vmatprep.subr.mxu0 0.0
        %646 = vmatpush1.msra.mxu0 0.0
        %647 = vmatprep.subr.mxu0 0.0
        %648 = vmatpush1.msra.mxu0 0.0
        %649 = vmatprep.subr.mxu0 0.0
        %650 = vmatpush1.msra.mxu0 0.0
        %651 = vmatprep.subr.mxu0 0.0
        %652 = vmatpush1.msra.mxu0 0.0
        %653 = vmatprep.subr.mxu0 0.0
        %654 = vmatpush1.msra.mxu0 0.0
        %655 = vmatprep.subr.mxu0 0.0
        %656 = vmatpush1.msra.mxu0 0.0
        %657 = vmatprep.subr.mxu0 0.0
        %658 = vmatpush1.msra.mxu0 0.0
        %659 = vmatprep.subr.mxu0 0.0
        %660 = vmatpush1.msra.mxu0 0.0
        %661 = vmatprep.subr.mxu0 0.0
        %662 = vmatpush1.msra.mxu0 0.0
        %663 = vmatprep.subr.mxu0 0.0
        %664 = vmatpush1.msra.mxu0 0.0
        %665 = vmatprep.subr.mxu0 0.0
        %666 = vmatpush1.msra.mxu0 0.0
        %667 = vmatprep.subr.mxu0 0.0
        %668 = vmatpush1.msra.mxu0 0.0
        %669 = vmatprep.mubr.f32.mxu0 0.0
        %670 = vmatmul.mubr.f32.gmra.mrb[0].mxu0 %v603
        %v671 = vpop.f32.mrb[0].mxu0
        %v672 = vadd.f32 0.0, %v671
        %v673 = vpop.f32.mrb[0].mxu0
        %674 = vdwg.mxu0
        %v676 = vlaneseq
        %v677 = vshrl.u32 %v676, 7
        %v678 = vsub.s32 0, %v677
        %v679 = vrot.slane %v598, %v678
        %v681 = vadd.f32 %v679, %v672
        %v682 = vld [vmem:[%s504] sm:$0x3]
        %v684 = vsel %vm601, %v682, 0
        %686 = vmatprep.subr.mxu0 0.0
        %687 = vmatpush1.msra.mxu0 %v594
        %688 = vmatprep.subr.mxu0 0.0
        %689 = vmatpush1.msra.mxu0 %v595
        %690 = vmatprep.subr.mxu0 0.0
        %691 = vmatpush1.msra.mxu0 %v596
        %692 = vmatprep.subr.mxu0 0.0
        %693 = vmatpush1.msra.mxu0 %v597
        %694 = vmatprep.subr.mxu0 0.0
        %695 = vmatpush1.msra.mxu0 0.0
        %696 = vmatprep.subr.mxu0 0.0
        %697 = vmatpush1.msra.mxu0 0.0
        %698 = vmatprep.subr.mxu0 0.0
        %699 = vmatpush1.msra.mxu0 0.0
        %700 = vmatprep.subr.mxu0 0.0
        %701 = vmatpush1.msra.mxu0 0.0
        %702 = vmatprep.subr.mxu0 0.0
        %703 = vmatpush1.msra.mxu0 0.0
        %704 = vmatprep.subr.mxu0 0.0
        %705 = vmatpush1.msra.mxu0 0.0
        %706 = vmatprep.subr.mxu0 0.0
        %707 = vmatpush1.msra.mxu0 0.0
        %708 = vmatprep.subr.mxu0 0.0
        %709 = vmatpush1.msra.mxu0 0.0
        %710 = vmatprep.subr.mxu0 0.0
        %711 = vmatpush1.msra.mxu0 0.0
        %712 = vmatprep.subr.mxu0 0.0
        %713 = vmatpush1.msra.mxu0 0.0
        %714 = vmatprep.subr.mxu0 0.0
        %715 = vmatpush1.msra.mxu0 0.0
        %716 = vmatprep.subr.mxu0 0.0
        %717 = vmatpush1.msra.mxu0 0.0
        %718 = vmatprep.subr.mxu0 0.0
        %719 = vmatpush1.msra.mxu0 0.0
        %720 = vmatprep.subr.mxu0 0.0
        %721 = vmatpush1.msra.mxu0 0.0
        %722 = vmatprep.subr.mxu0 0.0
        %723 = vmatpush1.msra.mxu0 0.0
        %724 = vmatprep.subr.mxu0 0.0
        %725 = vmatpush1.msra.mxu0 0.0
        %726 = vmatprep.subr.mxu0 0.0
        %727 = vmatpush1.msra.mxu0 0.0
        %728 = vmatprep.subr.mxu0 0.0
        %729 = vmatpush1.msra.mxu0 0.0
        %730 = vmatprep.subr.mxu0 0.0
        %731 = vmatpush1.msra.mxu0 0.0
        %732 = vmatprep.subr.mxu0 0.0
        %733 = vmatpush1.msra.mxu0 0.0
        %734 = vmatprep.subr.mxu0 0.0
        %735 = vmatpush1.msra.mxu0 0.0
        %736 = vmatprep.subr.mxu0 0.0
        %737 = vmatpush1.msra.mxu0 0.0
        %738 = vmatprep.subr.mxu0 0.0
        %739 = vmatpush1.msra.mxu0 0.0
        %740 = vmatprep.subr.mxu0 0.0
        %741 = vmatpush1.msra.mxu0 0.0
        %742 = vmatprep.subr.mxu0 0.0
        %743 = vmatpush1.msra.mxu0 0.0
        %744 = vmatprep.subr.mxu0 0.0
        %745 = vmatpush1.msra.mxu0 0.0
        %746 = vmatprep.subr.mxu0 0.0
        %747 = vmatpush1.msra.mxu0 0.0
        %748 = vmatprep.subr.mxu0 0.0
        %749 = vmatpush1.msra.mxu0 0.0
        %750 = vmatprep.mubr.f32.mxu0 0.0
        %751 = vmatmul.mubr.f32.gmra.mrb[0].mxu0 %v684
        %v752 = vpop.f32.mrb[0].mxu0
        %v753 = vadd.f32 0.0, %v752
        %v754 = vpop.f32.mrb[0].mxu0
        %755 = vdwg.mxu0
        %v757 = vlaneseq
        %v758 = vshrl.u32 %v757, 7
        %v759 = vsub.s32 0, %v758
        %v760 = vrot.slane %v599, %v759
        %v762 = vadd.f32 %v760, %v753
        %vm763 = vcmask 517120
        %764 = vst.msk [vmem:[#allocation2] sm:$0x3] %vm763, %v681
        %765 = vst.msk [vmem:[#allocation3] sm:$0x3] %vm763, %v762
        %s766 = scalar_lea.vmem %s495, 2 [#allocation6]
        %v767 = vld [vmem:[%s766] sm:$0x3]
        %v769 = vsel %vm601, %v767, 0
        %771 = vmatprep.subr.mxu0 0.0
        %772 = vmatpush1.msra.mxu0 %v590
        %773 = vmatprep.subr.mxu0 0.0
        %774 = vmatpush1.msra.mxu0 %v591
        %775 = vmatprep.subr.mxu0 0.0
        %776 = vmatpush1.msra.mxu0 %v592
        %777 = vmatprep.subr.mxu0 0.0
        %778 = vmatpush1.msra.mxu0 %v593
        %779 = vmatprep.subr.mxu0 0.0
        %780 = vmatpush1.msra.mxu0 0.0
        %781 = vmatprep.subr.mxu0 0.0
        %782 = vmatpush1.msra.mxu0 0.0
        %783 = vmatprep.subr.mxu0 0.0
        %784 = vmatpush1.msra.mxu0 0.0
        %785 = vmatprep.subr.mxu0 0.0
        %786 = vmatpush1.msra.mxu0 0.0
        %787 = vmatprep.subr.mxu0 0.0
        %788 = vmatpush1.msra.mxu0 0.0
        %789 = vmatprep.subr.mxu0 0.0
        %790 = vmatpush1.msra.mxu0 0.0
        %791 = vmatprep.subr.mxu0 0.0
        %792 = vmatpush1.msra.mxu0 0.0
        %793 = vmatprep.subr.mxu0 0.0
        %794 = vmatpush1.msra.mxu0 0.0
        %795 = vmatprep.subr.mxu0 0.0
        %796 = vmatpush1.msra.mxu0 0.0
        %797 = vmatprep.subr.mxu0 0.0
        %798 = vmatpush1.msra.mxu0 0.0
        %799 = vmatprep.subr.mxu0 0.0
        %800 = vmatpush1.msra.mxu0 0.0
        %801 = vmatprep.subr.mxu0 0.0
        %802 = vmatpush1.msra.mxu0 0.0
        %803 = vmatprep.subr.mxu0 0.0
        %804 = vmatpush1.msra.mxu0 0.0
        %805 = vmatprep.subr.mxu0 0.0
        %806 = vmatpush1.msra.mxu0 0.0
        %807 = vmatprep.subr.mxu0 0.0
        %808 = vmatpush1.msra.mxu0 0.0
        %809 = vmatprep.subr.mxu0 0.0
        %810 = vmatpush1.msra.mxu0 0.0
        %811 = vmatprep.subr.mxu0 0.0
        %812 = vmatpush1.msra.mxu0 0.0
        %813 = vmatprep.subr.mxu0 0.0
        %814 = vmatpush1.msra.mxu0 0.0
        %815 = vmatprep.subr.mxu0 0.0
        %816 = vmatpush1.msra.mxu0 0.0
        %817 = vmatprep.subr.mxu0 0.0
        %818 = vmatpush1.msra.mxu0 0.0
        %819 = vmatprep.subr.mxu0 0.0
        %820 = vmatpush1.msra.mxu0 0.0
        %821 = vmatprep.subr.mxu0 0.0
        %822 = vmatpush1.msra.mxu0 0.0
        %823 = vmatprep.subr.mxu0 0.0
        %824 = vmatpush1.msra.mxu0 0.0
        %825 = vmatprep.subr.mxu0 0.0
        %826 = vmatpush1.msra.mxu0 0.0
        %827 = vmatprep.subr.mxu0 0.0
        %828 = vmatpush1.msra.mxu0 0.0
        %829 = vmatprep.subr.mxu0 0.0
        %830 = vmatpush1.msra.mxu0 0.0
        %831 = vmatprep.subr.mxu0 0.0
        %832 = vmatpush1.msra.mxu0 0.0
        %833 = vmatprep.subr.mxu0 0.0
        %834 = vmatpush1.msra.mxu0 0.0
        %835 = vmatprep.mubr.f32.mxu0 0.0
        %836 = vmatmul.mubr.f32.gmra.mrb[0].mxu0 %v769
        %v837 = vpop.f32.mrb[0].mxu0
        %v838 = vadd.f32 0.0, %v837
        %v839 = vpop.f32.mrb[0].mxu0
        %840 = vdwg.mxu0
        %v841 = vadd.f32 %v679, %v838
        %s842 = scalar_lea.vmem %s504, 2 [#allocation9]
        %v843 = vld [vmem:[%s842] sm:$0x3]
        %v845 = vsel %vm601, %v843, 0
        %847 = vmatprep.subr.mxu0 0.0
        %848 = vmatpush1.msra.mxu0 %v594
        %849 = vmatprep.subr.mxu0 0.0
        %850 = vmatpush1.msra.mxu0 %v595
        %851 = vmatprep.subr.mxu0 0.0
        %852 = vmatpush1.msra.mxu0 %v596
        %853 = vmatprep.subr.mxu0 0.0
        %854 = vmatpush1.msra.mxu0 %v597
        %855 = vmatprep.subr.mxu0 0.0
        %856 = vmatpush1.msra.mxu0 0.0
        %857 = vmatprep.subr.mxu0 0.0
        %858 = vmatpush1.msra.mxu0 0.0
        %859 = vmatprep.subr.mxu0 0.0
        %860 = vmatpush1.msra.mxu0 0.0
        %861 = vmatprep.subr.mxu0 0.0
        %862 = vmatpush1.msra.mxu0 0.0
        %863 = vmatprep.subr.mxu0 0.0
        %864 = vmatpush1.msra.mxu0 0.0
        %865 = vmatprep.subr.mxu0 0.0
        %866 = vmatpush1.msra.mxu0 0.0
        %867 = vmatprep.subr.mxu0 0.0
        %868 = vmatpush1.msra.mxu0 0.0
        %869 = vmatprep.subr.mxu0 0.0
        %870 = vmatpush1.msra.mxu0 0.0
        %871 = vmatprep.subr.mxu0 0.0
        %872 = vmatpush1.msra.mxu0 0.0
        %873 = vmatprep.subr.mxu0 0.0
        %874 = vmatpush1.msra.mxu0 0.0
        %875 = vmatprep.subr.mxu0 0.0
        %876 = vmatpush1.msra.mxu0 0.0
        %877 = vmatprep.subr.mxu0 0.0
        %878 = vmatpush1.msra.mxu0 0.0
        %879 = vmatprep.subr.mxu0 0.0
        %880 = vmatpush1.msra.mxu0 0.0
        %881 = vmatprep.subr.mxu0 0.0
        %882 = vmatpush1.msra.mxu0 0.0
        %883 = vmatprep.subr.mxu0 0.0
        %884 = vmatpush1.msra.mxu0 0.0
        %885 = vmatprep.subr.mxu0 0.0
        %886 = vmatpush1.msra.mxu0 0.0
        %887 = vmatprep.subr.mxu0 0.0
        %888 = vmatpush1.msra.mxu0 0.0
        %889 = vmatprep.subr.mxu0 0.0
        %890 = vmatpush1.msra.mxu0 0.0
        %891 = vmatprep.subr.mxu0 0.0
        %892 = vmatpush1.msra.mxu0 0.0
        %893 = vmatprep.subr.mxu0 0.0
        %894 = vmatpush1.msra.mxu0 0.0
        %895 = vmatprep.subr.mxu0 0.0
        %896 = vmatpush1.msra.mxu0 0.0
        %897 = vmatprep.subr.mxu0 0.0
        %898 = vmatpush1.msra.mxu0 0.0
        %899 = vmatprep.subr.mxu0 0.0
        %900 = vmatpush1.msra.mxu0 0.0
        %901 = vmatprep.subr.mxu0 0.0
        %902 = vmatpush1.msra.mxu0 0.0
        %903 = vmatprep.subr.mxu0 0.0
        %904 = vmatpush1.msra.mxu0 0.0
        %905 = vmatprep.subr.mxu0 0.0
        %906 = vmatpush1.msra.mxu0 0.0
        %907 = vmatprep.subr.mxu0 0.0
        %908 = vmatpush1.msra.mxu0 0.0
        %909 = vmatprep.subr.mxu0 0.0
        %910 = vmatpush1.msra.mxu0 0.0
        %911 = vmatprep.mubr.f32.mxu0 0.0
        %912 = vmatmul.mubr.f32.gmra.mrb[0].mxu0 %v845
        %v913 = vpop.f32.mrb[0].mxu0
        %v914 = vadd.f32 0.0, %v913
        %v915 = vpop.f32.mrb[0].mxu0
        %916 = vdwg.mxu0
        %v917 = vadd.f32 %v760, %v914
        %s918 = scalar_lea.vmem [#allocation2], 2
        %919 = vst.msk [vmem:[%s918] sm:$0x3] %vm763, %v841
        %s920 = scalar_lea.vmem [#allocation3], 2
        %921 = vst.msk [vmem:[%s920] sm:$0x3] %vm763, %v917
        %s922 = scalar_lea.vmem %s495, 4 [#allocation6]
        %v923 = vld [vmem:[%s922] sm:$0x3]
        %v925 = vsel %vm601, %v923, 0
        %927 = vmatprep.subr.mxu0 0.0
        %928 = vmatpush1.msra.mxu0 %v590
        %929 = vmatprep.subr.mxu0 0.0
        %930 = vmatpush1.msra.mxu0 %v591
        %931 = vmatprep.subr.mxu0 0.0
        %932 = vmatpush1.msra.mxu0 %v592
        %933 = vmatprep.subr.mxu0 0.0
        %934 = vmatpush1.msra.mxu0 %v593
        %935 = vmatprep.subr.mxu0 0.0
        %936 = vmatpush1.msra.mxu0 0.0
        %937 = vmatprep.subr.mxu0 0.0
        %938 = vmatpush1.msra.mxu0 0.0
        %939 = vmatprep.subr.mxu0 0.0
        %940 = vmatpush1.msra.mxu0 0.0
        %941 = vmatprep.subr.mxu0 0.0
        %942 = vmatpush1.msra.mxu0 0.0
        %943 = vmatprep.subr.mxu0 0.0
        %944 = vmatpush1.msra.mxu0 0.0
        %945 = vmatprep.subr.mxu0 0.0
        %946 = vmatpush1.msra.mxu0 0.0
        %947 = vmatprep.subr.mxu0 0.0
        %948 = vmatpush1.msra.mxu0 0.0
        %949 = vmatprep.subr.mxu0 0.0
        %950 = vmatpush1.msra.mxu0 0.0
        %951 = vmatprep.subr.mxu0 0.0
        %952 = vmatpush1.msra.mxu0 0.0
        %953 = vmatprep.subr.mxu0 0.0
        %954 = vmatpush1.msra.mxu0 0.0
        %955 = vmatprep.subr.mxu0 0.0
        %956 = vmatpush1.msra.mxu0 0.0
        %957 = vmatprep.subr.mxu0 0.0
        %958 = vmatpush1.msra.mxu0 0.0
        %959 = vmatprep.subr.mxu0 0.0
        %960 = vmatpush1.msra.mxu0 0.0
        %961 = vmatprep.subr.mxu0 0.0
        %962 = vmatpush1.msra.mxu0 0.0
        %963 = vmatprep.subr.mxu0 0.0
        %964 = vmatpush1.msra.mxu0 0.0
        %965 = vmatprep.subr.mxu0 0.0
        %966 = vmatpush1.msra.mxu0 0.0
        %967 = vmatprep.subr.mxu0 0.0
        %968 = vmatpush1.msra.mxu0 0.0
        %969 = vmatprep.subr.mxu0 0.0
        %970 = vmatpush1.msra.mxu0 0.0
        %971 = vmatprep.subr.mxu0 0.0
        %972 = vmatpush1.msra.mxu0 0.0
        %973 = vmatprep.subr.mxu0 0.0
        %974 = vmatpush1.msra.mxu0 0.0
        %975 = vmatprep.subr.mxu0 0.0
        %976 = vmatpush1.msra.mxu0 0.0
        %977 = vmatprep.subr.mxu0 0.0
        %978 = vmatpush1.msra.mxu0 0.0
        %979 = vmatprep.subr.mxu0 0.0
        %980 = vmatpush1.msra.mxu0 0.0
        %981 = vmatprep.subr.mxu0 0.0
        %982 = vmatpush1.msra.mxu0 0.0
        %983 = vmatprep.subr.mxu0 0.0
        %984 = vmatpush1.msra.mxu0 0.0
        %985 = vmatprep.subr.mxu0 0.0
        %986 = vmatpush1.msra.mxu0 0.0
        %987 = vmatprep.subr.mxu0 0.0
        %988 = vmatpush1.msra.mxu0 0.0
        %989 = vmatprep.subr.mxu0 0.0
        %990 = vmatpush1.msra.mxu0 0.0
        %991 = vmatprep.mubr.f32.mxu0 0.0
        %992 = vmatmul.mubr.f32.gmra.mrb[0].mxu0 %v925
        %v993 = vpop.f32.mrb[0].mxu0
        %v994 = vadd.f32 0.0, %v993
        %v995 = vpop.f32.mrb[0].mxu0
        %996 = vdwg.mxu0
        %v997 = vadd.f32 %v679, %v994
        %s998 = scalar_lea.vmem %s504, 4 [#allocation9]
        %v999 = vld [vmem:[%s998] sm:$0x3]
        %v1001 = vsel %vm601, %v999, 0
        %1003 = vmatprep.subr.mxu0 0.0
        %1004 = vmatpush1.msra.mxu0 %v594
        %1005 = vmatprep.subr.mxu0 0.0
        %1006 = vmatpush1.msra.mxu0 %v595
        %1007 = vmatprep.subr.mxu0 0.0
        %1008 = vmatpush1.msra.mxu0 %v596
        %1009 = vmatprep.subr.mxu0 0.0
        %1010 = vmatpush1.msra.mxu0 %v597
        %1011 = vmatprep.subr.mxu0 0.0
        %1012 = vmatpush1.msra.mxu0 0.0
        %1013 = vmatprep.subr.mxu0 0.0
        %1014 = vmatpush1.msra.mxu0 0.0
        %1015 = vmatprep.subr.mxu0 0.0
        %1016 = vmatpush1.msra.mxu0 0.0
        %1017 = vmatprep.subr.mxu0 0.0
        %1018 = vmatpush1.msra.mxu0 0.0
        %1019 = vmatprep.subr.mxu0 0.0
        %1020 = vmatpush1.msra.mxu0 0.0
        %1021 = vmatprep.subr.mxu0 0.0
        %1022 = vmatpush1.msra.mxu0 0.0
        %1023 = vmatprep.subr.mxu0 0.0
        %1024 = vmatpush1.msra.mxu0 0.0
        %1025 = vmatprep.subr.mxu0 0.0
        %1026 = vmatpush1.msra.mxu0 0.0
        %1027 = vmatprep.subr.mxu0 0.0
        %1028 = vmatpush1.msra.mxu0 0.0
        %1029 = vmatprep.subr.mxu0 0.0
        %1030 = vmatpush1.msra.mxu0 0.0
        %1031 = vmatprep.subr.mxu0 0.0
        %1032 = vmatpush1.msra.mxu0 0.0
        %1033 = vmatprep.subr.mxu0 0.0
        %1034 = vmatpush1.msra.mxu0 0.0
        %1035 = vmatprep.subr.mxu0 0.0
        %1036 = vmatpush1.msra.mxu0 0.0
        %1037 = vmatprep.subr.mxu0 0.0
        %1038 = vmatpush1.msra.mxu0 0.0
        %1039 = vmatprep.subr.mxu0 0.0
        %1040 = vmatpush1.msra.mxu0 0.0
        %1041 = vmatprep.subr.mxu0 0.0
        %1042 = vmatpush1.msra.mxu0 0.0
        %1043 = vmatprep.subr.mxu0 0.0
        %1044 = vmatpush1.msra.mxu0 0.0
        %1045 = vmatprep.subr.mxu0 0.0
        %1046 = vmatpush1.msra.mxu0 0.0
        %1047 = vmatprep.subr.mxu0 0.0
        %1048 = vmatpush1.msra.mxu0 0.0
        %1049 = vmatprep.subr.mxu0 0.0
        %1050 = vmatpush1.msra.mxu0 0.0
        %1051 = vmatprep.subr.mxu0 0.0
        %1052 = vmatpush1.msra.mxu0 0.0
        %1053 = vmatprep.subr.mxu0 0.0
        %1054 = vmatpush1.msra.mxu0 0.0
        %1055 = vmatprep.subr.mxu0 0.0
        %1056 = vmatpush1.msra.mxu0 0.0
        %1057 = vmatprep.subr.mxu0 0.0
        %1058 = vmatpush1.msra.mxu0 0.0
        %1059 = vmatprep.subr.mxu0 0.0
        %1060 = vmatpush1.msra.mxu0 0.0
        %1061 = vmatprep.subr.mxu0 0.0
        %1062 = vmatpush1.msra.mxu0 0.0
        %1063 = vmatprep.subr.mxu0 0.0
        %1064 = vmatpush1.msra.mxu0 0.0
        %1065 = vmatprep.subr.mxu0 0.0
        %1066 = vmatpush1.msra.mxu0 0.0
        %1067 = vmatprep.mubr.f32.mxu0 0.0
        %1068 = vmatmul.mubr.f32.gmra.mrb[0].mxu0 %v1001
        %v1069 = vpop.f32.mrb[0].mxu0
        %v1070 = vadd.f32 0.0, %v1069
        %v1071 = vpop.f32.mrb[0].mxu0
        %1072 = vdwg.mxu0
        %v1073 = vadd.f32 %v760, %v1070
        %s1074 = scalar_lea.vmem [#allocation2], 4
        %1075 = vst.msk [vmem:[%s1074] sm:$0x3] %vm763, %v997
        %s1076 = scalar_lea.vmem [#allocation3], 4
        %1077 = vst.msk [vmem:[%s1076] sm:$0x3] %vm763, %v1073
        %s1078 = scalar_lea.vmem %s495, 6 [#allocation6]
        %v1079 = vld [vmem:[%s1078] sm:$0x3]
        %v1081 = vsel %vm601, %v1079, 0
        %1083 = vmatprep.subr.mxu0 0.0
        %1084 = vmatpush1.msra.mxu0 %v590
        %1085 = vmatprep.subr.mxu0 0.0
        %1086 = vmatpush1.msra.mxu0 %v591
        %1087 = vmatprep.subr.mxu0 0.0
        %1088 = vmatpush1.msra.mxu0 %v592
        %1089 = vmatprep.subr.mxu0 0.0
        %1090 = vmatpush1.msra.mxu0 %v593
        %1091 = vmatprep.subr.mxu0 0.0
        %1092 = vmatpush1.msra.mxu0 0.0
        %1093 = vmatprep.subr.mxu0 0.0
        %1094 = vmatpush1.msra.mxu0 0.0
        %1095 = vmatprep.subr.mxu0 0.0
        %1096 = vmatpush1.msra.mxu0 0.0
        %1097 = vmatprep.subr.mxu0 0.0
        %1098 = vmatpush1.msra.mxu0 0.0
        %1099 = vmatprep.subr.mxu0 0.0
        %1100 = vmatpush1.msra.mxu0 0.0
        %1101 = vmatprep.subr.mxu0 0.0
        %1102 = vmatpush1.msra.mxu0 0.0
        %1103 = vmatprep.subr.mxu0 0.0
        %1104 = vmatpush1.msra.mxu0 0.0
        %1105 = vmatprep.subr.mxu0 0.0
        %1106 = vmatpush1.msra.mxu0 0.0
        %1107 = vmatprep.subr.mxu0 0.0
        %1108 = vmatpush1.msra.mxu0 0.0
        %1109 = vmatprep.subr.mxu0 0.0
        %1110 = vmatpush1.msra.mxu0 0.0
        %1111 = vmatprep.subr.mxu0 0.0
        %1112 = vmatpush1.msra.mxu0 0.0
        %1113 = vmatprep.subr.mxu0 0.0
        %1114 = vmatpush1.msra.mxu0 0.0
        %1115 = vmatprep.subr.mxu0 0.0
        %1116 = vmatpush1.msra.mxu0 0.0
        %1117 = vmatprep.subr.mxu0 0.0
        %1118 = vmatpush1.msra.mxu0 0.0
        %1119 = vmatprep.subr.mxu0 0.0
        %1120 = vmatpush1.msra.mxu0 0.0
        %1121 = vmatprep.subr.mxu0 0.0
        %1122 = vmatpush1.msra.mxu0 0.0
        %1123 = vmatprep.subr.mxu0 0.0
        %1124 = vmatpush1.msra.mxu0 0.0
        %1125 = vmatprep.subr.mxu0 0.0
        %1126 = vmatpush1.msra.mxu0 0.0
        %1127 = vmatprep.subr.mxu0 0.0
        %1128 = vmatpush1.msra.mxu0 0.0
        %1129 = vmatprep.subr.mxu0 0.0
        %1130 = vmatpush1.msra.mxu0 0.0
        %1131 = vmatprep.subr.mxu0 0.0
        %1132 = vmatpush1.msra.mxu0 0.0
        %1133 = vmatprep.subr.mxu0 0.0
        %1134 = vmatpush1.msra.mxu0 0.0
        %1135 = vmatprep.subr.mxu0 0.0
        %1136 = vmatpush1.msra.mxu0 0.0
        %1137 = vmatprep.subr.mxu0 0.0
        %1138 = vmatpush1.msra.mxu0 0.0
        %1139 = vmatprep.subr.mxu0 0.0
        %1140 = vmatpush1.msra.mxu0 0.0
        %1141 = vmatprep.subr.mxu0 0.0
        %1142 = vmatpush1.msra.mxu0 0.0
        %1143 = vmatprep.subr.mxu0 0.0
        %1144 = vmatpush1.msra.mxu0 0.0
        %1145 = vmatprep.subr.mxu0 0.0
        %1146 = vmatpush1.msra.mxu0 0.0
        %1147 = vmatprep.mubr.f32.mxu0 0.0
        %1148 = vmatmul.mubr.f32.gmra.mrb[0].mxu0 %v1081
        %v1149 = vpop.f32.mrb[0].mxu0
        %v1150 = vadd.f32 0.0, %v1149
        %v1151 = vpop.f32.mrb[0].mxu0
        %1152 = vdwg.mxu0
        %v1153 = vadd.f32 %v679, %v1150
        %s1154 = scalar_lea.vmem %s504, 6 [#allocation9]
        %v1155 = vld [vmem:[%s1154] sm:$0x3]
        %v1157 = vsel %vm601, %v1155, 0
        %1159 = vmatprep.subr.mxu0 0.0
        %1160 = vmatpush1.msra.mxu0 %v594
        %1161 = vmatprep.subr.mxu0 0.0
        %1162 = vmatpush1.msra.mxu0 %v595
        %1163 = vmatprep.subr.mxu0 0.0
        %1164 = vmatpush1.msra.mxu0 %v596
        %1165 = vmatprep.subr.mxu0 0.0
        %1166 = vmatpush1.msra.mxu0 %v597
        %1167 = vmatprep.subr.mxu0 0.0
        %1168 = vmatpush1.msra.mxu0 0.0
        %1169 = vmatprep.subr.mxu0 0.0
        %1170 = vmatpush1.msra.mxu0 0.0
        %1171 = vmatprep.subr.mxu0 0.0
        %1172 = vmatpush1.msra.mxu0 0.0
        %1173 = vmatprep.subr.mxu0 0.0
        %1174 = vmatpush1.msra.mxu0 0.0
        %1175 = vmatprep.subr.mxu0 0.0
        %1176 = vmatpush1.msra.mxu0 0.0
        %1177 = vmatprep.subr.mxu0 0.0
        %1178 = vmatpush1.msra.mxu0 0.0
        %1179 = vmatprep.subr.mxu0 0.0
        %1180 = vmatpush1.msra.mxu0 0.0
        %1181 = vmatprep.subr.mxu0 0.0
        %1182 = vmatpush1.msra.mxu0 0.0
        %1183 = vmatprep.subr.mxu0 0.0
        %1184 = vmatpush1.msra.mxu0 0.0
        %1185 = vmatprep.subr.mxu0 0.0
        %1186 = vmatpush1.msra.mxu0 0.0
        %1187 = vmatprep.subr.mxu0 0.0
        %1188 = vmatpush1.msra.mxu0 0.0
        %1189 = vmatprep.subr.mxu0 0.0
        %1190 = vmatpush1.msra.mxu0 0.0
        %1191 = vmatprep.subr.mxu0 0.0
        %1192 = vmatpush1.msra.mxu0 0.0
        %1193 = vmatprep.subr.mxu0 0.0
        %1194 = vmatpush1.msra.mxu0 0.0
        %1195 = vmatprep.subr.mxu0 0.0
        %1196 = vmatpush1.msra.mxu0 0.0
        %1197 = vmatprep.subr.mxu0 0.0
        %1198 = vmatpush1.msra.mxu0 0.0
        %1199 = vmatprep.subr.mxu0 0.0
        %1200 = vmatpush1.msra.mxu0 0.0
        %1201 = vmatprep.subr.mxu0 0.0
        %1202 = vmatpush1.msra.mxu0 0.0
        %1203 = vmatprep.subr.mxu0 0.0
        %1204 = vmatpush1.msra.mxu0 0.0
        %1205 = vmatprep.subr.mxu0 0.0
        %1206 = vmatpush1.msra.mxu0 0.0
        %1207 = vmatprep.subr.mxu0 0.0
        %1208 = vmatpush1.msra.mxu0 0.0
        %1209 = vmatprep.subr.mxu0 0.0
        %1210 = vmatpush1.msra.mxu0 0.0
        %1211 = vmatprep.subr.mxu0 0.0
        %1212 = vmatpush1.msra.mxu0 0.0
        %1213 = vmatprep.subr.mxu0 0.0
        %1214 = vmatpush1.msra.mxu0 0.0
        %1215 = vmatprep.subr.mxu0 0.0
        %1216 = vmatpush1.msra.mxu0 0.0
        %1217 = vmatprep.subr.mxu0 0.0
        %1218 = vmatpush1.msra.mxu0 0.0
        %1219 = vmatprep.subr.mxu0 0.0
        %1220 = vmatpush1.msra.mxu0 0.0
        %1221 = vmatprep.subr.mxu0 0.0
        %1222 = vmatpush1.msra.mxu0 0.0
        %1223 = vmatprep.mubr.f32.mxu0 0.0
        %1224 = vmatmul.mubr.f32.gmra.mrb[0].mxu0 %v1157
        %v1225 = vpop.f32.mrb[0].mxu0
        %v1226 = vadd.f32 0.0, %v1225
        %v1227 = vpop.f32.mrb[0].mxu0
        %1228 = vdwg.mxu0
        %v1229 = vadd.f32 %v760, %v1226
        %s1230 = scalar_lea.vmem [#allocation2], 6
        %1231 = vst.msk [vmem:[%s1230] sm:$0x3] %vm763, %v1153
        %s1232 = scalar_lea.vmem [#allocation3], 6
        %1233 = vst.msk [vmem:[%s1232] sm:$0x3] %vm763, %v1229
        %v1234 = vld [vmem:[%s5] sm:$0xff]
        %v1235 = vld [vmem:[%s5 + $0x8] sm:$0xff]
        %v1236 = vld [vmem:[#allocation14] sm:$0xff]
        %v1237 = vld [vmem:[#allocation14 + $0x8] sm:$0xff]
        %v1238 = vld [vmem:[%s574] sm:$0x3]
        %s1239 = smul.u32 %s43, 4
        %v1240 = vstv %s1239
        %vm1241 = vcmp.lt.s32.totalorder %v1240, %v1238
        %v1242 = vld [vmem:[#allocation4] sm:$0x3]
        %v1243 = vld [vmem:[#allocation5] sm:$0x3]
        %v1244 = vld [vmem:[#allocation2] sm:$0x3]
        %vm1245 = vcmask 130048
        %v1247 = vsel %vm1245, %v1242, 0
        %1249 = vmatprep.subr.mxu0 0.0
        %1250 = vmatpush1.msra.mxu0 %v1234
        %1251 = vmatprep.subr.mxu0 0.0
        %1252 = vmatpush1.msra.mxu0 %v1235
        %1253 = vmatprep.subr.mxu0 0.0
        %1254 = vmatpush1.msra.mxu0 0.0
        %1255 = vmatprep.subr.mxu0 0.0
        %1256 = vmatpush1.msra.mxu0 0.0
        %1257 = vmatprep.subr.mxu0 0.0
        %1258 = vmatpush1.msra.mxu0 0.0
        %1259 = vmatprep.subr.mxu0 0.0
        %1260 = vmatpush1.msra.mxu0 0.0
        %1261 = vmatprep.subr.mxu0 0.0
        %1262 = vmatpush1.msra.mxu0 0.0
        %1263 = vmatprep.subr.mxu0 0.0
        %1264 = vmatpush1.msra.mxu0 0.0
        %1265 = vmatprep.subr.mxu0 0.0
        %1266 = vmatpush1.msra.mxu0 0.0
        %1267 = vmatprep.subr.mxu0 0.0
        %1268 = vmatpush1.msra.mxu0 0.0
        %1269 = vmatprep.subr.mxu0 0.0
        %1270 = vmatpush1.msra.mxu0 0.0
        %1271 = vmatprep.subr.mxu0 0.0
        %1272 = vmatpush1.msra.mxu0 0.0
        %1273 = vmatprep.subr.mxu0 0.0
        %1274 = vmatpush1.msra.mxu0 0.0
        %1275 = vmatprep.subr.mxu0 0.0
        %1276 = vmatpush1.msra.mxu0 0.0
        %1277 = vmatprep.subr.mxu0 0.0
        %1278 = vmatpush1.msra.mxu0 0.0
        %1279 = vmatprep.subr.mxu0 0.0
        %1280 = vmatpush1.msra.mxu0 0.0
        %1281 = vmatprep.subr.mxu0 0.0
        %1282 = vmatpush1.msra.mxu0 0.0
        %1283 = vmatprep.subr.mxu0 0.0
        %1284 = vmatpush1.msra.mxu0 0.0
        %1285 = vmatprep.subr.mxu0 0.0
        %1286 = vmatpush1.msra.mxu0 0.0
        %1287 = vmatprep.subr.mxu0 0.0
        %1288 = vmatpush1.msra.mxu0 0.0
        %1289 = vmatprep.subr.mxu0 0.0
        %1290 = vmatpush1.msra.mxu0 0.0
        %1291 = vmatprep.subr.mxu0 0.0
        %1292 = vmatpush1.msra.mxu0 0.0
        %1293 = vmatprep.subr.mxu0 0.0
        %1294 = vmatpush1.msra.mxu0 0.0
        %1295 = vmatprep.subr.mxu0 0.0
        %1296 = vmatpush1.msra.mxu0 0.0
        %1297 = vmatprep.subr.mxu0 0.0
        %1298 = vmatpush1.msra.mxu0 0.0
        %1299 = vmatprep.subr.mxu0 0.0
        %1300 = vmatpush1.msra.mxu0 0.0
        %1301 = vmatprep.subr.mxu0 0.0
        %1302 = vmatpush1.msra.mxu0 0.0
        %1303 = vmatprep.subr.mxu0 0.0
        %1304 = vmatpush1.msra.mxu0 0.0
        %1305 = vmatprep.subr.mxu0 0.0
        %1306 = vmatpush1.msra.mxu0 0.0
        %1307 = vmatprep.subr.mxu0 0.0
        %1308 = vmatpush1.msra.mxu0 0.0
        %1309 = vmatprep.subr.mxu0 0.0
        %1310 = vmatpush1.msra.mxu0 0.0
        %1311 = vmatprep.subr.mxu0 0.0
        %1312 = vmatpush1.msra.mxu0 0.0
        %1313 = vmatprep.mubr.f32.mxu0 0.0
        %1314 = vmatmul.mubr.f32.gmra.mrb[0].mxu0 %v1247
        %v1315 = vpop.f32.mrb[0].mxu0
        %v1316 = vadd.f32 0.0, %v1315
        %v1317 = vpop.f32.mrb[0].mxu0
        %1318 = vdwg.mxu0
        %v1319 = vadd.f32 %v1244, %v1316
        %v1320 = vxor.u32 %v1319, 2147483648
        %v1321 = vmul.f32 %v1320, 1.442695
        %v1322 = vpow.pop %v1321
        %v1323 = vadd.f32 %v1322, 1.0
        %v1324 = vrcp.pop %v1323
        %v1325 = vmul.f32 1.0, %v1324
        %v1326 = vtanh.pop %v1319
        %1328 = vrot.lane.b32.xlu0 %v1243, 16
        %v1329 = vpop.permute.xlu0 %1328
        %v1331 = vmul.f32 %v1325, %v1329
        %1333 = vrot.lane.b32.xlu0 %v1326, 96
        %v1334 = vpop.permute.xlu0 %1333
        %v1336 = vmul.f32 %v1325, %v1334
        %1338 = vrot.lane.b32.xlu0 %v1336, 16
        %v1339 = vpop.permute.xlu0 %1338
        %v1341 = vadd.f32 %v1331, %v1339
        %v1342 = vtanh.pop %v1341
        %1344 = vrot.lane.b32.xlu0 %v1342, 32
        %v1345 = vpop.permute.xlu0 %1344
        %v1347 = vmul.f32 %v1325, %v1345
        %v1348 = vsel %vm1241, 1, 0
        %1349 = vset.pattern.permute.xlu0 0
        %1350 = vperm.xlu0 %1349, %v1348
        %v1351 = vpop.permute.xlu0 %1350
        %vm1352 = vcmp.eq.s32.totalorder %v1351, 1
        %1353 = vrot.lane.b32.xlu0 %v1242, 48
        %v1354 = vpop.permute.xlu0 %1353
        %v1356 = vsel %vm1352, %v1347, %v1354
        %1358 = vrot.lane.b32.xlu0 %v1356, 80
        %v1359 = vpop.permute.xlu0 %1358
        %vm1361 = vcmask 123904
        %1362 = vst.msk [vmem:[#allocation4] sm:$0x3] %vm1361, %v1359
        %v1363 = vsel %vm1352, %v1341, %v1329
        %1365 = vrot.lane.b32.xlu0 %v1363, 112
        %v1366 = vpop.permute.xlu0 %1365
        %1368 = vst.msk [vmem:[#allocation5] sm:$0x3] %vm1361, %v1366
        %v1369 = vsel %vm1352, %v1347, 0.0
        %1371 = vrot.lane.b32.xlu0 %v1369, 80
        %v1372 = vpop.permute.xlu0 %1371
        %1374 = vst.msk [vmem:[%s559] sm:$0x3] %vm1361, %v1372
        %s1375 = ssub.s32 1, %s43
        %s1376 = smul.u32 %s1375, 4
        %s1377 = sadd.s32 %s1376, 3
        %v1378 = vstv %s1377
        %vm1379 = vcmp.lt.s32.totalorder %v1378, %v1238
        %s1380 = scalar_lea.vmem [#allocation4], 2
        %v1381 = vld [vmem:[%s1380] sm:$0x3]
        %s1382 = scalar_lea.vmem [#allocation5], 2
        %v1383 = vld [vmem:[%s1382] sm:$0x3]
        %v1384 = vld [vmem:[%s1232] sm:$0x3]
        %v1386 = vsel %vm1245, %v1381, 0
        %1388 = vmatprep.subr.mxu0 0.0
        %1389 = vmatpush1.msra.mxu0 %v1236
        %1390 = vmatprep.subr.mxu0 0.0
        %1391 = vmatpush1.msra.mxu0 %v1237
        %1392 = vmatprep.subr.mxu0 0.0
        %1393 = vmatpush1.msra.mxu0 0.0
        %1394 = vmatprep.subr.mxu0 0.0
        %1395 = vmatpush1.msra.mxu0 0.0
        %1396 = vmatprep.subr.mxu0 0.0
        %1397 = vmatpush1.msra.mxu0 0.0
        %1398 = vmatprep.subr.mxu0 0.0
        %1399 = vmatpush1.msra.mxu0 0.0
        %1400 = vmatprep.subr.mxu0 0.0
        %1401 = vmatpush1.msra.mxu0 0.0
        %1402 = vmatprep.subr.mxu0 0.0
        %1403 = vmatpush1.msra.mxu0 0.0
        %1404 = vmatprep.subr.mxu0 0.0
        %1405 = vmatpush1.msra.mxu0 0.0
        %1406 = vmatprep.subr.mxu0 0.0
        %1407 = vmatpush1.msra.mxu0 0.0
        %1408 = vmatprep.subr.mxu0 0.0
        %1409 = vmatpush1.msra.mxu0 0.0
        %1410 = vmatprep.subr.mxu0 0.0
        %1411 = vmatpush1.msra.mxu0 0.0
        %1412 = vmatprep.subr.mxu0 0.0
        %1413 = vmatpush1.msra.mxu0 0.0
        %1414 = vmatprep.subr.mxu0 0.0
        %1415 = vmatpush1.msra.mxu0 0.0
        %1416 = vmatprep.subr.mxu0 0.0
        %1417 = vmatpush1.msra.mxu0 0.0
        %1418 = vmatprep.subr.mxu0 0.0
        %1419 = vmatpush1.msra.mxu0 0.0
        %1420 = vmatprep.subr.mxu0 0.0
        %1421 = vmatpush1.msra.mxu0 0.0
        %1422 = vmatprep.subr.mxu0 0.0
        %1423 = vmatpush1.msra.mxu0 0.0
        %1424 = vmatprep.subr.mxu0 0.0
        %1425 = vmatpush1.msra.mxu0 0.0
        %1426 = vmatprep.subr.mxu0 0.0
        %1427 = vmatpush1.msra.mxu0 0.0
        %1428 = vmatprep.subr.mxu0 0.0
        %1429 = vmatpush1.msra.mxu0 0.0
        %1430 = vmatprep.subr.mxu0 0.0
        %1431 = vmatpush1.msra.mxu0 0.0
        %1432 = vmatprep.subr.mxu0 0.0
        %1433 = vmatpush1.msra.mxu0 0.0
        %1434 = vmatprep.subr.mxu0 0.0
        %1435 = vmatpush1.msra.mxu0 0.0
        %1436 = vmatprep.subr.mxu0 0.0
        %1437 = vmatpush1.msra.mxu0 0.0
        %1438 = vmatprep.subr.mxu0 0.0
        %1439 = vmatpush1.msra.mxu0 0.0
        %1440 = vmatprep.subr.mxu0 0.0
        %1441 = vmatpush1.msra.mxu0 0.0
        %1442 = vmatprep.subr.mxu0 0.0
        %1443 = vmatpush1.msra.mxu0 0.0
        %1444 = vmatprep.subr.mxu0 0.0
        %1445 = vmatpush1.msra.mxu0 0.0
        %1446 = vmatprep.subr.mxu0 0.0
        %1447 = vmatpush1.msra.mxu0 0.0
        %1448 = vmatprep.subr.mxu0 0.0
        %1449 = vmatpush1.msra.mxu0 0.0
        %1450 = vmatprep.subr.mxu0 0.0
        %1451 = vmatpush1.msra.mxu0 0.0
        %1452 = vmatprep.mubr.f32.mxu0 0.0
        %1453 = vmatmul.mubr.f32.gmra.mrb[0].mxu0 %v1386
        %v1454 = vpop.f32.mrb[0].mxu0
        %v1455 = vadd.f32 0.0, %v1454
        %v1456 = vpop.f32.mrb[0].mxu0
        %1457 = vdwg.mxu0
        %v1458 = vadd.f32 %v1384, %v1455
        %v1459 = vxor.u32 %v1458, 2147483648
        %v1460 = vmul.f32 %v1459, 1.442695
        %v1461 = vpow.pop %v1460
        %v1462 = vadd.f32 %v1461, 1.0
        %v1463 = vrcp.pop %v1462
        %v1464 = vmul.f32 1.0, %v1463
        %v1465 = vtanh.pop %v1458
        %1467 = vrot.lane.b32.xlu0 %v1383, 16
        %v1468 = vpop.permute.xlu0 %1467
        %v1470 = vmul.f32 %v1464, %v1468
        %1472 = vrot.lane.b32.xlu0 %v1465, 96
        %v1473 = vpop.permute.xlu0 %1472
        %v1475 = vmul.f32 %v1464, %v1473
        %1477 = vrot.lane.b32.xlu0 %v1475, 16
        %v1478 = vpop.permute.xlu0 %1477
        %v1480 = vadd.f32 %v1470, %v1478
        %v1481 = vtanh.pop %v1480
        %1483 = vrot.lane.b32.xlu0 %v1481, 32
        %v1484 = vpop.permute.xlu0 %1483
        %v1486 = vmul.f32 %v1464, %v1484
        %v1487 = vsel %vm1379, 1, 0
        %1488 = vset.pattern.permute.xlu0 0
        %1489 = vperm.xlu0 %1488, %v1487
        %v1490 = vpop.permute.xlu0 %1489
        %vm1491 = vcmp.eq.s32.totalorder %v1490, 1
        %1492 = vrot.lane.b32.xlu0 %v1381, 48
        %v1493 = vpop.permute.xlu0 %1492
        %v1495 = vsel %vm1491, %v1486, %v1493
        %1497 = vrot.lane.b32.xlu0 %v1495, 80
        %v1498 = vpop.permute.xlu0 %1497
        %1500 = vst.msk [vmem:[%s1380] sm:$0x3] %vm1361, %v1498
        %v1501 = vsel %vm1491, %v1480, %v1468
        %1503 = vrot.lane.b32.xlu0 %v1501, 112
        %v1504 = vpop.permute.xlu0 %1503
        %1506 = vst.msk [vmem:[%s1382] sm:$0x3] %vm1361, %v1504
        %v1507 = vsel %vm1491, %v1486, 0.0
        %1509 = vrot.lane.b32.xlu0 %v1507, 80
        %v1510 = vpop.permute.xlu0 %1509
        %s1512 = scalar_lea.vmem %s566, 6 [#allocation16]
        %1513 = vst.msk [vmem:[%s1512] sm:$0x3] %vm1361, %v1510
        %s1514 = sadd.s32 %s1239, 1
        %v1515 = vstv %s1514
        %vm1516 = vcmp.lt.s32.totalorder %v1515, %v1238
        %v1517 = vld [vmem:[#allocation4] sm:$0x3]
        %v1518 = vld [vmem:[#allocation5] sm:$0x3]
        %v1519 = vld [vmem:[%s918] sm:$0x3]
        %v1521 = vsel %vm1245, %v1517, 0
        %1523 = vmatprep.subr.mxu0 0.0
        %1524 = vmatpush1.msra.mxu0 %v1234
        %1525 = vmatprep.subr.mxu0 0.0
        %1526 = vmatpush1.msra.mxu0 %v1235
        %1527 = vmatprep.subr.mxu0 0.0
        %1528 = vmatpush1.msra.mxu0 0.0
        %1529 = vmatprep.subr.mxu0 0.0
        %1530 = vmatpush1.msra.mxu0 0.0
        %1531 = vmatprep.subr.mxu0 0.0
        %1532 = vmatpush1.msra.mxu0 0.0
        %1533 = vmatprep.subr.mxu0 0.0
        %1534 = vmatpush1.msra.mxu0 0.0
        %1535 = vmatprep.subr.mxu0 0.0
        %1536 = vmatpush1.msra.mxu0 0.0
        %1537 = vmatprep.subr.mxu0 0.0
        %1538 = vmatpush1.msra.mxu0 0.0
        %1539 = vmatprep.subr.mxu0 0.0
        %1540 = vmatpush1.msra.mxu0 0.0
        %1541 = vmatprep.subr.mxu0 0.0
        %1542 = vmatpush1.msra.mxu0 0.0
        %1543 = vmatprep.subr.mxu0 0.0
        %1544 = vmatpush1.msra.mxu0 0.0
        %1545 = vmatprep.subr.mxu0 0.0
        %1546 = vmatpush1.msra.mxu0 0.0
        %1547 = vmatprep.subr.mxu0 0.0
        %1548 = vmatpush1.msra.mxu0 0.0
        %1549 = vmatprep.subr.mxu0 0.0
        %1550 = vmatpush1.msra.mxu0 0.0
        %1551 = vmatprep.subr.mxu0 0.0
        %1552 = vmatpush1.msra.mxu0 0.0
        %1553 = vmatprep.subr.mxu0 0.0
        %1554 = vmatpush1.msra.mxu0 0.0
        %1555 = vmatprep.subr.mxu0 0.0
        %1556 = vmatpush1.msra.mxu0 0.0
        %1557 = vmatprep.subr.mxu0 0.0
        %1558 = vmatpush1.msra.mxu0 0.0
        %1559 = vmatprep.subr.mxu0 0.0
        %1560 = vmatpush1.msra.mxu0 0.0
        %1561 = vmatprep.subr.mxu0 0.0
        %1562 = vmatpush1.msra.mxu0 0.0
        %1563 = vmatprep.subr.mxu0 0.0
        %1564 = vmatpush1.msra.mxu0 0.0
        %1565 = vmatprep.subr.mxu0 0.0
        %1566 = vmatpush1.msra.mxu0 0.0
        %1567 = vmatprep.subr.mxu0 0.0
        %1568 = vmatpush1.msra.mxu0 0.0
        %1569 = vmatprep.subr.mxu0 0.0
        %1570 = vmatpush1.msra.mxu0 0.0
        %1571 = vmatprep.subr.mxu0 0.0
        %1572 = vmatpush1.msra.mxu0 0.0
        %1573 = vmatprep.subr.mxu0 0.0
        %1574 = vmatpush1.msra.mxu0 0.0
        %1575 = vmatprep.subr.mxu0 0.0
        %1576 = vmatpush1.msra.mxu0 0.0
        %1577 = vmatprep.subr.mxu0 0.0
        %1578 = vmatpush1.msra.mxu0 0.0
        %1579 = vmatprep.subr.mxu0 0.0
        %1580 = vmatpush1.msra.mxu0 0.0
        %1581 = vmatprep.subr.mxu0 0.0
        %1582 = vmatpush1.msra.mxu0 0.0
        %1583 = vmatprep.subr.mxu0 0.0
        %1584 = vmatpush1.msra.mxu0 0.0
        %1585 = vmatprep.subr.mxu0 0.0
        %1586 = vmatpush1.msra.mxu0 0.0
        %1587 = vmatprep.mubr.f32.mxu0 0.0
        %1588 = vmatmul.mubr.f32.gmra.mrb[0].mxu0 %v1521
        %v1589 = vpop.f32.mrb[0].mxu0
        %v1590 = vadd.f32 0.0, %v1589
        %v1591 = vpop.f32.mrb[0].mxu0
        %1592 = vdwg.mxu0
        %v1593 = vadd.f32 %v1519, %v1590
        %v1594 = vxor.u32 %v1593, 2147483648
        %v1595 = vmul.f32 %v1594, 1.442695
        %v1596 = vpow.pop %v1595
        %v1597 = vadd.f32 %v1596, 1.0
        %v1598 = vrcp.pop %v1597
        %v1599 = vmul.f32 1.0, %v1598
        %v1600 = vtanh.pop %v1593
        %1602 = vrot.lane.b32.xlu0 %v1518, 16
        %v1603 = vpop.permute.xlu0 %1602
        %v1605 = vmul.f32 %v1599, %v1603
        %1607 = vrot.lane.b32.xlu0 %v1600, 96
        %v1608 = vpop.permute.xlu0 %1607
        %v1610 = vmul.f32 %v1599, %v1608
        %1612 = vrot.lane.b32.xlu0 %v1610, 16
        %v1613 = vpop.permute.xlu0 %1612
        %v1615 = vadd.f32 %v1605, %v1613
        %v1616 = vtanh.pop %v1615
        %1618 = vrot.lane.b32.xlu0 %v1616, 32
        %v1619 = vpop.permute.xlu0 %1618
        %v1621 = vmul.f32 %v1599, %v1619
        %v1622 = vsel %vm1516, 1, 0
        %1623 = vset.pattern.permute.xlu0 0
        %1624 = vperm.xlu0 %1623, %v1622
        %v1625 = vpop.permute.xlu0 %1624
        %vm1626 = vcmp.eq.s32.totalorder %v1625, 1
        %1627 = vrot.lane.b32.xlu0 %v1517, 48
        %v1628 = vpop.permute.xlu0 %1627
        %v1630 = vsel %vm1626, %v1621, %v1628
        %1632 = vrot.lane.b32.xlu0 %v1630, 80
        %v1633 = vpop.permute.xlu0 %1632
        %1635 = vst.msk [vmem:[#allocation4] sm:$0x3] %vm1361, %v1633
        %v1636 = vsel %vm1626, %v1615, %v1603
        %1638 = vrot.lane.b32.xlu0 %v1636, 112
        %v1639 = vpop.permute.xlu0 %1638
        %1641 = vst.msk [vmem:[#allocation5] sm:$0x3] %vm1361, %v1639
        %v1642 = vsel %vm1626, %v1621, 0.0
        %1644 = vrot.lane.b32.xlu0 %v1642, 80
        %v1645 = vpop.permute.xlu0 %1644
        %s1647 = scalar_lea.vmem %s559, 2 [#allocation15]
        %1648 = vst.msk [vmem:[%s1647] sm:$0x3] %vm1361, %v1645
        %s1649 = sadd.s32 %s1376, 2
        %v1650 = vstv %s1649
        %vm1651 = vcmp.lt.s32.totalorder %v1650, %v1238
        %v1652 = vld [vmem:[%s1380] sm:$0x3]
        %v1653 = vld [vmem:[%s1382] sm:$0x3]
        %v1654 = vld [vmem:[%s1076] sm:$0x3]
        %v1656 = vsel %vm1245, %v1652, 0
        %1658 = vmatprep.subr.mxu0 0.0
        %1659 = vmatpush1.msra.mxu0 %v1236
        %1660 = vmatprep.subr.mxu0 0.0
        %1661 = vmatpush1.msra.mxu0 %v1237
        %1662 = vmatprep.subr.mxu0 0.0
        %1663 = vmatpush1.msra.mxu0 0.0
        %1664 = vmatprep.subr.mxu0 0.0
        %1665 = vmatpush1.msra.mxu0 0.0
        %1666 = vmatprep.subr.mxu0 0.0
        %1667 = vmatpush1.msra.mxu0 0.0
        %1668 = vmatprep.subr.mxu0 0.0
        %1669 = vmatpush1.msra.mxu0 0.0
        %1670 = vmatprep.subr.mxu0 0.0
        %1671 = vmatpush1.msra.mxu0 0.0
        %1672 = vmatprep.subr.mxu0 0.0
        %1673 = vmatpush1.msra.mxu0 0.0
        %1674 = vmatprep.subr.mxu0 0.0
        %1675 = vmatpush1.msra.mxu0 0.0
        %1676 = vmatprep.subr.mxu0 0.0
        %1677 = vmatpush1.msra.mxu0 0.0
        %1678 = vmatprep.subr.mxu0 0.0
        %1679 = vmatpush1.msra.mxu0 0.0
        %1680 = vmatprep.subr.mxu0 0.0
        %1681 = vmatpush1.msra.mxu0 0.0
        %1682 = vmatprep.subr.mxu0 0.0
        %1683 = vmatpush1.msra.mxu0 0.0
        %1684 = vmatprep.subr.mxu0 0.0
        %1685 = vmatpush1.msra.mxu0 0.0
        %1686 = vmatprep.subr.mxu0 0.0
        %1687 = vmatpush1.msra.mxu0 0.0
        %1688 = vmatprep.subr.mxu0 0.0
        %1689 = vmatpush1.msra.mxu0 0.0
        %1690 = vmatprep.subr.mxu0 0.0
        %1691 = vmatpush1.msra.mxu0 0.0
        %1692 = vmatprep.subr.mxu0 0.0
        %1693 = vmatpush1.msra.mxu0 0.0
        %1694 = vmatprep.subr.mxu0 0.0
        %1695 = vmatpush1.msra.mxu0 0.0
        %1696 = vmatprep.subr.mxu0 0.0
        %1697 = vmatpush1.msra.mxu0 0.0
        %1698 = vmatprep.subr.mxu0 0.0
        %1699 = vmatpush1.msra.mxu0 0.0
        %1700 = vmatprep.subr.mxu0 0.0
        %1701 = vmatpush1.msra.mxu0 0.0
        %1702 = vmatprep.subr.mxu0 0.0
        %1703 = vmatpush1.msra.mxu0 0.0
        %1704 = vmatprep.subr.mxu0 0.0
        %1705 = vmatpush1.msra.mxu0 0.0
        %1706 = vmatprep.subr.mxu0 0.0
        %1707 = vmatpush1.msra.mxu0 0.0
        %1708 = vmatprep.subr.mxu0 0.0
        %1709 = vmatpush1.msra.mxu0 0.0
        %1710 = vmatprep.subr.mxu0 0.0
        %1711 = vmatpush1.msra.mxu0 0.0
        %1712 = vmatprep.subr.mxu0 0.0
        %1713 = vmatpush1.msra.mxu0 0.0
        %1714 = vmatprep.subr.mxu0 0.0
        %1715 = vmatpush1.msra.mxu0 0.0
        %1716 = vmatprep.subr.mxu0 0.0
        %1717 = vmatpush1.msra.mxu0 0.0
        %1718 = vmatprep.subr.mxu0 0.0
        %1719 = vmatpush1.msra.mxu0 0.0
        %1720 = vmatprep.subr.mxu0 0.0
        %1721 = vmatpush1.msra.mxu0 0.0
        %1722 = vmatprep.mubr.f32.mxu0 0.0
        %1723 = vmatmul.mubr.f32.gmra.mrb[0].mxu0 %v1656
        %v1724 = vpop.f32.mrb[0].mxu0
        %v1725 = vadd.f32 0.0, %v1724
        %v1726 = vpop.f32.mrb[0].mxu0
        %1727 = vdwg.mxu0
        %v1728 = vadd.f32 %v1654, %v1725
        %v1729 = vxor.u32 %v1728, 2147483648
        %v1730 = vmul.f32 %v1729, 1.442695
        %v1731 = vpow.pop %v1730
        %v1732 = vadd.f32 %v1731, 1.0
        %v1733 = vrcp.pop %v1732
        %v1734 = vmul.f32 1.0, %v1733
        %v1735 = vtanh.pop %v1728
        %1737 = vrot.lane.b32.xlu0 %v1653, 16
        %v1738 = vpop.permute.xlu0 %1737
        %v1740 = vmul.f32 %v1734, %v1738
        %1742 = vrot.lane.b32.xlu0 %v1735, 96
        %v1743 = vpop.permute.xlu0 %1742
        %v1745 = vmul.f32 %v1734, %v1743
        %1747 = vrot.lane.b32.xlu0 %v1745, 16
        %v1748 = vpop.permute.xlu0 %1747
        %v1750 = vadd.f32 %v1740, %v1748
        %v1751 = vtanh.pop %v1750
        %1753 = vrot.lane.b32.xlu0 %v1751, 32
        %v1754 = vpop.permute.xlu0 %1753
        %v1756 = vmul.f32 %v1734, %v1754
        %v1757 = vsel %vm1651, 1, 0
        %1758 = vset.pattern.permute.xlu0 0
        %1759 = vperm.xlu0 %1758, %v1757
        %v1760 = vpop.permute.xlu0 %1759
        %vm1761 = vcmp.eq.s32.totalorder %v1760, 1
        %1762 = vrot.lane.b32.xlu0 %v1652, 48
        %v1763 = vpop.permute.xlu0 %1762
        %v1765 = vsel %vm1761, %v1756, %v1763
        %1767 = vrot.lane.b32.xlu0 %v1765, 80
        %v1768 = vpop.permute.xlu0 %1767
        %1770 = vst.msk [vmem:[%s1380] sm:$0x3] %vm1361, %v1768
        %v1771 = vsel %vm1761, %v1750, %v1738
        %1773 = vrot.lane.b32.xlu0 %v1771, 112
        %v1774 = vpop.permute.xlu0 %1773
        %1776 = vst.msk [vmem:[%s1382] sm:$0x3] %vm1361, %v1774
        %v1777 = vsel %vm1761, %v1756, 0.0
        %1779 = vrot.lane.b32.xlu0 %v1777, 80
        %v1780 = vpop.permute.xlu0 %1779
        %s1782 = scalar_lea.vmem %s566, 4 [#allocation16]
        %1783 = vst.msk [vmem:[%s1782] sm:$0x3] %vm1361, %v1780
        %s1784 = sadd.s32 %s1239, 2
        %v1785 = vstv %s1784
        %vm1786 = vcmp.lt.s32.totalorder %v1785, %v1238
        %v1787 = vld [vmem:[#allocation4] sm:$0x3]
        %v1788 = vld [vmem:[#allocation5] sm:$0x3]
        %v1789 = vld [vmem:[%s1074] sm:$0x3]
        %v1791 = vsel %vm1245, %v1787, 0
        %1793 = vmatprep.subr.mxu0 0.0
        %1794 = vmatpush1.msra.mxu0 %v1234
        %1795 = vmatprep.subr.mxu0 0.0
        %1796 = vmatpush1.msra.mxu0 %v1235
        %1797 = vmatprep.subr.mxu0 0.0
        %1798 = vmatpush1.msra.mxu0 0.0
        %1799 = vmatprep.subr.mxu0 0.0
        %1800 = vmatpush1.msra.mxu0 0.0
        %1801 = vmatprep.subr.mxu0 0.0
        %1802 = vmatpush1.msra.mxu0 0.0
        %1803 = vmatprep.subr.mxu0 0.0
        %1804 = vmatpush1.msra.mxu0 0.0
        %1805 = vmatprep.subr.mxu0 0.0
        %1806 = vmatpush1.msra.mxu0 0.0
        %1807 = vmatprep.subr.mxu0 0.0
        %1808 = vmatpush1.msra.mxu0 0.0
        %1809 = vmatprep.subr.mxu0 0.0
        %1810 = vmatpush1.msra.mxu0 0.0
        %1811 = vmatprep.subr.mxu0 0.0
        %1812 = vmatpush1.msra.mxu0 0.0
        %1813 = vmatprep.subr.mxu0 0.0
        %1814 = vmatpush1.msra.mxu0 0.0
        %1815 = vmatprep.subr.mxu0 0.0
        %1816 = vmatpush1.msra.mxu0 0.0
        %1817 = vmatprep.subr.mxu0 0.0
        %1818 = vmatpush1.msra.mxu0 0.0
        %1819 = vmatprep.subr.mxu0 0.0
        %1820 = vmatpush1.msra.mxu0 0.0
        %1821 = vmatprep.subr.mxu0 0.0
        %1822 = vmatpush1.msra.mxu0 0.0
        %1823 = vmatprep.subr.mxu0 0.0
        %1824 = vmatpush1.msra.mxu0 0.0
        %1825 = vmatprep.subr.mxu0 0.0
        %1826 = vmatpush1.msra.mxu0 0.0
        %1827 = vmatprep.subr.mxu0 0.0
        %1828 = vmatpush1.msra.mxu0 0.0
        %1829 = vmatprep.subr.mxu0 0.0
        %1830 = vmatpush1.msra.mxu0 0.0
        %1831 = vmatprep.subr.mxu0 0.0
        %1832 = vmatpush1.msra.mxu0 0.0
        %1833 = vmatprep.subr.mxu0 0.0
        %1834 = vmatpush1.msra.mxu0 0.0
        %1835 = vmatprep.subr.mxu0 0.0
        %1836 = vmatpush1.msra.mxu0 0.0
        %1837 = vmatprep.subr.mxu0 0.0
        %1838 = vmatpush1.msra.mxu0 0.0
        %1839 = vmatprep.subr.mxu0 0.0
        %1840 = vmatpush1.msra.mxu0 0.0
        %1841 = vmatprep.subr.mxu0 0.0
        %1842 = vmatpush1.msra.mxu0 0.0
        %1843 = vmatprep.subr.mxu0 0.0
        %1844 = vmatpush1.msra.mxu0 0.0
        %1845 = vmatprep.subr.mxu0 0.0
        %1846 = vmatpush1.msra.mxu0 0.0
        %1847 = vmatprep.subr.mxu0 0.0
        %1848 = vmatpush1.msra.mxu0 0.0
        %1849 = vmatprep.subr.mxu0 0.0
        %1850 = vmatpush1.msra.mxu0 0.0
        %1851 = vmatprep.subr.mxu0 0.0
        %1852 = vmatpush1.msra.mxu0 0.0
        %1853 = vmatprep.subr.mxu0 0.0
        %1854 = vmatpush1.msra.mxu0 0.0
        %1855 = vmatprep.subr.mxu0 0.0
        %1856 = vmatpush1.msra.mxu0 0.0
        %1857 = vmatprep.mubr.f32.mxu0 0.0
        %1858 = vmatmul.mubr.f32.gmra.mrb[0].mxu0 %v1791
        %v1859 = vpop.f32.mrb[0].mxu0
        %v1860 = vadd.f32 0.0, %v1859
        %v1861 = vpop.f32.mrb[0].mxu0
        %1862 = vdwg.mxu0
        %v1863 = vadd.f32 %v1789, %v1860
        %v1864 = vxor.u32 %v1863, 2147483648
        %v1865 = vmul.f32 %v1864, 1.442695
        %v1866 = vpow.pop %v1865
        %v1867 = vadd.f32 %v1866, 1.0
        %v1868 = vrcp.pop %v1867
        %v1869 = vmul.f32 1.0, %v1868
        %v1870 = vtanh.pop %v1863
        %1872 = vrot.lane.b32.xlu0 %v1788, 16
        %v1873 = vpop.permute.xlu0 %1872
        %v1875 = vmul.f32 %v1869, %v1873
        %1877 = vrot.lane.b32.xlu0 %v1870, 96
        %v1878 = vpop.permute.xlu0 %1877
        %v1880 = vmul.f32 %v1869, %v1878
        %1882 = vrot.lane.b32.xlu0 %v1880, 16
        %v1883 = vpop.permute.xlu0 %1882
        %v1885 = vadd.f32 %v1875, %v1883
        %v1886 = vtanh.pop %v1885
        %1888 = vrot.lane.b32.xlu0 %v1886, 32
        %v1889 = vpop.permute.xlu0 %1888
        %v1891 = vmul.f32 %v1869, %v1889
        %v1892 = vsel %vm1786, 1, 0
        %1893 = vset.pattern.permute.xlu0 0
        %1894 = vperm.xlu0 %1893, %v1892
        %v1895 = vpop.permute.xlu0 %1894
        %vm1896 = vcmp.eq.s32.totalorder %v1895, 1
        %1897 = vrot.lane.b32.xlu0 %v1787, 48
        %v1898 = vpop.permute.xlu0 %1897
        %v1900 = vsel %vm1896, %v1891, %v1898
        %1902 = vrot.lane.b32.xlu0 %v1900, 80
        %v1903 = vpop.permute.xlu0 %1902
        %1905 = vst.msk [vmem:[#allocation4] sm:$0x3] %vm1361, %v1903
        %v1906 = vsel %vm1896, %v1885, %v1873
        %1908 = vrot.lane.b32.xlu0 %v1906, 112
        %v1909 = vpop.permute.xlu0 %1908
        %1911 = vst.msk [vmem:[#allocation5] sm:$0x3] %vm1361, %v1909
        %v1912 = vsel %vm1896, %v1891, 0.0
        %1914 = vrot.lane.b32.xlu0 %v1912, 80
        %v1915 = vpop.permute.xlu0 %1914
        %s1917 = scalar_lea.vmem %s559, 4 [#allocation15]
        %1918 = vst.msk [vmem:[%s1917] sm:$0x3] %vm1361, %v1915
        %s1919 = sadd.s32 %s1376, 1
        %v1920 = vstv %s1919
        %vm1921 = vcmp.lt.s32.totalorder %v1920, %v1238
        %v1922 = vld [vmem:[%s1380] sm:$0x3]
        %v1923 = vld [vmem:[%s1382] sm:$0x3]
        %v1924 = vld [vmem:[%s920] sm:$0x3]
        %v1926 = vsel %vm1245, %v1922, 0
        %1928 = vmatprep.subr.mxu0 0.0
        %1929 = vmatpush1.msra.mxu0 %v1236
        %1930 = vmatprep.subr.mxu0 0.0
        %1931 = vmatpush1.msra.mxu0 %v1237
        %1932 = vmatprep.subr.mxu0 0.0
        %1933 = vmatpush1.msra.mxu0 0.0
        %1934 = vmatprep.subr.mxu0 0.0
        %1935 = vmatpush1.msra.mxu0 0.0
        %1936 = vmatprep.subr.mxu0 0.0
        %1937 = vmatpush1.msra.mxu0 0.0
        %1938 = vmatprep.subr.mxu0 0.0
        %1939 = vmatpush1.msra.mxu0 0.0
        %1940 = vmatprep.subr.mxu0 0.0
        %1941 = vmatpush1.msra.mxu0 0.0
        %1942 = vmatprep.subr.mxu0 0.0
        %1943 = vmatpush1.msra.mxu0 0.0
        %1944 = vmatprep.subr.mxu0 0.0
        %1945 = vmatpush1.msra.mxu0 0.0
        %1946 = vmatprep.subr.mxu0 0.0
        %1947 = vmatpush1.msra.mxu0 0.0
        %1948 = vmatprep.subr.mxu0 0.0
        %1949 = vmatpush1.msra.mxu0 0.0
        %1950 = vmatprep.subr.mxu0 0.0
        %1951 = vmatpush1.msra.mxu0 0.0
        %1952 = vmatprep.subr.mxu0 0.0
        %1953 = vmatpush1.msra.mxu0 0.0
        %1954 = vmatprep.subr.mxu0 0.0
        %1955 = vmatpush1.msra.mxu0 0.0
        %1956 = vmatprep.subr.mxu0 0.0
        %1957 = vmatpush1.msra.mxu0 0.0
        %1958 = vmatprep.subr.mxu0 0.0
        %1959 = vmatpush1.msra.mxu0 0.0
        %1960 = vmatprep.subr.mxu0 0.0
        %1961 = vmatpush1.msra.mxu0 0.0
        %1962 = vmatprep.subr.mxu0 0.0
        %1963 = vmatpush1.msra.mxu0 0.0
        %1964 = vmatprep.subr.mxu0 0.0
        %1965 = vmatpush1.msra.mxu0 0.0
        %1966 = vmatprep.subr.mxu0 0.0
        %1967 = vmatpush1.msra.mxu0 0.0
        %1968 = vmatprep.subr.mxu0 0.0
        %1969 = vmatpush1.msra.mxu0 0.0
        %1970 = vmatprep.subr.mxu0 0.0
        %1971 = vmatpush1.msra.mxu0 0.0
        %1972 = vmatprep.subr.mxu0 0.0
        %1973 = vmatpush1.msra.mxu0 0.0
        %1974 = vmatprep.subr.mxu0 0.0
        %1975 = vmatpush1.msra.mxu0 0.0
        %1976 = vmatprep.subr.mxu0 0.0
        %1977 = vmatpush1.msra.mxu0 0.0
        %1978 = vmatprep.subr.mxu0 0.0
        %1979 = vmatpush1.msra.mxu0 0.0
        %1980 = vmatprep.subr.mxu0 0.0
        %1981 = vmatpush1.msra.mxu0 0.0
        %1982 = vmatprep.subr.mxu0 0.0
        %1983 = vmatpush1.msra.mxu0 0.0
        %1984 = vmatprep.subr.mxu0 0.0
        %1985 = vmatpush1.msra.mxu0 0.0
        %1986 = vmatprep.subr.mxu0 0.0
        %1987 = vmatpush1.msra.mxu0 0.0
        %1988 = vmatprep.subr.mxu0 0.0
        %1989 = vmatpush1.msra.mxu0 0.0
        %1990 = vmatprep.subr.mxu0 0.0
        %1991 = vmatpush1.msra.mxu0 0.0
        %1992 = vmatprep.mubr.f32.mxu0 0.0
        %1993 = vmatmul.mubr.f32.gmra.mrb[0].mxu0 %v1926
        %v1994 = vpop.f32.mrb[0].mxu0
        %v1995 = vadd.f32 0.0, %v1994
        %v1996 = vpop.f32.mrb[0].mxu0
        %1997 = vdwg.mxu0
        %v1998 = vadd.f32 %v1924, %v1995
        %v1999 = vxor.u32 %v1998, 2147483648
        %v2000 = vmul.f32 %v1999, 1.442695
        %v2001 = vpow.pop %v2000
        %v2002 = vadd.f32 %v2001, 1.0
        %v2003 = vrcp.pop %v2002
        %v2004 = vmul.f32 1.0, %v2003
        %v2005 = vtanh.pop %v1998
        %2007 = vrot.lane.b32.xlu0 %v1923, 16
        %v2008 = vpop.permute.xlu0 %2007
        %v2010 = vmul.f32 %v2004, %v2008
        %2012 = vrot.lane.b32.xlu0 %v2005, 96
        %v2013 = vpop.permute.xlu0 %2012
        %v2015 = vmul.f32 %v2004, %v2013
        %2017 = vrot.lane.b32.xlu0 %v2015, 16
        %v2018 = vpop.permute.xlu0 %2017
        %v2020 = vadd.f32 %v2010, %v2018
        %v2021 = vtanh.pop %v2020
        %2023 = vrot.lane.b32.xlu0 %v2021, 32
        %v2024 = vpop.permute.xlu0 %2023
        %v2026 = vmul.f32 %v2004, %v2024
        %v2027 = vsel %vm1921, 1, 0
        %2028 = vset.pattern.permute.xlu0 0
        %2029 = vperm.xlu0 %2028, %v2027
        %v2030 = vpop.permute.xlu0 %2029
        %vm2031 = vcmp.eq.s32.totalorder %v2030, 1
        %2032 = vrot.lane.b32.xlu0 %v1922, 48
        %v2033 = vpop.permute.xlu0 %2032
        %v2035 = vsel %vm2031, %v2026, %v2033
        %2037 = vrot.lane.b32.xlu0 %v2035, 80
        %v2038 = vpop.permute.xlu0 %2037
        %2040 = vst.msk [vmem:[%s1380] sm:$0x3] %vm1361, %v2038
        %v2041 = vsel %vm2031, %v2020, %v2008
        %2043 = vrot.lane.b32.xlu0 %v2041, 112
        %v2044 = vpop.permute.xlu0 %2043
        %2046 = vst.msk [vmem:[%s1382] sm:$0x3] %vm1361, %v2044
        %v2047 = vsel %vm2031, %v2026, 0.0
        %2049 = vrot.lane.b32.xlu0 %v2047, 80
        %v2050 = vpop.permute.xlu0 %2049
        %s2052 = scalar_lea.vmem %s566, 2 [#allocation16]
        %2053 = vst.msk [vmem:[%s2052] sm:$0x3] %vm1361, %v2050
        %s2054 = sadd.s32 %s1239, 3
        %v2055 = vstv %s2054
        %vm2056 = vcmp.lt.s32.totalorder %v2055, %v1238
        %v2057 = vld [vmem:[#allocation4] sm:$0x3]
        %v2058 = vld [vmem:[#allocation5] sm:$0x3]
        %v2059 = vld [vmem:[%s1230] sm:$0x3]
        %v2061 = vsel %vm1245, %v2057, 0
        %2063 = vmatprep.subr.mxu0 0.0
        %2064 = vmatpush1.msra.mxu0 %v1234
        %2065 = vmatprep.subr.mxu0 0.0
        %2066 = vmatpush1.msra.mxu0 %v1235
        %2067 = vmatprep.subr.mxu0 0.0
        %2068 = vmatpush1.msra.mxu0 0.0
        %2069 = vmatprep.subr.mxu0 0.0
        %2070 = vmatpush1.msra.mxu0 0.0
        %2071 = vmatprep.subr.mxu0 0.0
        %2072 = vmatpush1.msra.mxu0 0.0
        %2073 = vmatprep.subr.mxu0 0.0
        %2074 = vmatpush1.msra.mxu0 0.0
        %2075 = vmatprep.subr.mxu0 0.0
        %2076 = vmatpush1.msra.mxu0 0.0
        %2077 = vmatprep.subr.mxu0 0.0
        %2078 = vmatpush1.msra.mxu0 0.0
        %2079 = vmatprep.subr.mxu0 0.0
        %2080 = vmatpush1.msra.mxu0 0.0
        %2081 = vmatprep.subr.mxu0 0.0
        %2082 = vmatpush1.msra.mxu0 0.0
        %2083 = vmatprep.subr.mxu0 0.0
        %2084 = vmatpush1.msra.mxu0 0.0
        %2085 = vmatprep.subr.mxu0 0.0
        %2086 = vmatpush1.msra.mxu0 0.0
        %2087 = vmatprep.subr.mxu0 0.0
        %2088 = vmatpush1.msra.mxu0 0.0
        %2089 = vmatprep.subr.mxu0 0.0
        %2090 = vmatpush1.msra.mxu0 0.0
        %2091 = vmatprep.subr.mxu0 0.0
        %2092 = vmatpush1.msra.mxu0 0.0
        %2093 = vmatprep.subr.mxu0 0.0
        %2094 = vmatpush1.msra.mxu0 0.0
        %2095 = vmatprep.subr.mxu0 0.0
        %2096 = vmatpush1.msra.mxu0 0.0
        %2097 = vmatprep.subr.mxu0 0.0
        %2098 = vmatpush1.msra.mxu0 0.0
        %2099 = vmatprep.subr.mxu0 0.0
        %2100 = vmatpush1.msra.mxu0 0.0
        %2101 = vmatprep.subr.mxu0 0.0
        %2102 = vmatpush1.msra.mxu0 0.0
        %2103 = vmatprep.subr.mxu0 0.0
        %2104 = vmatpush1.msra.mxu0 0.0
        %2105 = vmatprep.subr.mxu0 0.0
        %2106 = vmatpush1.msra.mxu0 0.0
        %2107 = vmatprep.subr.mxu0 0.0
        %2108 = vmatpush1.msra.mxu0 0.0
        %2109 = vmatprep.subr.mxu0 0.0
        %2110 = vmatpush1.msra.mxu0 0.0
        %2111 = vmatprep.subr.mxu0 0.0
        %2112 = vmatpush1.msra.mxu0 0.0
        %2113 = vmatprep.subr.mxu0 0.0
        %2114 = vmatpush1.msra.mxu0 0.0
        %2115 = vmatprep.subr.mxu0 0.0
        %2116 = vmatpush1.msra.mxu0 0.0
        %2117 = vmatprep.subr.mxu0 0.0
        %2118 = vmatpush1.msra.mxu0 0.0
        %2119 = vmatprep.subr.mxu0 0.0
        %2120 = vmatpush1.msra.mxu0 0.0
        %2121 = vmatprep.subr.mxu0 0.0
        %2122 = vmatpush1.msra.mxu0 0.0
        %2123 = vmatprep.subr.mxu0 0.0
        %2124 = vmatpush1.msra.mxu0 0.0
        %2125 = vmatprep.subr.mxu0 0.0
        %2126 = vmatpush1.msra.mxu0 0.0
        %2127 = vmatprep.mubr.f32.mxu0 0.0
        %2128 = vmatmul.mubr.f32.gmra.mrb[0].mxu0 %v2061
        %v2129 = vpop.f32.mrb[0].mxu0
        %v2130 = vadd.f32 0.0, %v2129
        %v2131 = vpop.f32.mrb[0].mxu0
        %2132 = vdwg.mxu0
        %v2133 = vadd.f32 %v2059, %v2130
        %v2134 = vxor.u32 %v2133, 2147483648
        %v2135 = vmul.f32 %v2134, 1.442695
        %v2136 = vpow.pop %v2135
        %v2137 = vadd.f32 %v2136, 1.0
        %v2138 = vrcp.pop %v2137
        %v2139 = vmul.f32 1.0, %v2138
        %v2140 = vtanh.pop %v2133
        %2142 = vrot.lane.b32.xlu0 %v2058, 16
        %v2143 = vpop.permute.xlu0 %2142
        %v2145 = vmul.f32 %v2139, %v2143
        %2147 = vrot.lane.b32.xlu0 %v2140, 96
        %v2148 = vpop.permute.xlu0 %2147
        %v2150 = vmul.f32 %v2139, %v2148
        %2152 = vrot.lane.b32.xlu0 %v2150, 16
        %v2153 = vpop.permute.xlu0 %2152
        %v2155 = vadd.f32 %v2145, %v2153
        %v2156 = vtanh.pop %v2155
        %2158 = vrot.lane.b32.xlu0 %v2156, 32
        %v2159 = vpop.permute.xlu0 %2158
        %v2161 = vmul.f32 %v2139, %v2159
        %v2162 = vsel %vm2056, 1, 0
        %2163 = vset.pattern.permute.xlu0 0
        %2164 = vperm.xlu0 %2163, %v2162
        %v2165 = vpop.permute.xlu0 %2164
        %vm2166 = vcmp.eq.s32.totalorder %v2165, 1
        %2167 = vrot.lane.b32.xlu0 %v2057, 48
        %v2168 = vpop.permute.xlu0 %2167
        %v2170 = vsel %vm2166, %v2161, %v2168
        %2172 = vrot.lane.b32.xlu0 %v2170, 80
        %v2173 = vpop.permute.xlu0 %2172
        %2175 = vst.msk [vmem:[#allocation4] sm:$0x3] %vm1361, %v2173
        %v2176 = vsel %vm2166, %v2155, %v2143
        %2178 = vrot.lane.b32.xlu0 %v2176, 112
        %v2179 = vpop.permute.xlu0 %2178
        %2181 = vst.msk [vmem:[#allocation5] sm:$0x3] %vm1361, %v2179
        %v2182 = vsel %vm2166, %v2161, 0.0
        %2184 = vrot.lane.b32.xlu0 %v2182, 80
        %v2185 = vpop.permute.xlu0 %2184
        %s2187 = scalar_lea.vmem %s559, 6 [#allocation15]
        %2188 = vst.msk [vmem:[%s2187] sm:$0x3] %vm1361, %v2185
        %v2189 = vstv %s1376
        %vm2190 = vcmp.lt.s32.totalorder %v2189, %v1238
        %v2191 = vld [vmem:[%s1380] sm:$0x3]
        %v2192 = vld [vmem:[%s1382] sm:$0x3]
        %v2193 = vld [vmem:[#allocation3] sm:$0x3]
        %v2195 = vsel %vm1245, %v2191, 0
        %2197 = vmatprep.subr.mxu0 0.0
        %2198 = vmatpush1.msra.mxu0 %v1236
        %2199 = vmatprep.subr.mxu0 0.0
        %2200 = vmatpush1.msra.mxu0 %v1237
        %2201 = vmatprep.subr.mxu0 0.0
        %2202 = vmatpush1.msra.mxu0 0.0
        %2203 = vmatprep.subr.mxu0 0.0
        %2204 = vmatpush1.msra.mxu0 0.0
        %2205 = vmatprep.subr.mxu0 0.0
        %2206 = vmatpush1.msra.mxu0 0.0
        %2207 = vmatprep.subr.mxu0 0.0
        %2208 = vmatpush1.msra.mxu0 0.0
        %2209 = vmatprep.subr.mxu0 0.0
        %2210 = vmatpush1.msra.mxu0 0.0
        %2211 = vmatprep.subr.mxu0 0.0
        %2212 = vmatpush1.msra.mxu0 0.0
        %2213 = vmatprep.subr.mxu0 0.0
        %2214 = vmatpush1.msra.mxu0 0.0
        %2215 = vmatprep.subr.mxu0 0.0
        %2216 = vmatpush1.msra.mxu0 0.0
        %2217 = vmatprep.subr.mxu0 0.0
        %2218 = vmatpush1.msra.mxu0 0.0
        %2219 = vmatprep.subr.mxu0 0.0
        %2220 = vmatpush1.msra.mxu0 0.0
        %2221 = vmatprep.subr.mxu0 0.0
        %2222 = vmatpush1.msra.mxu0 0.0
        %2223 = vmatprep.subr.mxu0 0.0
        %2224 = vmatpush1.msra.mxu0 0.0
        %2225 = vmatprep.subr.mxu0 0.0
        %2226 = vmatpush1.msra.mxu0 0.0
        %2227 = vmatprep.subr.mxu0 0.0
        %2228 = vmatpush1.msra.mxu0 0.0
        %2229 = vmatprep.subr.mxu0 0.0
        %2230 = vmatpush1.msra.mxu0 0.0
        %2231 = vmatprep.subr.mxu0 0.0
        %2232 = vmatpush1.msra.mxu0 0.0
        %2233 = vmatprep.subr.mxu0 0.0
        %2234 = vmatpush1.msra.mxu0 0.0
        %2235 = vmatprep.subr.mxu0 0.0
        %2236 = vmatpush1.msra.mxu0 0.0
        %2237 = vmatprep.subr.mxu0 0.0
        %2238 = vmatpush1.msra.mxu0 0.0
        %2239 = vmatprep.subr.mxu0 0.0
        %2240 = vmatpush1.msra.mxu0 0.0
        %2241 = vmatprep.subr.mxu0 0.0
        %2242 = vmatpush1.msra.mxu0 0.0
        %2243 = vmatprep.subr.mxu0 0.0
        %2244 = vmatpush1.msra.mxu0 0.0
        %2245 = vmatprep.subr.mxu0 0.0
        %2246 = vmatpush1.msra.mxu0 0.0
        %2247 = vmatprep.subr.mxu0 0.0
        %2248 = vmatpush1.msra.mxu0 0.0
        %2249 = vmatprep.subr.mxu0 0.0
        %2250 = vmatpush1.msra.mxu0 0.0
        %2251 = vmatprep.subr.mxu0 0.0
        %2252 = vmatpush1.msra.mxu0 0.0
        %2253 = vmatprep.subr.mxu0 0.0
        %2254 = vmatpush1.msra.mxu0 0.0
        %2255 = vmatprep.subr.mxu0 0.0
        %2256 = vmatpush1.msra.mxu0 0.0
        %2257 = vmatprep.subr.mxu0 0.0
        %2258 = vmatpush1.msra.mxu0 0.0
        %2259 = vmatprep.subr.mxu0 0.0
        %2260 = vmatpush1.msra.mxu0 0.0
        %2261 = vmatprep.mubr.f32.mxu0 0.0
        %2262 = vmatmul.mubr.f32.gmra.mrb[0].mxu0 %v2195
        %v2263 = vpop.f32.mrb[0].mxu0
        %v2264 = vadd.f32 0.0, %v2263
        %v2265 = vpop.f32.mrb[0].mxu0
        %2266 = vdwg.mxu0
        %v2267 = vadd.f32 %v2193, %v2264
        %v2268 = vxor.u32 %v2267, 2147483648
        %v2269 = vmul.f32 %v2268, 1.442695
        %v2270 = vpow.pop %v2269
        %v2271 = vadd.f32 %v2270, 1.0
        %v2272 = vrcp.pop %v2271
        %v2273 = vmul.f32 1.0, %v2272
        %v2274 = vtanh.pop %v2267
        %2276 = vrot.lane.b32.xlu0 %v2192, 16
        %v2277 = vpop.permute.xlu0 %2276
        %v2279 = vmul.f32 %v2273, %v2277
        %2281 = vrot.lane.b32.xlu0 %v2274, 96
        %v2282 = vpop.permute.xlu0 %2281
        %v2284 = vmul.f32 %v2273, %v2282
        %2286 = vrot.lane.b32.xlu0 %v2284, 16
        %v2287 = vpop.permute.xlu0 %2286
        %v2289 = vadd.f32 %v2279, %v2287
        %v2290 = vtanh.pop %v2289
        %2292 = vrot.lane.b32.xlu0 %v2290, 32
        %v2293 = vpop.permute.xlu0 %2292
        %v2295 = vmul.f32 %v2273, %v2293
        %v2296 = vsel %vm2190, 1, 0
        %2297 = vset.pattern.permute.xlu0 0
        %2298 = vperm.xlu0 %2297, %v2296
        %v2299 = vpop.permute.xlu0 %2298
        %vm2300 = vcmp.eq.s32.totalorder %v2299, 1
        %2301 = vrot.lane.b32.xlu0 %v2191, 48
        %v2302 = vpop.permute.xlu0 %2301
        %v2304 = vsel %vm2300, %v2295, %v2302
        %2306 = vrot.lane.b32.xlu0 %v2304, 80
        %v2307 = vpop.permute.xlu0 %2306
        %2309 = vst.msk [vmem:[%s1380] sm:$0x3] %vm1361, %v2307
        %v2310 = vsel %vm2300, %v2289, %v2277
        %2312 = vrot.lane.b32.xlu0 %v2310, 112
        %v2313 = vpop.permute.xlu0 %2312
        %2315 = vst.msk [vmem:[%s1382] sm:$0x3] %vm1361, %v2313
        %v2316 = vsel %vm2300, %v2295, 0.0
        %2318 = vrot.lane.b32.xlu0 %v2316, 80
        %v2319 = vpop.permute.xlu0 %2318
        %2321 = vst.msk [vmem:[%s566] sm:$0x3] %vm1361, %v2319
        %p2322 = scmp.eq.s32.totalorder %s43, 1
        // Predicated region
        $region81: #{tpu_custom_call.1} parent=55 // pred_check
          %p2323 = pneg %p2322
        $region82: #{tpu_custom_call.1} parent=55 // pred_check_branch
          %2325 = sbr.rel (%p2323) target = $region84
        $region83: #{tpu_custom_call.1} parent=55 // pred_region
          %v2326 = vld [vmem:[#allocation4] sm:$0x3]
          %v2327 = vld [vmem:[#allocation4 + $0x2] sm:$0x3]
          %2328 = vst.msk [vmem:[#allocation18] sm:$0x3] %vm1361, %v2326
          %2329 = vst.msk [vmem:[#allocation18 + $0x2] sm:$0x3] %vm1361, %v2327
          %v2330 = vld [vmem:[#allocation5] sm:$0x3]
          %v2331 = vld [vmem:[#allocation5 + $0x2] sm:$0x3]
          %2332 = vst.msk [vmem:[#allocation19] sm:$0x3] %vm1361, %v2330
          %2333 = vst.msk [vmem:[#allocation19 + $0x2] sm:$0x3] %vm1361, %v2331
        $region84: #{tpu_custom_call.1} parent=55 // pred_fallthru
          _
        %s2334 = sand.u32 %s270, 1
        %s2335 = scalar_lea.sflag [#allocation8], %s2334
        %s2336 = sand.u32 %s270, 1
        %s2337 = smul.addr %s2336, 8
        %s2338 = scalar_lea.vmem [#allocation15], %s2337
        %s2339 = sand.u32 %s38, 1
        %s2340 = scalar_lea.sflag [#allocation17], %s2339
        %s2341 = sand.u32 %s300, 1
        %s2342 = smul.addr %s2341, 8
        %s2343 = scalar_lea.vmem [#allocation16], %s2342
        // Predicated region
        $region85: #{tpu_custom_call.1} parent=55 // pred_check
          %p2344 = pneg %p280
        $region86: #{tpu_custom_call.1} parent=55 // pred_check_branch
          %2346 = sbr.rel (%p2344) target = $region88
        $region87: #{tpu_custom_call.1} parent=55 // pred_region
          %s2347 = smul.u32 4, %s43
          %s2349 = ssub.s32 128, 128
          %2350 = vsyncadd %s2335, %s2349
          %s2351 = sadd.s32 %s42, %s2347
          %s2352 = smul.addr %s2351, 32
          %s2353 = scalar_lea.hbm %s9, %s2352
          %s2354 = sshll.u32 %s2338, 4
          %s2355 = int_to_ptr.vmem [resolvable:$true] %s2354
          %2360 = dma.vmem_to_hbm [thread:$0]  %s2355, 128, %s2353, %s2335, 32, 32, 2
        $region88: #{tpu_custom_call.1} parent=55 // pred_fallthru
          _
        // Predicated region
        $region89: #{tpu_custom_call.1} parent=55 // pred_check
          %p2361 = pneg %p310
        $region90: #{tpu_custom_call.1} parent=55 // pred_check_branch
          %2363 = sbr.rel (%p2361) target = $region92
        $region91: #{tpu_custom_call.1} parent=55 // pred_region
          %s2364 = ssub.s32 1, %s43
          %s2365 = smul.u32 4, %s2364
          %s2367 = ssub.s32 128, 128
          %2368 = vsyncadd %s2340, %s2367
          %s2369 = sadd.s32 %s42, %s2365
          %s2370 = smul.addr %s2369, 32
          %s2371 = scalar_lea.hbm %s10, %s2370
          %s2372 = sshll.u32 %s2343, 4
          %s2373 = int_to_ptr.vmem [resolvable:$true] %s2372
          %2378 = dma.vmem_to_hbm [thread:$0]  %s2373, 128, %s2371, %s2340, 32, 32, 2
        $region92: #{tpu_custom_call.1} parent=55 // pred_fallthru
          _
        // Predicated region
        $region93: #{tpu_custom_call.1} parent=55 // pred_check
          %p2379 = pneg %p336
        $region94: #{tpu_custom_call.1} parent=55 // pred_check_branch
          %2381 = sbr.rel (%p2379) target = $region96
        $region95: #{tpu_custom_call.1} parent=55 // pred_region
          %s2383 = ssub.s32 64, 64
          %2384 = vsyncadd [#allocation17], %s2383
          %s2385 = smul.addr %s42, 32
          %s2386 = scalar_lea.hbm %s11, %s2385
          %s2387 = sshll.u32 [#allocation18], 4
          %s2388 = int_to_ptr.vmem [resolvable:$true] %s2387
          %2393 = dma.vmem_to_hbm [thread:$0]  %s2388, 64, %s2386, [#allocation17], 32, 32, 2
        $region96: #{tpu_custom_call.1} parent=55 // pred_fallthru
          _
        // Predicated region
        $region97: #{tpu_custom_call.1} parent=55 // pred_check
          %p2394 = pneg %p362
        $region98: #{tpu_custom_call.1} parent=55 // pred_check_branch
          %2396 = sbr.rel (%p2394) target = $region100
        $region99: #{tpu_custom_call.1} parent=55 // pred_region
          %s2398 = ssub.s32 64, 64
          %2399 = vsyncadd [#allocation20], %s2398
          %s2400 = smul.addr %s42, 32
          %s2401 = scalar_lea.hbm %s12, %s2400
          %s2402 = sshll.u32 [#allocation19], 4
          %s2403 = int_to_ptr.vmem [resolvable:$true] %s2402
          %2408 = dma.vmem_to_hbm [thread:$0]  %s2403, 64, %s2401, [#allocation20], 32, 32, 2
        $region100: #{tpu_custom_call.1} parent=55 // pred_fallthru
          _
        // Predicated region
        $region101: #{tpu_custom_call.1} parent=55 // pred_check
          %p2409 = pneg %p336
        $region102: #{tpu_custom_call.1} parent=55 // pred_check_branch
          %2411 = sbr.rel (%p2409) target = $region104
        $region103: #{tpu_custom_call.1} parent=55 // pred_region
          %2412 = dma.done [#allocation17], 64
        $region104: #{tpu_custom_call.1} parent=55 // pred_fallthru
          _
        // Predicated region
        $region105: #{tpu_custom_call.1} parent=55 // pred_check
          %p2413 = pneg %p362
        $region106: #{tpu_custom_call.1} parent=55 // pred_check_branch
          %2415 = sbr.rel (%p2413) target = $region108
        $region107: #{tpu_custom_call.1} parent=55 // pred_region
          %2416 = dma.done [#allocation20], 64
        $region108: #{tpu_custom_call.1} parent=55 // pred_fallthru
          _
      $region56: #{tpu_custom_call.1} parent=5 // pred_fallthru
        _
      %p2417 = scmp.le.s32.totalorder 2, %s33
      // Predicated region
      $region109: #{tpu_custom_call.1} parent=5 // pred_check
        %p2418 = pneg %p2417
      $region110: #{tpu_custom_call.1} parent=5 // pred_check_branch
        %2420 = sbr.rel (%p2418) target = $region112
      $region111: #{tpu_custom_call.1} parent=5 // pred_region
        %s2421 = ssub.s32 %s33, 2
        // Predicated region
        $region113: #{tpu_custom_call.1} parent=111 // pred_check
          %p2422 = pneg %p286
        $region114: #{tpu_custom_call.1} parent=111 // pred_check_branch
          %2424 = sbr.rel (%p2422) target = $region116
        $region115: #{tpu_custom_call.1} parent=111 // pred_region
          %s2425 = sand.u32 %s271, 1
          %s2426 = scalar_lea.sflag [#allocation8], %s2425
          %s2427 = sand.u32 %s271, 1
          %s2428 = smul.addr %s2427, 8
          %s2429 = scalar_lea.vmem [#allocation15], %s2428
          %2430 = dma.done %s2426, 128
        $region116: #{tpu_custom_call.1} parent=111 // pred_fallthru
          _
        // Predicated region
        $region117: #{tpu_custom_call.1} parent=111 // pred_check
          %p2431 = pneg %p316
        $region118: #{tpu_custom_call.1} parent=111 // pred_check_branch
          %2433 = sbr.rel (%p2431) target = $region120
        $region119: #{tpu_custom_call.1} parent=111 // pred_region
          %s2434 = sand.u32 %s39, 1
          %s2435 = scalar_lea.sflag [#allocation17], %s2434
          %s2436 = sand.u32 %s301, 1
          %s2437 = smul.addr %s2436, 8
          %s2438 = scalar_lea.vmem [#allocation16], %s2437
          %2439 = dma.done %s2435, 128
        $region120: #{tpu_custom_call.1} parent=111 // pred_fallthru
          _
      $region112: #{tpu_custom_call.1} parent=5 // pred_fallthru
        _
    $region6: #{tpu_custom_call.1} parent=1 // loop_footer
      %s37 = sadd.s32 1, %s33
    $region7: #{tpu_custom_call.1} parent=1 // loop_footer_branch
      %32 = sbr.rel target = $region3
    $region8: #{tpu_custom_call.1} parent=1 // loop_exit
      _
    %2440 = vsyncpa [#allocation7], 1
    %s2441 = scalar_lea.sflag [#allocation7], 1
    %2442 = vsyncpa %s2441, 1
    %2443 = vsyncpa [#allocation10], 1
    %s2444 = scalar_lea.sflag [#allocation10], 1
    %2445 = vsyncpa %s2444, 1
    %2446 = vsyncpa [#allocation13], 1
    %2447 = vsyncpa [#allocation8], 1
    %s2448 = scalar_lea.sflag [#allocation8], 1
    %2449 = vsyncpa %s2448, 1
    %2450 = vsyncpa [#allocation17], 1
    %s2451 = scalar_lea.sflag [#allocation17], 1
    %2452 = vsyncpa %s2451, 1
    %2453 = vsyncpa [#allocation20], 1

</llo_original>
